<compile_context>
chip_gen: v7x
topology: tpu7x:2x2x1
jax: 0.10.0
libtpu: 0.0.40
codegen_flags: <defaults>
</compile_context>

<pallas_src>
import jax
import jax.numpy as jnp
from jax.experimental import pallas as pl
from jax.experimental.pallas import tpu as pltpu

dropout_rate = 0.03686336695055423
hidden_dim = 512
input_dim = 9
latent_dim = 128
BN_EPS = 1e-5

INPUT_DIM_PAD = 16   # zero-pad K=9 -> 16 (sublane aligned)
TM_MAX = 1024        # large batch tile: per-step overhead becomes negligible


def _round_up(v, m):
    return (v + m - 1) // m * m


def _choose_tm(n):
    """Batch tile: multiple of 16 (bf16 sublane packing), capped at TM_MAX,
    and sized so the grid has >=2 steps whenever n >= 32 (keeps both v7x
    TensorCores busy)."""
    half = -(-max(n, 1) // 2)                 # ceil(n / 2)
    return min(TM_MAX, _round_up(half, 16))


# -----------------------------------------------------------------------------
# Kernel: one [TM, *] batch tile of the whole Encoder forward.
# -----------------------------------------------------------------------------
def encoder_kernel(x_ref,
                   w1, t1, w2, t2, w3, t3,
                   w4, t4, w5, t5, w6, t6,
                   o_ref):
    """Weights are bf16 with the BN scale pre-folded; t* = b*scale + shift (f32)."""

    def lin(h_bf16, w, t):
        # MXU matmul with f32 accumulation, then folded bias/BN shift (VPU).
        return jnp.dot(h_bf16, w[...], preferred_element_type=jnp.float32) + t[...]

    # Linear(9->512) -> BN -> ReLU -> Dropout(identity, eval); carry bf16.
    h = jnp.maximum(lin(x_ref[...], w1, t1), 0.0).astype(jnp.bfloat16)

    # Two ResidualBlocks: Linear->BN->ReLU->Linear->BN, += residual (f32), ReLU
    for wa, ta, wb, tb in ((w2, t2, w3, t3), (w4, t4, w5, t5)):
        r = h                                                    # bf16 residual
        o = jnp.maximum(lin(h, wa, ta), 0.0).astype(jnp.bfloat16)
        o = lin(o, wb, tb)                                       # f32
        h = jnp.maximum(o + r.astype(jnp.float32), 0.0).astype(jnp.bfloat16)

    # Linear(512->128) -> BN -> ReLU -> Dropout(identity, eval)
    z = jnp.maximum(lin(h, w6, t6), 0.0)
    o_ref[...] = z.astype(o_ref.dtype)


# -----------------------------------------------------------------------------
# Parameter construction / BN folding (wrapper side, f32).
# -----------------------------------------------------------------------------
def init_params(key):
    """Deterministic synthetic parameters matching the PyTorch module's shapes."""
    dims = [(input_dim, hidden_dim),   # encoder[0]
            (hidden_dim, hidden_dim),  # res1 linear 1
            (hidden_dim, hidden_dim),  # res1 linear 2
            (hidden_dim, hidden_dim),  # res2 linear 1
            (hidden_dim, hidden_dim),  # res2 linear 2
            (hidden_dim, latent_dim)]  # encoder[6]
    raw = []
    for fin, fout in dims:
        key, kw, kb, kg, kbe, km, kv = jax.random.split(key, 7)
        raw.append(dict(
            w=jax.random.normal(kw, (fin, fout), jnp.float32) / jnp.sqrt(fin),
            b=0.05 * jax.random.normal(kb, (1, fout), jnp.float32),
            gamma=1.0 + 0.1 * jax.random.normal(kg, (1, fout), jnp.float32),
            beta=0.1 * jax.random.normal(kbe, (1, fout), jnp.float32),
            mean=0.1 * jax.random.normal(km, (1, fout), jnp.float32),
            var=1.0 + 0.1 * jnp.abs(jax.random.normal(kv, (1, fout), jnp.float32)),
        ))
    return raw


def _fold_bn(gamma, beta, rmean, rvar, eps=BN_EPS):
    scale = gamma / jnp.sqrt(rvar + eps)
    shift = beta - rmean * scale
    return scale, shift


def fold_params(raw_params):
    """Fold the inference-mode BN affine into the linear weights (in f32),
    then cast weights to bf16. Returns flat [w1, t1, ..., w6, t6]."""
    folded = []
    for i, p in enumerate(raw_params):
        scale, shift = _fold_bn(p["gamma"], p["beta"], p["mean"], p["var"])
        w = p["w"] * scale                   # [fin, fout] * [1, fout]
        t = p["b"] * scale + shift           # [1, fout]
        if i == 0:                           # pad K=9 -> 16 with zero rows
            w = jnp.pad(w, ((0, INPUT_DIM_PAD - w.shape[0]), (0, 0)))
        folded.extend([w.astype(jnp.bfloat16), t.astype(jnp.float32)])
    return folded


# -----------------------------------------------------------------------------
# pallas_call wrapper: batch-tiled grid, resident single-buffered weights.
# -----------------------------------------------------------------------------
@jax.jit
def encoder_forward(x, *folded_params):
    n = x.shape[0]
    tm = _choose_tm(n)
    n_pad = _round_up(n, tm)

    # One fused cast+pad op: batch -> n_pad rows, K=9 -> 16 lanes, bf16.
    xp = jnp.pad(x.astype(jnp.bfloat16),
                 ((0, n_pad - n), (0, INPUT_DIM_PAD - input_dim)))

    def resident_spec(arr):
        # Full-array block, constant index map -> DMA'd once, stays in VMEM.
        # Single-buffered: never re-fetched, so no need for double buffering.
        return pl.BlockSpec(arr.shape, lambda i: (0, 0),
                            pipeline_mode=pl.Buffered(1))

    in_specs = [pl.BlockSpec((tm, INPUT_DIM_PAD), lambda i: (i, 0))]
    in_specs += [resident_spec(p) for p in folded_params]

    out = pl.pallas_call(
        encoder_kernel,
        out_shape=jax.ShapeDtypeStruct((n_pad, latent_dim), jnp.float32),
        grid=(n_pad // tm,),
        in_specs=in_specs,
        out_specs=pl.BlockSpec((tm, latent_dim), lambda i: (i, 0)),
        compiler_params=pltpu.CompilerParams(
            dimension_semantics=("parallel",),     # shard batch tiles across TCs
            vmem_limit_bytes=32 * 1024 * 1024),    # headroom for TM up to 1024
    )(xp, *folded_params)
    return out[:n]


# -----------------------------------------------------------------------------
# References for correctness checking.
# -----------------------------------------------------------------------------
def reference_forward_f32(x, raw_params):
    """Plain-JAX f32 reference with explicit inference-mode BatchNorm."""
    def layer(h, p):
        y = h @ p["w"] + p["b"]
        return (y - p["mean"]) / jnp.sqrt(p["var"] + BN_EPS) * p["gamma"] + p["beta"]

    p = raw_params
    h = jax.nn.relu(layer(x, p[0]))
    for a, b in ((1, 2), (3, 4)):
        r = h
        o = jax.nn.relu(layer(h, p[a]))
        o = layer(o, p[b])
        h = jax.nn.relu(o + r)
    return jax.nn.relu(layer(h, p[5]))


def reference_forward_folded(x, fp):
    """Plain-JAX reference using exactly the kernel's folded bf16 math."""
    def lin(h_bf, w, t):
        return jnp.dot(h_bf, w, preferred_element_type=jnp.float32) + t

    xp = jnp.pad(x.astype(jnp.bfloat16),
                 ((0, 0), (0, INPUT_DIM_PAD - input_dim)))
    h = jax.nn.relu(lin(xp, fp[0], fp[1])).astype(jnp.bfloat16)
    for a in (2, 6):
        r = h
        o = jax.nn.relu(lin(h, fp[a], fp[a + 1])).astype(jnp.bfloat16)
        o = lin(o, fp[a + 2], fp[a + 3])
        h = jax.nn.relu(o + r.astype(jnp.float32)).astype(jnp.bfloat16)
    return jax.nn.relu(lin(h, fp[10], fp[11]))


if __name__ == "__main__":
    key = jax.random.PRNGKey(0)
    key, kx, kp = jax.random.split(key, 3)

    batch = 8
    x = jax.random.normal(kx, (batch, input_dim), jnp.float32)
    raw_params = init_params(kp)
    folded = fold_params(raw_params)

    out = jax.block_until_ready(encoder_forward(x, *folded))
    assert out.shape == (batch, latent_dim), out.shape

    # Tight check against the same folded-bf16 math done in plain JAX.
    ref_exact = reference_forward_folded(x, folded)
    err_exact = float(jnp.max(jnp.abs(out - ref_exact)))
    assert jnp.allclose(out, ref_exact, atol=5e-3, rtol=5e-3), err_exact

    # Loose check against the full-precision f32 / explicit-BN reference
    # (bf16 weights + bf16-carried activations introduce ~1e-2-scale error).
    ref_f32 = reference_forward_f32(x, raw_params)
    err_f32 = float(jnp.max(jnp.abs(out - ref_f32)))
    assert jnp.allclose(out, ref_f32, atol=0.2, rtol=0.2), err_f32

    print("KERNEL_OK")
</pallas_src>

<mosaic_0001>
module attributes {stable_mosaic.version = 11 : i64} {
  func.func @encoder_kernel(%arg0: i32, %arg1: memref<16x16xbf16, #tpu.memory_space<vmem>>, %arg2: memref<16x512xbf16, #tpu.memory_space<vmem>>, %arg3: memref<1x512xf32, #tpu.memory_space<vmem>>, %arg4: memref<512x512xbf16, #tpu.memory_space<vmem>>, %arg5: memref<1x512xf32, #tpu.memory_space<vmem>>, %arg6: memref<512x512xbf16, #tpu.memory_space<vmem>>, %arg7: memref<1x512xf32, #tpu.memory_space<vmem>>, %arg8: memref<512x512xbf16, #tpu.memory_space<vmem>>, %arg9: memref<1x512xf32, #tpu.memory_space<vmem>>, %arg10: memref<512x512xbf16, #tpu.memory_space<vmem>>, %arg11: memref<1x512xf32, #tpu.memory_space<vmem>>, %arg12: memref<512x128xbf16, #tpu.memory_space<vmem>>, %arg13: memref<1x128xf32, #tpu.memory_space<vmem>>, %arg14: memref<16x128xf32, #tpu.memory_space<vmem>>) attributes {dimension_semantics = [#tpu.dimension_semantics<parallel>], iteration_bounds = array<i64: 1>, scalar_prefetch = 0 : i64, scratch_operands = 0 : i64, tpu.core_type = #tpu.core_type<tc>, window_params = [{transform_indices = @transform_0, window_bounds = array<i64: 16, 16>}, {pipeline_mode = #tpu.pipeline_mode<synchronous>, transform_indices = @transform_1, window_bounds = array<i64: 16, 512>}, {pipeline_mode = #tpu.pipeline_mode<synchronous>, transform_indices = @transform_2, window_bounds = array<i64: 1, 512>}, {pipeline_mode = #tpu.pipeline_mode<synchronous>, transform_indices = @transform_3, window_bounds = array<i64: 512, 512>}, {pipeline_mode = #tpu.pipeline_mode<synchronous>, transform_indices = @transform_4, window_bounds = array<i64: 1, 512>}, {pipeline_mode = #tpu.pipeline_mode<synchronous>, transform_indices = @transform_5, window_bounds = array<i64: 512, 512>}, {pipeline_mode = #tpu.pipeline_mode<synchronous>, transform_indices = @transform_6, window_bounds = array<i64: 1, 512>}, {pipeline_mode = #tpu.pipeline_mode<synchronous>, transform_indices = @transform_7, window_bounds = array<i64: 512, 512>}, {pipeline_mode = #tpu.pipeline_mode<synchronous>, transform_indices = @transform_8, window_bounds = array<i64: 1, 512>}, {pipeline_mode = #tpu.pipeline_mode<synchronous>, transform_indices = @transform_9, window_bounds = array<i64: 512, 512>}, {pipeline_mode = #tpu.pipeline_mode<synchronous>, transform_indices = @transform_10, window_bounds = array<i64: 1, 512>}, {pipeline_mode = #tpu.pipeline_mode<synchronous>, transform_indices = @transform_11, window_bounds = array<i64: 512, 128>}, {pipeline_mode = #tpu.pipeline_mode<synchronous>, transform_indices = @transform_12, window_bounds = array<i64: 1, 128>}, {transform_indices = @transform_13, window_bounds = array<i64: 16, 128>}]} {
    %c0 = arith.constant 0 : index
    %c0_0 = arith.constant 0 : index
    %0 = vector.load %arg1[%c0, %c0_0] : memref<16x16xbf16, #tpu.memory_space<vmem>>, vector<16x16xbf16>
    %c0_1 = arith.constant 0 : index
    %c0_2 = arith.constant 0 : index
    %1 = vector.load %arg2[%c0_1, %c0_2] : memref<16x512xbf16, #tpu.memory_space<vmem>>, vector<16x512xbf16>
    %cst = arith.constant dense<0.000000e+00> : vector<16x512xf32>
    %2 = tpu.matmul %0, %1, %cst {dimension_numbers = #tpu.dot_dimension_numbers<[1], [0], [0], [1], [0, 0, 1, 1], [], []>} : vector<16x16xbf16>, vector<16x512xbf16>, vector<16x512xf32> -> vector<16x512xf32>
    %c0_3 = arith.constant 0 : index
    %c0_4 = arith.constant 0 : index
    %3 = vector.load %arg3[%c0_3, %c0_4] : memref<1x512xf32, #tpu.memory_space<vmem>>, vector<1x512xf32>
    %4 = vector.broadcast %3 : vector<1x512xf32> to vector<16x512xf32>
    %5 = arith.addf %2, %4 : vector<16x512xf32>
    %cst_5 = arith.constant 0.000000e+00 : f32
    %6 = vector.broadcast %cst_5 : f32 to vector<16x512xf32>
    %7 = arith.maximumf %5, %6 : vector<16x512xf32>
    %8 = arith.truncf %7 : vector<16x512xf32> to vector<16x512xbf16>
    %c0_6 = arith.constant 0 : index
    %c0_7 = arith.constant 0 : index
    %9 = vector.load %arg4[%c0_6, %c0_7] : memref<512x512xbf16, #tpu.memory_space<vmem>>, vector<512x512xbf16>
    %cst_8 = arith.constant dense<0.000000e+00> : vector<16x512xf32>
    %10 = tpu.matmul %8, %9, %cst_8 {dimension_numbers = #tpu.dot_dimension_numbers<[1], [0], [0], [1], [0, 0, 1, 1], [], []>} : vector<16x512xbf16>, vector<512x512xbf16>, vector<16x512xf32> -> vector<16x512xf32>
    %c0_9 = arith.constant 0 : index
    %c0_10 = arith.constant 0 : index
    %11 = vector.load %arg5[%c0_9, %c0_10] : memref<1x512xf32, #tpu.memory_space<vmem>>, vector<1x512xf32>
    %12 = vector.broadcast %11 : vector<1x512xf32> to vector<16x512xf32>
    %13 = arith.addf %10, %12 : vector<16x512xf32>
    %cst_11 = arith.constant 0.000000e+00 : f32
    %14 = vector.broadcast %cst_11 : f32 to vector<16x512xf32>
    %15 = arith.maximumf %13, %14 : vector<16x512xf32>
    %16 = arith.truncf %15 : vector<16x512xf32> to vector<16x512xbf16>
    %c0_12 = arith.constant 0 : index
    %c0_13 = arith.constant 0 : index
    %17 = vector.load %arg6[%c0_12, %c0_13] : memref<512x512xbf16, #tpu.memory_space<vmem>>, vector<512x512xbf16>
    %cst_14 = arith.constant dense<0.000000e+00> : vector<16x512xf32>
    %18 = tpu.matmul %16, %17, %cst_14 {dimension_numbers = #tpu.dot_dimension_numbers<[1], [0], [0], [1], [0, 0, 1, 1], [], []>} : vector<16x512xbf16>, vector<512x512xbf16>, vector<16x512xf32> -> vector<16x512xf32>
    %c0_15 = arith.constant 0 : index
    %c0_16 = arith.constant 0 : index
    %19 = vector.load %arg7[%c0_15, %c0_16] : memref<1x512xf32, #tpu.memory_space<vmem>>, vector<1x512xf32>
    %20 = vector.broadcast %19 : vector<1x512xf32> to vector<16x512xf32>
    %21 = arith.addf %18, %20 : vector<16x512xf32>
    %22 = arith.extf %8 : vector<16x512xbf16> to vector<16x512xf32>
    %23 = arith.addf %21, %22 : vector<16x512xf32>
    %cst_17 = arith.constant 0.000000e+00 : f32
    %24 = vector.broadcast %cst_17 : f32 to vector<16x512xf32>
    %25 = arith.maximumf %23, %24 : vector<16x512xf32>
    %26 = arith.truncf %25 : vector<16x512xf32> to vector<16x512xbf16>
    %c0_18 = arith.constant 0 : index
    %c0_19 = arith.constant 0 : index
    %27 = vector.load %arg8[%c0_18, %c0_19] : memref<512x512xbf16, #tpu.memory_space<vmem>>, vector<512x512xbf16>
    %cst_20 = arith.constant dense<0.000000e+00> : vector<16x512xf32>
    %28 = tpu.matmul %26, %27, %cst_20 {dimension_numbers = #tpu.dot_dimension_numbers<[1], [0], [0], [1], [0, 0, 1, 1], [], []>} : vector<16x512xbf16>, vector<512x512xbf16>, vector<16x512xf32> -> vector<16x512xf32>
    %c0_21 = arith.constant 0 : index
    %c0_22 = arith.constant 0 : index
    %29 = vector.load %arg9[%c0_21, %c0_22] : memref<1x512xf32, #tpu.memory_space<vmem>>, vector<1x512xf32>
    %30 = vector.broadcast %29 : vector<1x512xf32> to vector<16x512xf32>
    %31 = arith.addf %28, %30 : vector<16x512xf32>
    %cst_23 = arith.constant 0.000000e+00 : f32
    %32 = vector.broadcast %cst_23 : f32 to vector<16x512xf32>
    %33 = arith.maximumf %31, %32 : vector<16x512xf32>
    %34 = arith.truncf %33 : vector<16x512xf32> to vector<16x512xbf16>
    %c0_24 = arith.constant 0 : index
    %c0_25 = arith.constant 0 : index
    %35 = vector.load %arg10[%c0_24, %c0_25] : memref<512x512xbf16, #tpu.memory_space<vmem>>, vector<512x512xbf16>
    %cst_26 = arith.constant dense<0.000000e+00> : vector<16x512xf32>
    %36 = tpu.matmul %34, %35, %cst_26 {dimension_numbers = #tpu.dot_dimension_numbers<[1], [0], [0], [1], [0, 0, 1, 1], [], []>} : vector<16x512xbf16>, vector<512x512xbf16>, vector<16x512xf32> -> vector<16x512xf32>
    %c0_27 = arith.constant 0 : index
    %c0_28 = arith.constant 0 : index
    %37 = vector.load %arg11[%c0_27, %c0_28] : memref<1x512xf32, #tpu.memory_space<vmem>>, vector<1x512xf32>
    %38 = vector.broadcast %37 : vector<1x512xf32> to vector<16x512xf32>
    %39 = arith.addf %36, %38 : vector<16x512xf32>
    %40 = arith.extf %26 : vector<16x512xbf16> to vector<16x512xf32>
    %41 = arith.addf %39, %40 : vector<16x512xf32>
    %cst_29 = arith.constant 0.000000e+00 : f32
    %42 = vector.broadcast %cst_29 : f32 to vector<16x512xf32>
    %43 = arith.maximumf %41, %42 : vector<16x512xf32>
    %44 = arith.truncf %43 : vector<16x512xf32> to vector<16x512xbf16>
    %c0_30 = arith.constant 0 : index
    %c0_31 = arith.constant 0 : index
    %45 = vector.load %arg12[%c0_30, %c0_31] : memref<512x128xbf16, #tpu.memory_space<vmem>>, vector<512x128xbf16>
    %cst_32 = arith.constant dense<0.000000e+00> : vector<16x128xf32>
    %46 = tpu.matmul %44, %45, %cst_32 {dimension_numbers = #tpu.dot_dimension_numbers<[1], [0], [0], [1], [0, 0, 1, 1], [], []>} : vector<16x512xbf16>, vector<512x128xbf16>, vector<16x128xf32> -> vector<16x128xf32>
    %c0_33 = arith.constant 0 : index
    %c0_34 = arith.constant 0 : index
    %47 = vector.load %arg13[%c0_33, %c0_34] : memref<1x128xf32, #tpu.memory_space<vmem>>, vector<1x128xf32>
    %48 = vector.broadcast %47 : vector<1x128xf32> to vector<16x128xf32>
    %49 = arith.addf %46, %48 : vector<16x128xf32>
    %cst_35 = arith.constant 0.000000e+00 : f32
    %50 = vector.broadcast %cst_35 : f32 to vector<16x128xf32>
    %51 = arith.maximumf %49, %50 : vector<16x128xf32>
    %c0_36 = arith.constant 0 : index
    %c0_37 = arith.constant 0 : index
    %52 = vector.load %arg14[%c0_36, %c0_37] : memref<16x128xf32, #tpu.memory_space<vmem>>, vector<16x128xf32>
    tpu.vector_store %arg14[%c0_36, %c0_37], %51 {strides = array<i32>} : memref<16x128xf32, #tpu.memory_space<vmem>>, vector<16x128xf32>,
    return
  }
  func.func @transform_0(%arg0: i32) -> (i32, i32) {
    %c0_i32 = arith.constant 0 : i32
    %c0_i32_0 = arith.constant 0 : i32
    return %arg0, %c0_i32 : i32, i32
  }
  func.func @transform_1(%arg0: i32) -> (i32, i32) {
    %c0_i32 = arith.constant 0 : i32
    %c0_i32_0 = arith.constant 0 : i32
    %c0_i32_1 = arith.constant 0 : i32
    return %c0_i32, %c0_i32_0 : i32, i32
  }
  func.func @transform_2(%arg0: i32) -> (i32, i32) {
    %c0_i32 = arith.constant 0 : i32
    %c0_i32_0 = arith.constant 0 : i32
    %c0_i32_1 = arith.constant 0 : i32
    return %c0_i32, %c0_i32_0 : i32, i32
  }
  func.func @transform_3(%arg0: i32) -> (i32, i32) {
    %c0_i32 = arith.constant 0 : i32
    %c0_i32_0 = arith.constant 0 : i32
    %c0_i32_1 = arith.constant 0 : i32
    return %c0_i32, %c0_i32_0 : i32, i32
  }
  func.func @transform_4(%arg0: i32) -> (i32, i32) {
    %c0_i32 = arith.constant 0 : i32
    %c0_i32_0 = arith.constant 0 : i32
    %c0_i32_1 = arith.constant 0 : i32
    return %c0_i32, %c0_i32_0 : i32, i32
  }
  func.func @transform_5(%arg0: i32) -> (i32, i32) {
    %c0_i32 = arith.constant 0 : i32
    %c0_i32_0 = arith.constant 0 : i32
    %c0_i32_1 = arith.constant 0 : i32
    return %c0_i32, %c0_i32_0 : i32, i32
  }
  func.func @transform_6(%arg0: i32) -> (i32, i32) {
    %c0_i32 = arith.constant 0 : i32
    %c0_i32_0 = arith.constant 0 : i32
    %c0_i32_1 = arith.constant 0 : i32
    return %c0_i32, %c0_i32_0 : i32, i32
  }
  func.func @transform_7(%arg0: i32) -> (i32, i32) {
    %c0_i32 = arith.constant 0 : i32
    %c0_i32_0 = arith.constant 0 : i32
    %c0_i32_1 = arith.constant 0 : i32
    return %c0_i32, %c0_i32_0 : i32, i32
  }
  func.func @transform_8(%arg0: i32) -> (i32, i32) {
    %c0_i32 = arith.constant 0 : i32
    %c0_i32_0 = arith.constant 0 : i32
    %c0_i32_1 = arith.constant 0 : i32
    return %c0_i32, %c0_i32_0 : i32, i32
  }
  func.func @transform_9(%arg0: i32) -> (i32, i32) {
    %c0_i32 = arith.constant 0 : i32
    %c0_i32_0 = arith.constant 0 : i32
    %c0_i32_1 = arith.constant 0 : i32
    return %c0_i32, %c0_i32_0 : i32, i32
  }
  func.func @transform_10(%arg0: i32) -> (i32, i32) {
    %c0_i32 = arith.constant 0 : i32
    %c0_i32_0 = arith.constant 0 : i32
    %c0_i32_1 = arith.constant 0 : i32
    return %c0_i32, %c0_i32_0 : i32, i32
  }
  func.func @transform_11(%arg0: i32) -> (i32, i32) {
    %c0_i32 = arith.constant 0 : i32
    %c0_i32_0 = arith.constant 0 : i32
    %c0_i32_1 = arith.constant 0 : i32
    return %c0_i32, %c0_i32_0 : i32, i32
  }
  func.func @transform_12(%arg0: i32) -> (i32, i32) {
    %c0_i32 = arith.constant 0 : i32
    %c0_i32_0 = arith.constant 0 : i32
    %c0_i32_1 = arith.constant 0 : i32
    return %c0_i32, %c0_i32_0 : i32, i32
  }
  func.func @transform_13(%arg0: i32) -> (i32, i32) {
    %c0_i32 = arith.constant 0 : i32
    %c0_i32_0 = arith.constant 0 : i32
    return %arg0, %c0_i32 : i32, i32
  }
}

</mosaic_0001>

<llo_original>
// kernel: encoder_forward.1
$region0: #{encoder_forward.1}
  #allocation0 [shape = 'u32[]', space=smem, size = 0x4, offset = 0x4, fixed_abs, tag = 'smem constant byte address 0x4 - core index']
  #allocation1 [shape = 'u32[144,128]{1,0:T(1,128)}', space=vmem, size = 0x12000, scoped, tag = 'internal scratch']
  %s0 = inlined_call_operand.vmem [shape: bf16[16,16], index: 0, kind: input, shape index: {}]
  %s1 = inlined_call_operand.hbm [shape: bf16[16,512], index: 1, kind: input, shape index: {}]
  %s2 = inlined_call_operand.vmem [shape: f32[1,512], index: 2, kind: input, shape index: {}]
  %s3 = inlined_call_operand.hbm [shape: bf16[512,512], index: 3, kind: input, shape index: {}]
  %s4 = inlined_call_operand.vmem [shape: f32[1,512], index: 4, kind: input, shape index: {}]
  %s5 = inlined_call_operand.hbm [shape: bf16[512,512], index: 5, kind: input, shape index: {}]
  %s6 = inlined_call_operand.vmem [shape: f32[1,512], index: 6, kind: input, shape index: {}]
  %s7 = inlined_call_operand.hbm [shape: bf16[512,512], index: 7, kind: input, shape index: {}]
  %s8 = inlined_call_operand.vmem [shape: f32[1,512], index: 8, kind: input, shape index: {}]
  %s9 = inlined_call_operand.hbm [shape: bf16[512,512], index: 9, kind: input, shape index: {}]
  %s10 = inlined_call_operand.vmem [shape: f32[1,512], index: 10, kind: input, shape index: {}]
  %s11 = inlined_call_operand.hbm [shape: bf16[512,128], index: 11, kind: input, shape index: {}]
  %s12 = inlined_call_operand.vmem [shape: f32[1,128], index: 12, kind: input, shape index: {}]
  %s13 = inlined_call_operand.vmem [shape: f32[16,128], index: 13, kind: output, shape index: {}]
  %s14 = sld [smem:[#allocation0]]
  $region86: #{encoder_forward.1} parent=0
    _
  %s16 = ssub.s32 1, %s14
  %s17 = scalar_select 0, %s16, %s14
  $region1: #{encoder_forward.1} parent=0
    #allocation2 [shape = 'u8[16384]{0}', space=vmem, size = 0x4000, scoped, tag = 'input window, operand 1, single buffered']
    #allocation3 [shape = 's32[1]{0}', space=sflag, size = 0x4, scoped, tag = 'scoped memory for encoder_forward.1']
    #allocation4 [shape = 'u8[524288]{0}', space=vmem, size = 0x80000, scoped, tag = 'input window, operand 3, single buffered']
    #allocation5 [shape = 's32[1]{0}', space=sflag, size = 0x4, scoped, tag = 'scoped memory for encoder_forward.1']
    #allocation6 [shape = 'u8[524288]{0}', space=vmem, size = 0x80000, scoped, tag = 'input window, operand 5, single buffered']
    #allocation7 [shape = 'u8[524288]{0}', space=vmem, size = 0x80000, scoped, tag = 'input window, operand 7, single buffered']
    #allocation8 [shape = 's32[1]{0}', space=sflag, size = 0x4, scoped, tag = 'scoped memory for encoder_forward.1']
    #allocation9 [shape = 'u8[524288]{0}', space=vmem, size = 0x80000, scoped, tag = 'input window, operand 9, single buffered']
    #allocation10 [shape = 'u8[131072]{0}', space=vmem, size = 0x20000, scoped, tag = 'input window, operand 11, single buffered']
    #allocation11 [shape = 's32[1]{0}', space=sflag, size = 0x4, scoped, tag = 'scoped memory for encoder_forward.1']
    %18 = vsyncpa [#allocation3], 0
    %19 = vsyncpa [#allocation5], 0
    %20 = vsyncpa [#allocation8], 0
    %21 = vsyncpa [#allocation11], 0
    // Predicated region
    $region2: #{encoder_forward.1} parent=1 // pred_check
      _
    $region3: #{encoder_forward.1} parent=1 // pred_check_branch
      %23 = sbr.rel (0) target = $region5
    $region4: #{encoder_forward.1} parent=1 // pred_region
      _
    $region5: #{encoder_forward.1} parent=1 // pred_fallthru
      _
    // Predicated region
    $region6: #{encoder_forward.1} parent=1 // pred_check
      _
    $region7: #{encoder_forward.1} parent=1 // pred_check_branch
      %25 = sbr.rel (0) target = $region9
    $region8: #{encoder_forward.1} parent=1 // pred_region
      %s27 = ssub.s32 512, 512
      %28 = vsyncadd [#allocation3], %s27
      %s29 = sshll.u32 [#allocation2], 4
      %s30 = int_to_ptr.vmem [resolvable:$true] %s29
      %35 = dma.hbm_to_vmem [thread:$0]  %s1, 512, %s30, [#allocation3], 256, 256, 16
    $region9: #{encoder_forward.1} parent=1 // pred_fallthru
      _
    // Predicated region
    $region10: #{encoder_forward.1} parent=1 // pred_check
      _
    $region11: #{encoder_forward.1} parent=1 // pred_check_branch
      %37 = sbr.rel (0) target = $region13
    $region12: #{encoder_forward.1} parent=1 // pred_region
      _
    $region13: #{encoder_forward.1} parent=1 // pred_fallthru
      _
    // Predicated region
    $region14: #{encoder_forward.1} parent=1 // pred_check
      _
    $region15: #{encoder_forward.1} parent=1 // pred_check_branch
      %39 = sbr.rel (0) target = $region17
    $region16: #{encoder_forward.1} parent=1 // pred_region
      %s41 = ssub.s32 16384, 16384
      %42 = vsyncadd [#allocation5], %s41
      %s43 = sshll.u32 [#allocation4], 4
      %s44 = int_to_ptr.vmem [resolvable:$true] %s43
      %49 = dma.hbm_to_vmem [thread:$0]  %s3, 16384, %s44, [#allocation5], 256, 256, 16
    $region17: #{encoder_forward.1} parent=1 // pred_fallthru
      _
    // Predicated region
    $region18: #{encoder_forward.1} parent=1 // pred_check
      _
    $region19: #{encoder_forward.1} parent=1 // pred_check_branch
      %51 = sbr.rel (0) target = $region21
    $region20: #{encoder_forward.1} parent=1 // pred_region
      _
    $region21: #{encoder_forward.1} parent=1 // pred_fallthru
      _
    // Predicated region
    $region22: #{encoder_forward.1} parent=1 // pred_check
      _
    $region23: #{encoder_forward.1} parent=1 // pred_check_branch
      %53 = sbr.rel (0) target = $region25
    $region24: #{encoder_forward.1} parent=1 // pred_region
      %s55 = ssub.s32 16384, 16384
      %56 = vsyncadd [#allocation5], %s55
      %s57 = sshll.u32 [#allocation6], 4
      %s58 = int_to_ptr.vmem [resolvable:$true] %s57
      %63 = dma.hbm_to_vmem [thread:$0]  %s5, 16384, %s58, [#allocation5], 256, 256, 16
    $region25: #{encoder_forward.1} parent=1 // pred_fallthru
      _
    // Predicated region
    $region26: #{encoder_forward.1} parent=1 // pred_check
      _
    $region27: #{encoder_forward.1} parent=1 // pred_check_branch
      %65 = sbr.rel (0) target = $region29
    $region28: #{encoder_forward.1} parent=1 // pred_region
      _
    $region29: #{encoder_forward.1} parent=1 // pred_fallthru
      _
    // Predicated region
    $region30: #{encoder_forward.1} parent=1 // pred_check
      _
    $region31: #{encoder_forward.1} parent=1 // pred_check_branch
      %67 = sbr.rel (0) target = $region33
    $region32: #{encoder_forward.1} parent=1 // pred_region
      %s69 = ssub.s32 16384, 16384
      %70 = vsyncadd [#allocation8], %s69
      %s71 = sshll.u32 [#allocation7], 4
      %s72 = int_to_ptr.vmem [resolvable:$true] %s71
      %77 = dma.hbm_to_vmem [thread:$0]  %s7, 16384, %s72, [#allocation8], 256, 256, 16
    $region33: #{encoder_forward.1} parent=1 // pred_fallthru
      _
    // Predicated region
    $region34: #{encoder_forward.1} parent=1 // pred_check
      _
    $region35: #{encoder_forward.1} parent=1 // pred_check_branch
      %79 = sbr.rel (0) target = $region37
    $region36: #{encoder_forward.1} parent=1 // pred_region
      _
    $region37: #{encoder_forward.1} parent=1 // pred_fallthru
      _
    // Predicated region
    $region38: #{encoder_forward.1} parent=1 // pred_check
      _
    $region39: #{encoder_forward.1} parent=1 // pred_check_branch
      %81 = sbr.rel (0) target = $region41
    $region40: #{encoder_forward.1} parent=1 // pred_region
      %s83 = ssub.s32 16384, 16384
      %84 = vsyncadd [#allocation8], %s83
      %s85 = sshll.u32 [#allocation9], 4
      %s86 = int_to_ptr.vmem [resolvable:$true] %s85
      %91 = dma.hbm_to_vmem [thread:$0]  %s9, 16384, %s86, [#allocation8], 256, 256, 16
    $region41: #{encoder_forward.1} parent=1 // pred_fallthru
      _
    // Predicated region
    $region42: #{encoder_forward.1} parent=1 // pred_check
      _
    $region43: #{encoder_forward.1} parent=1 // pred_check_branch
      %93 = sbr.rel (0) target = $region45
    $region44: #{encoder_forward.1} parent=1 // pred_region
      _
    $region45: #{encoder_forward.1} parent=1 // pred_fallthru
      _
    // Predicated region
    $region46: #{encoder_forward.1} parent=1 // pred_check
      _
    $region47: #{encoder_forward.1} parent=1 // pred_check_branch
      %95 = sbr.rel (0) target = $region49
    $region48: #{encoder_forward.1} parent=1 // pred_region
      %s97 = ssub.s32 4096, 4096
      %98 = vsyncadd [#allocation11], %s97
      %s99 = sshll.u32 [#allocation10], 4
      %s100 = int_to_ptr.vmem [resolvable:$true] %s99
      %105 = dma.hbm_to_vmem [thread:$0]  %s11, 4096, %s100, [#allocation11], 64, 64, 4
    $region49: #{encoder_forward.1} parent=1 // pred_fallthru
      _
    // Predicated region
    $region50: #{encoder_forward.1} parent=1 // pred_check
      _
    $region51: #{encoder_forward.1} parent=1 // pred_check_branch
      %107 = sbr.rel (0) target = $region53
    $region52: #{encoder_forward.1} parent=1 // pred_region
      _
    $region53: #{encoder_forward.1} parent=1 // pred_fallthru
      _
    // Predicated region
    $region54: #{encoder_forward.1} parent=1 // pred_check
      _
    $region55: #{encoder_forward.1} parent=1 // pred_check_branch
      %109 = sbr.rel (0) target = $region57
    $region56: #{encoder_forward.1} parent=1 // pred_region
      %110 = dma.done [#allocation3], 512
    $region57: #{encoder_forward.1} parent=1 // pred_fallthru
      _
    // Predicated region
    $region58: #{encoder_forward.1} parent=1 // pred_check
      _
    $region59: #{encoder_forward.1} parent=1 // pred_check_branch
      %112 = sbr.rel (0) target = $region61
    $region60: #{encoder_forward.1} parent=1 // pred_region
      %113 = dma.done [#allocation5], 16384
    $region61: #{encoder_forward.1} parent=1 // pred_fallthru
      _
    // Predicated region
    $region62: #{encoder_forward.1} parent=1 // pred_check
      _
    $region63: #{encoder_forward.1} parent=1 // pred_check_branch
      %115 = sbr.rel (0) target = $region65
    $region64: #{encoder_forward.1} parent=1 // pred_region
      %116 = dma.done [#allocation5], 16384
    $region65: #{encoder_forward.1} parent=1 // pred_fallthru
      _
    // Predicated region
    $region66: #{encoder_forward.1} parent=1 // pred_check
      _
    $region67: #{encoder_forward.1} parent=1 // pred_check_branch
      %118 = sbr.rel (0) target = $region69
    $region68: #{encoder_forward.1} parent=1 // pred_region
      %119 = dma.done [#allocation8], 16384
    $region69: #{encoder_forward.1} parent=1 // pred_fallthru
      _
    // Predicated region
    $region70: #{encoder_forward.1} parent=1 // pred_check
      _
    $region71: #{encoder_forward.1} parent=1 // pred_check_branch
      %121 = sbr.rel (0) target = $region73
    $region72: #{encoder_forward.1} parent=1 // pred_region
      %122 = dma.done [#allocation8], 16384
    $region73: #{encoder_forward.1} parent=1 // pred_fallthru
      _
    // Predicated region
    $region74: #{encoder_forward.1} parent=1 // pred_check
      _
    $region75: #{encoder_forward.1} parent=1 // pred_check_branch
      %124 = sbr.rel (0) target = $region77
    $region76: #{encoder_forward.1} parent=1 // pred_region
      %125 = dma.done [#allocation11], 4096
    $region77: #{encoder_forward.1} parent=1 // pred_fallthru
      _
    %v127 = vld [vmem:[%s0] sm:$0xf]
    %v128 = vld [vmem:[%s0 + $0x4] sm:$0xf]
    %v129 = vld [vmem:[#allocation2] sm:$0xff]
    %v130 = vld [vmem:[#allocation2 + $0x8] sm:$0xff]
    %v131 = vld [vmem:[#allocation2 + $0x10] sm:$0xff]
    %v132 = vld [vmem:[#allocation2 + $0x18] sm:$0xff]
    %v133 = vld [vmem:[%s2] sm:$0xf]
    %v135 = vlaneseq
    %v136 = vshrl.u32 %v135, 7
    %v137 = vsub.s32 0, %v136
    %v138 = vrot.slane %v133, %v137
    %v139 = vlaneseq
    %v140 = vshrl.u32 %v139, 7
    %v141 = vsub.s32 1, %v140
    %v142 = vrot.slane %v133, %v141
    %v143 = vlaneseq
    %v144 = vshrl.u32 %v143, 7
    %v145 = vsub.s32 2, %v144
    %v146 = vrot.slane %v133, %v145
    %v147 = vlaneseq
    %v148 = vshrl.u32 %v147, 7
    %v149 = vsub.s32 3, %v148
    %v150 = vrot.slane %v133, %v149
    %v157 = vunpack.c.l.b16 %v127
    %v158 = vunpack.c.l.b16 %v128
    %v159 = vpack.c.b16 %v158, %v157
    %v164 = vunpack.c.l.b16 %v129
    %v165 = vunpack.c.h.b16 %v129
    %v166 = vunpack.c.l.b16 %v130
    %v167 = vunpack.c.h.b16 %v130
    %v168 = vunpack.c.l.b16 %v131
    %v169 = vunpack.c.h.b16 %v131
    %v170 = vunpack.c.l.b16 %v132
    %v171 = vunpack.c.h.b16 %v132
    %v172 = vpack.c.b16 %v168, %v164
    %v173 = vpack.c.b16 %v169, %v165
    %v174 = vpack.c.b16 %v170, %v166
    %v175 = vpack.c.b16 %v171, %v167
    %vm180 = vcmask 130048
    %v182 = vsel %vm180, %v159, 0
    %184 = vmatprep.subr.bf16.mxu0 %v173
    %185 = vmatpush1.bf16.msra.mxu0 %v172
    %186 = vmatprep.subr.bf16.mxu0 0
    %187 = vmatpush1.bf16.msra.mxu0 0
    %188 = vmatprep.subr.bf16.mxu0 0
    %189 = vmatpush1.bf16.msra.mxu0 0
    %190 = vmatprep.subr.bf16.mxu0 0
    %191 = vmatpush1.bf16.msra.mxu0 0
    %192 = vmatprep.subr.bf16.mxu0 0
    %193 = vmatpush1.bf16.msra.mxu0 0
    %194 = vmatprep.subr.bf16.mxu0 0
    %195 = vmatpush1.bf16.msra.mxu0 0
    %196 = vmatprep.subr.bf16.mxu0 0
    %197 = vmatpush1.bf16.msra.mxu0 0
    %198 = vmatprep.subr.bf16.mxu0 0
    %199 = vmatpush1.bf16.msra.mxu0 0
    %200 = vmatprep.subr.bf16.mxu0 0
    %201 = vmatpush1.bf16.msra.mxu0 0
    %202 = vmatprep.subr.bf16.mxu0 0
    %203 = vmatpush1.bf16.msra.mxu0 0
    %204 = vmatprep.subr.bf16.mxu0 0
    %205 = vmatpush1.bf16.msra.mxu0 0
    %206 = vmatprep.subr.bf16.mxu0 0
    %207 = vmatpush1.bf16.msra.mxu0 0
    %208 = vmatprep.subr.bf16.mxu0 0
    %209 = vmatpush1.bf16.msra.mxu0 0
    %210 = vmatprep.subr.bf16.mxu0 0
    %211 = vmatpush1.bf16.msra.mxu0 0
    %212 = vmatprep.subr.bf16.mxu0 0
    %213 = vmatpush1.bf16.msra.mxu0 0
    %214 = vmatprep.subr.bf16.mxu0 0
    %215 = vmatpush1.bf16.msra.mxu0 0
    %216 = vmatprep.mubr.bf16.mxu0 0
    %217 = vmatmul.mubr.bf16.gmra.mrb[0].mxu0 %v182
    %v218 = vpop.f32.mrb[0].mxu0
    %v219 = vadd.f32 %v138, %v218
    %v220 = vpop.f32.mrb[0].mxu0
    %v221 = vadd.f32 %v142, %v220
    %v222 = vpop.f32.mrb[0].mxu0
    %v223 = vadd.f32 %v138, %v222
    %v224 = vpop.f32.mrb[0].mxu0
    %v225 = vadd.f32 %v142, %v224
    %226 = vdwg.mxu0
    %227 = vmatprep.subr.bf16.mxu0 %v175
    %228 = vmatpush1.bf16.msra.mxu0 %v174
    %229 = vmatprep.subr.bf16.mxu0 0
    %230 = vmatpush1.bf16.msra.mxu0 0
    %231 = vmatprep.subr.bf16.mxu0 0
    %232 = vmatpush1.bf16.msra.mxu0 0
    %233 = vmatprep.subr.bf16.mxu0 0
    %234 = vmatpush1.bf16.msra.mxu0 0
    %235 = vmatprep.subr.bf16.mxu0 0
    %236 = vmatpush1.bf16.msra.mxu0 0
    %237 = vmatprep.subr.bf16.mxu0 0
    %238 = vmatpush1.bf16.msra.mxu0 0
    %239 = vmatprep.subr.bf16.mxu0 0
    %240 = vmatpush1.bf16.msra.mxu0 0
    %241 = vmatprep.subr.bf16.mxu0 0
    %242 = vmatpush1.bf16.msra.mxu0 0
    %243 = vmatprep.subr.bf16.mxu0 0
    %244 = vmatpush1.bf16.msra.mxu0 0
    %245 = vmatprep.subr.bf16.mxu0 0
    %246 = vmatpush1.bf16.msra.mxu0 0
    %247 = vmatprep.subr.bf16.mxu0 0
    %248 = vmatpush1.bf16.msra.mxu0 0
    %249 = vmatprep.subr.bf16.mxu0 0
    %250 = vmatpush1.bf16.msra.mxu0 0
    %251 = vmatprep.subr.bf16.mxu0 0
    %252 = vmatpush1.bf16.msra.mxu0 0
    %253 = vmatprep.subr.bf16.mxu0 0
    %254 = vmatpush1.bf16.msra.mxu0 0
    %255 = vmatprep.subr.bf16.mxu0 0
    %256 = vmatpush1.bf16.msra.mxu0 0
    %257 = vmatprep.subr.bf16.mxu0 0
    %258 = vmatpush1.bf16.msra.mxu0 0
    %259 = vmatprep.mubr.bf16.mxu0 0
    %260 = vmatmul.mubr.bf16.gmra.mrb[0].mxu0 %v182
    %v261 = vpop.f32.mrb[0].mxu0
    %v262 = vadd.f32 %v146, %v261
    %v263 = vpop.f32.mrb[0].mxu0
    %v264 = vadd.f32 %v150, %v263
    %v265 = vpop.f32.mrb[0].mxu0
    %v266 = vadd.f32 %v146, %v265
    %v267 = vpop.f32.mrb[0].mxu0
    %v268 = vadd.f32 %v150, %v267
    %269 = vdwg.mxu0
    %v270 = vmax.f32 %v219, 0.0
    %v271 = vmax.f32 %v221, 0.0
    %v272 = vmax.f32 %v262, 0.0
    %v273 = vmax.f32 %v264, 0.0
    %v274 = vmax.f32 %v223, 0.0
    %v275 = vmax.f32 %v225, 0.0
    %v276 = vmax.f32 %v266, 0.0
    %v277 = vmax.f32 %v268, 0.0
    %v278 = vpack.c.bf16 %v274, %v270
    %v279 = vpack.c.bf16 %v275, %v271
    %v280 = vpack.c.bf16 %v276, %v272
    %v281 = vpack.c.bf16 %v277, %v273
    %v282 = vld [vmem:[#allocation4] sm:$0xff]
    %v283 = vld [vmem:[#allocation4 + $0x8] sm:$0xff]
    %v284 = vld [vmem:[#allocation4 + $0x10] sm:$0xff]
    %v285 = vld [vmem:[#allocation4 + $0x18] sm:$0xff]
    %v286 = vld [vmem:[#allocation4 + $0x20] sm:$0xff]
    %v287 = vld [vmem:[#allocation4 + $0x28] sm:$0xff]
    %v288 = vld [vmem:[#allocation4 + $0x30] sm:$0xff]
    %v289 = vld [vmem:[#allocation4 + $0x38] sm:$0xff]
    %v290 = vld [vmem:[#allocation4 + $0x40] sm:$0xff]
    %v291 = vld [vmem:[#allocation4 + $0x48] sm:$0xff]
    %v292 = vld [vmem:[#allocation4 + $0x50] sm:$0xff]
    %v293 = vld [vmem:[#allocation4 + $0x58] sm:$0xff]
    %v294 = vld [vmem:[#allocation4 + $0x60] sm:$0xff]
    %v295 = vld [vmem:[#allocation4 + $0x68] sm:$0xff]
    %v296 = vld [vmem:[#allocation4 + $0x70] sm:$0xff]
    %v297 = vld [vmem:[#allocation4 + $0x78] sm:$0xff]
    %v298 = vld [vmem:[#allocation4 + $0x80] sm:$0xff]
    %v299 = vld [vmem:[#allocation4 + $0x88] sm:$0xff]
    %v300 = vld [vmem:[#allocation4 + $0x90] sm:$0xff]
    %v301 = vld [vmem:[#allocation4 + $0x98] sm:$0xff]
    %v302 = vld [vmem:[#allocation4 + $0xa0] sm:$0xff]
    %v303 = vld [vmem:[#allocation4 + $0xa8] sm:$0xff]
    %v304 = vld [vmem:[#allocation4 + $0xb0] sm:$0xff]
    %v305 = vld [vmem:[#allocation4 + $0xb8] sm:$0xff]
    %v306 = vld [vmem:[#allocation4 + $0xc0] sm:$0xff]
    %v307 = vld [vmem:[#allocation4 + $0xc8] sm:$0xff]
    %v308 = vld [vmem:[#allocation4 + $0xd0] sm:$0xff]
    %v309 = vld [vmem:[#allocation4 + $0xd8] sm:$0xff]
    %v310 = vld [vmem:[#allocation4 + $0xe0] sm:$0xff]
    %v311 = vld [vmem:[#allocation4 + $0xe8] sm:$0xff]
    %v312 = vld [vmem:[#allocation4 + $0xf0] sm:$0xff]
    %v313 = vld [vmem:[#allocation4 + $0xf8] sm:$0xff]
    %v314 = vld [vmem:[#allocation4 + $0x100] sm:$0xff]
    %v315 = vld [vmem:[#allocation4 + $0x108] sm:$0xff]
    %v316 = vld [vmem:[#allocation4 + $0x110] sm:$0xff]
    %v317 = vld [vmem:[#allocation4 + $0x118] sm:$0xff]
    %v318 = vld [vmem:[#allocation4 + $0x120] sm:$0xff]
    %v319 = vld [vmem:[#allocation4 + $0x128] sm:$0xff]
    %v320 = vld [vmem:[#allocation4 + $0x130] sm:$0xff]
    %v321 = vld [vmem:[#allocation4 + $0x138] sm:$0xff]
    %v322 = vld [vmem:[#allocation4 + $0x140] sm:$0xff]
    %v323 = vld [vmem:[#allocation4 + $0x148] sm:$0xff]
    %v324 = vld [vmem:[#allocation4 + $0x150] sm:$0xff]
    %v325 = vld [vmem:[#allocation4 + $0x158] sm:$0xff]
    %v326 = vld [vmem:[#allocation4 + $0x160] sm:$0xff]
    %v327 = vld [vmem:[#allocation4 + $0x168] sm:$0xff]
    %v328 = vld [vmem:[#allocation4 + $0x170] sm:$0xff]
    %v329 = vld [vmem:[#allocation4 + $0x178] sm:$0xff]
    %v330 = vld [vmem:[#allocation4 + $0x180] sm:$0xff]
    %v331 = vld [vmem:[#allocation4 + $0x188] sm:$0xff]
    %v332 = vld [vmem:[#allocation4 + $0x190] sm:$0xff]
    %v333 = vld [vmem:[#allocation4 + $0x198] sm:$0xff]
    %v334 = vld [vmem:[#allocation4 + $0x1a0] sm:$0xff]
    %v335 = vld [vmem:[#allocation4 + $0x1a8] sm:$0xff]
    %v336 = vld [vmem:[#allocation4 + $0x1b0] sm:$0xff]
    %v337 = vld [vmem:[#allocation4 + $0x1b8] sm:$0xff]
    %v338 = vld [vmem:[#allocation4 + $0x1c0] sm:$0xff]
    %v339 = vld [vmem:[#allocation4 + $0x1c8] sm:$0xff]
    %v340 = vld [vmem:[#allocation4 + $0x1d0] sm:$0xff]
    %v341 = vld [vmem:[#allocation4 + $0x1d8] sm:$0xff]
    %v342 = vld [vmem:[#allocation4 + $0x1e0] sm:$0xff]
    %v343 = vld [vmem:[#allocation4 + $0x1e8] sm:$0xff]
    %v344 = vld [vmem:[#allocation4 + $0x1f0] sm:$0xff]
    %v345 = vld [vmem:[#allocation4 + $0x1f8] sm:$0xff]
    %v346 = vld [vmem:[#allocation4 + $0x200] sm:$0xff]
    %v347 = vld [vmem:[#allocation4 + $0x208] sm:$0xff]
    %v348 = vld [vmem:[#allocation4 + $0x210] sm:$0xff]
    %v349 = vld [vmem:[#allocation4 + $0x218] sm:$0xff]
    %v350 = vld [vmem:[#allocation4 + $0x220] sm:$0xff]
    %v351 = vld [vmem:[#allocation4 + $0x228] sm:$0xff]
    %v352 = vld [vmem:[#allocation4 + $0x230] sm:$0xff]
    %v353 = vld [vmem:[#allocation4 + $0x238] sm:$0xff]
    %v354 = vld [vmem:[#allocation4 + $0x240] sm:$0xff]
    %v355 = vld [vmem:[#allocation4 + $0x248] sm:$0xff]
    %v356 = vld [vmem:[#allocation4 + $0x250] sm:$0xff]
    %v357 = vld [vmem:[#allocation4 + $0x258] sm:$0xff]
    %v358 = vld [vmem:[#allocation4 + $0x260] sm:$0xff]
    %v359 = vld [vmem:[#allocation4 + $0x268] sm:$0xff]
    %v360 = vld [vmem:[#allocation4 + $0x270] sm:$0xff]
    %v361 = vld [vmem:[#allocation4 + $0x278] sm:$0xff]
    %v362 = vld [vmem:[#allocation4 + $0x280] sm:$0xff]
    %v363 = vld [vmem:[#allocation4 + $0x288] sm:$0xff]
    %v364 = vld [vmem:[#allocation4 + $0x290] sm:$0xff]
    %v365 = vld [vmem:[#allocation4 + $0x298] sm:$0xff]
    %v366 = vld [vmem:[#allocation4 + $0x2a0] sm:$0xff]
    %v367 = vld [vmem:[#allocation4 + $0x2a8] sm:$0xff]
    %v368 = vld [vmem:[#allocation4 + $0x2b0] sm:$0xff]
    %v369 = vld [vmem:[#allocation4 + $0x2b8] sm:$0xff]
    %v370 = vld [vmem:[#allocation4 + $0x2c0] sm:$0xff]
    %v371 = vld [vmem:[#allocation4 + $0x2c8] sm:$0xff]
    %v372 = vld [vmem:[#allocation4 + $0x2d0] sm:$0xff]
    %v373 = vld [vmem:[#allocation4 + $0x2d8] sm:$0xff]
    %v374 = vld [vmem:[#allocation4 + $0x2e0] sm:$0xff]
    %v375 = vld [vmem:[#allocation4 + $0x2e8] sm:$0xff]
    %v376 = vld [vmem:[#allocation4 + $0x2f0] sm:$0xff]
    %v377 = vld [vmem:[#allocation4 + $0x2f8] sm:$0xff]
    %v378 = vld [vmem:[#allocation4 + $0x300] sm:$0xff]
    %v379 = vld [vmem:[#allocation4 + $0x308] sm:$0xff]
    %v380 = vld [vmem:[#allocation4 + $0x310] sm:$0xff]
    %v381 = vld [vmem:[#allocation4 + $0x318] sm:$0xff]
    %v382 = vld [vmem:[#allocation4 + $0x320] sm:$0xff]
    %v383 = vld [vmem:[#allocation4 + $0x328] sm:$0xff]
    %v384 = vld [vmem:[#allocation4 + $0x330] sm:$0xff]
    %v385 = vld [vmem:[#allocation4 + $0x338] sm:$0xff]
    %v386 = vld [vmem:[#allocation4 + $0x340] sm:$0xff]
    %v387 = vld [vmem:[#allocation4 + $0x348] sm:$0xff]
    %v388 = vld [vmem:[#allocation4 + $0x350] sm:$0xff]
    %v389 = vld [vmem:[#allocation4 + $0x358] sm:$0xff]
    %v390 = vld [vmem:[#allocation4 + $0x360] sm:$0xff]
    %v391 = vld [vmem:[#allocation4 + $0x368] sm:$0xff]
    %v392 = vld [vmem:[#allocation4 + $0x370] sm:$0xff]
    %v393 = vld [vmem:[#allocation4 + $0x378] sm:$0xff]
    %v394 = vld [vmem:[#allocation4 + $0x380] sm:$0xff]
    %v395 = vld [vmem:[#allocation4 + $0x388] sm:$0xff]
    %v396 = vld [vmem:[#allocation4 + $0x390] sm:$0xff]
    %v397 = vld [vmem:[#allocation4 + $0x398] sm:$0xff]
    %v398 = vld [vmem:[#allocation4 + $0x3a0] sm:$0xff]
    %v399 = vld [vmem:[#allocation4 + $0x3a8] sm:$0xff]
    %v400 = vld [vmem:[#allocation4 + $0x3b0] sm:$0xff]
    %v401 = vld [vmem:[#allocation4 + $0x3b8] sm:$0xff]
    %v402 = vld [vmem:[#allocation4 + $0x3c0] sm:$0xff]
    %v403 = vld [vmem:[#allocation4 + $0x3c8] sm:$0xff]
    %v404 = vld [vmem:[#allocation4 + $0x3d0] sm:$0xff]
    %v405 = vld [vmem:[#allocation4 + $0x3d8] sm:$0xff]
    %v406 = vld [vmem:[#allocation4 + $0x3e0] sm:$0xff]
    %v407 = vld [vmem:[#allocation4 + $0x3e8] sm:$0xff]
    %v408 = vld [vmem:[#allocation4 + $0x3f0] sm:$0xff]
    %v409 = vld [vmem:[#allocation4 + $0x3f8] sm:$0xff]
    %v410 = vld [vmem:[%s4] sm:$0xf]
    %v412 = vlaneseq
    %v413 = vshrl.u32 %v412, 7
    %v414 = vsub.s32 0, %v413
    %v415 = vrot.slane %v410, %v414
    %v416 = vlaneseq
    %v417 = vshrl.u32 %v416, 7
    %v418 = vsub.s32 1, %v417
    %v419 = vrot.slane %v410, %v418
    %v420 = vlaneseq
    %v421 = vshrl.u32 %v420, 7
    %v422 = vsub.s32 2, %v421
    %v423 = vrot.slane %v410, %v422
    %v424 = vlaneseq
    %v425 = vshrl.u32 %v424, 7
    %v426 = vsub.s32 3, %v425
    %v427 = vrot.slane %v410, %v426
    %v560 = vunpack.c.l.b16 %v282
    %v561 = vunpack.c.h.b16 %v282
    %v562 = vunpack.c.l.b16 %v283
    %v563 = vunpack.c.h.b16 %v283
    %v564 = vunpack.c.l.b16 %v284
    %v565 = vunpack.c.h.b16 %v284
    %v566 = vunpack.c.l.b16 %v285
    %v567 = vunpack.c.h.b16 %v285
    %v568 = vunpack.c.l.b16 %v286
    %v569 = vunpack.c.h.b16 %v286
    %v570 = vunpack.c.l.b16 %v287
    %v571 = vunpack.c.h.b16 %v287
    %v572 = vunpack.c.l.b16 %v288
    %v573 = vunpack.c.h.b16 %v288
    %v574 = vunpack.c.l.b16 %v289
    %v575 = vunpack.c.h.b16 %v289
    %v576 = vunpack.c.l.b16 %v290
    %v577 = vunpack.c.h.b16 %v290
    %v578 = vunpack.c.l.b16 %v291
    %v579 = vunpack.c.h.b16 %v291
    %v580 = vunpack.c.l.b16 %v292
    %v581 = vunpack.c.h.b16 %v292
    %v582 = vunpack.c.l.b16 %v293
    %v583 = vunpack.c.h.b16 %v293
    %v584 = vunpack.c.l.b16 %v294
    %v585 = vunpack.c.h.b16 %v294
    %v586 = vunpack.c.l.b16 %v295
    %v587 = vunpack.c.h.b16 %v295
    %v588 = vunpack.c.l.b16 %v296
    %v589 = vunpack.c.h.b16 %v296
    %v590 = vunpack.c.l.b16 %v297
    %v591 = vunpack.c.h.b16 %v297
    %v592 = vunpack.c.l.b16 %v298
    %v593 = vunpack.c.h.b16 %v298
    %v594 = vunpack.c.l.b16 %v299
    %v595 = vunpack.c.h.b16 %v299
    %v596 = vunpack.c.l.b16 %v300
    %v597 = vunpack.c.h.b16 %v300
    %v598 = vunpack.c.l.b16 %v301
    %v599 = vunpack.c.h.b16 %v301
    %v600 = vunpack.c.l.b16 %v302
    %v601 = vunpack.c.h.b16 %v302
    %v602 = vunpack.c.l.b16 %v303
    %v603 = vunpack.c.h.b16 %v303
    %v604 = vunpack.c.l.b16 %v304
    %v605 = vunpack.c.h.b16 %v304
    %v606 = vunpack.c.l.b16 %v305
    %v607 = vunpack.c.h.b16 %v305
    %v608 = vunpack.c.l.b16 %v306
    %v609 = vunpack.c.h.b16 %v306
    %v610 = vunpack.c.l.b16 %v307
    %v611 = vunpack.c.h.b16 %v307
    %v612 = vunpack.c.l.b16 %v308
    %v613 = vunpack.c.h.b16 %v308
    %v614 = vunpack.c.l.b16 %v309
    %v615 = vunpack.c.h.b16 %v309
    %v616 = vunpack.c.l.b16 %v310
    %v617 = vunpack.c.h.b16 %v310
    %v618 = vunpack.c.l.b16 %v311
    %v619 = vunpack.c.h.b16 %v311
    %v620 = vunpack.c.l.b16 %v312
    %v621 = vunpack.c.h.b16 %v312
    %v622 = vunpack.c.l.b16 %v313
    %v623 = vunpack.c.h.b16 %v313
    %v624 = vunpack.c.l.b16 %v314
    %v625 = vunpack.c.h.b16 %v314
    %v626 = vunpack.c.l.b16 %v315
    %v627 = vunpack.c.h.b16 %v315
    %v628 = vunpack.c.l.b16 %v316
    %v629 = vunpack.c.h.b16 %v316
    %v630 = vunpack.c.l.b16 %v317
    %v631 = vunpack.c.h.b16 %v317
    %v632 = vunpack.c.l.b16 %v318
    %v633 = vunpack.c.h.b16 %v318
    %v634 = vunpack.c.l.b16 %v319
    %v635 = vunpack.c.h.b16 %v319
    %v636 = vunpack.c.l.b16 %v320
    %v637 = vunpack.c.h.b16 %v320
    %v638 = vunpack.c.l.b16 %v321
    %v639 = vunpack.c.h.b16 %v321
    %v640 = vunpack.c.l.b16 %v322
    %v641 = vunpack.c.h.b16 %v322
    %v642 = vunpack.c.l.b16 %v323
    %v643 = vunpack.c.h.b16 %v323
    %v644 = vunpack.c.l.b16 %v324
    %v645 = vunpack.c.h.b16 %v324
    %v646 = vunpack.c.l.b16 %v325
    %v647 = vunpack.c.h.b16 %v325
    %v648 = vunpack.c.l.b16 %v326
    %v649 = vunpack.c.h.b16 %v326
    %v650 = vunpack.c.l.b16 %v327
    %v651 = vunpack.c.h.b16 %v327
    %v652 = vunpack.c.l.b16 %v328
    %v653 = vunpack.c.h.b16 %v328
    %v654 = vunpack.c.l.b16 %v329
    %v655 = vunpack.c.h.b16 %v329
    %v656 = vunpack.c.l.b16 %v330
    %v657 = vunpack.c.h.b16 %v330
    %v658 = vunpack.c.l.b16 %v331
    %v659 = vunpack.c.h.b16 %v331
    %v660 = vunpack.c.l.b16 %v332
    %v661 = vunpack.c.h.b16 %v332
    %v662 = vunpack.c.l.b16 %v333
    %v663 = vunpack.c.h.b16 %v333
    %v664 = vunpack.c.l.b16 %v334
    %v665 = vunpack.c.h.b16 %v334
    %v666 = vunpack.c.l.b16 %v335
    %v667 = vunpack.c.h.b16 %v335
    %v668 = vunpack.c.l.b16 %v336
    %v669 = vunpack.c.h.b16 %v336
    %v670 = vunpack.c.l.b16 %v337
    %v671 = vunpack.c.h.b16 %v337
    %v672 = vunpack.c.l.b16 %v338
    %v673 = vunpack.c.h.b16 %v338
    %v674 = vunpack.c.l.b16 %v339
    %v675 = vunpack.c.h.b16 %v339
    %v676 = vunpack.c.l.b16 %v340
    %v677 = vunpack.c.h.b16 %v340
    %v678 = vunpack.c.l.b16 %v341
    %v679 = vunpack.c.h.b16 %v341
    %v680 = vunpack.c.l.b16 %v342
    %v681 = vunpack.c.h.b16 %v342
    %v682 = vunpack.c.l.b16 %v343
    %v683 = vunpack.c.h.b16 %v343
    %v684 = vunpack.c.l.b16 %v344
    %v685 = vunpack.c.h.b16 %v344
    %v686 = vunpack.c.l.b16 %v345
    %v687 = vunpack.c.h.b16 %v345
    %v688 = vunpack.c.l.b16 %v346
    %v689 = vunpack.c.h.b16 %v346
    %v690 = vunpack.c.l.b16 %v347
    %v691 = vunpack.c.h.b16 %v347
    %v692 = vunpack.c.l.b16 %v348
    %v693 = vunpack.c.h.b16 %v348
    %v694 = vunpack.c.l.b16 %v349
    %v695 = vunpack.c.h.b16 %v349
    %v696 = vunpack.c.l.b16 %v350
    %v697 = vunpack.c.h.b16 %v350
    %v698 = vunpack.c.l.b16 %v351
    %v699 = vunpack.c.h.b16 %v351
    %v700 = vunpack.c.l.b16 %v352
    %v701 = vunpack.c.h.b16 %v352
    %v702 = vunpack.c.l.b16 %v353
    %v703 = vunpack.c.h.b16 %v353
    %v704 = vunpack.c.l.b16 %v354
    %v705 = vunpack.c.h.b16 %v354
    %v706 = vunpack.c.l.b16 %v355
    %v707 = vunpack.c.h.b16 %v355
    %v708 = vunpack.c.l.b16 %v356
    %v709 = vunpack.c.h.b16 %v356
    %v710 = vunpack.c.l.b16 %v357
    %v711 = vunpack.c.h.b16 %v357
    %v712 = vunpack.c.l.b16 %v358
    %v713 = vunpack.c.h.b16 %v358
    %v714 = vunpack.c.l.b16 %v359
    %v715 = vunpack.c.h.b16 %v359
    %v716 = vunpack.c.l.b16 %v360
    %v717 = vunpack.c.h.b16 %v360
    %v718 = vunpack.c.l.b16 %v361
    %v719 = vunpack.c.h.b16 %v361
    %v720 = vunpack.c.l.b16 %v362
    %v721 = vunpack.c.h.b16 %v362
    %v722 = vunpack.c.l.b16 %v363
    %v723 = vunpack.c.h.b16 %v363
    %v724 = vunpack.c.l.b16 %v364
    %v725 = vunpack.c.h.b16 %v364
    %v726 = vunpack.c.l.b16 %v365
    %v727 = vunpack.c.h.b16 %v365
    %v728 = vunpack.c.l.b16 %v366
    %v729 = vunpack.c.h.b16 %v366
    %v730 = vunpack.c.l.b16 %v367
    %v731 = vunpack.c.h.b16 %v367
    %v732 = vunpack.c.l.b16 %v368
    %v733 = vunpack.c.h.b16 %v368
    %v734 = vunpack.c.l.b16 %v369
    %v735 = vunpack.c.h.b16 %v369
    %v736 = vunpack.c.l.b16 %v370
    %v737 = vunpack.c.h.b16 %v370
    %v738 = vunpack.c.l.b16 %v371
    %v739 = vunpack.c.h.b16 %v371
    %v740 = vunpack.c.l.b16 %v372
    %v741 = vunpack.c.h.b16 %v372
    %v742 = vunpack.c.l.b16 %v373
    %v743 = vunpack.c.h.b16 %v373
    %v744 = vunpack.c.l.b16 %v374
    %v745 = vunpack.c.h.b16 %v374
    %v746 = vunpack.c.l.b16 %v375
    %v747 = vunpack.c.h.b16 %v375
    %v748 = vunpack.c.l.b16 %v376
    %v749 = vunpack.c.h.b16 %v376
    %v750 = vunpack.c.l.b16 %v377
    %v751 = vunpack.c.h.b16 %v377
    %v752 = vunpack.c.l.b16 %v378
    %v753 = vunpack.c.h.b16 %v378
    %v754 = vunpack.c.l.b16 %v379
    %v755 = vunpack.c.h.b16 %v379
    %v756 = vunpack.c.l.b16 %v380
    %v757 = vunpack.c.h.b16 %v380
    %v758 = vunpack.c.l.b16 %v381
    %v759 = vunpack.c.h.b16 %v381
    %v760 = vunpack.c.l.b16 %v382
    %v761 = vunpack.c.h.b16 %v382
    %v762 = vunpack.c.l.b16 %v383
    %v763 = vunpack.c.h.b16 %v383
    %v764 = vunpack.c.l.b16 %v384
    %v765 = vunpack.c.h.b16 %v384
    %v766 = vunpack.c.l.b16 %v385
    %v767 = vunpack.c.h.b16 %v385
    %v768 = vunpack.c.l.b16 %v386
    %v769 = vunpack.c.h.b16 %v386
    %v770 = vunpack.c.l.b16 %v387
    %v771 = vunpack.c.h.b16 %v387
    %v772 = vunpack.c.l.b16 %v388
    %v773 = vunpack.c.h.b16 %v388
    %v774 = vunpack.c.l.b16 %v389
    %v775 = vunpack.c.h.b16 %v389
    %v776 = vunpack.c.l.b16 %v390
    %v777 = vunpack.c.h.b16 %v390
    %v778 = vunpack.c.l.b16 %v391
    %v779 = vunpack.c.h.b16 %v391
    %v780 = vunpack.c.l.b16 %v392
    %v781 = vunpack.c.h.b16 %v392
    %v782 = vunpack.c.l.b16 %v393
    %v783 = vunpack.c.h.b16 %v393
    %v784 = vunpack.c.l.b16 %v394
    %v785 = vunpack.c.h.b16 %v394
    %v786 = vunpack.c.l.b16 %v395
    %v787 = vunpack.c.h.b16 %v395
    %v788 = vunpack.c.l.b16 %v396
    %v789 = vunpack.c.h.b16 %v396
    %v790 = vunpack.c.l.b16 %v397
    %v791 = vunpack.c.h.b16 %v397
    %v792 = vunpack.c.l.b16 %v398
    %v793 = vunpack.c.h.b16 %v398
    %v794 = vunpack.c.l.b16 %v399
    %v795 = vunpack.c.h.b16 %v399
    %v796 = vunpack.c.l.b16 %v400
    %v797 = vunpack.c.h.b16 %v400
    %v798 = vunpack.c.l.b16 %v401
    %v799 = vunpack.c.h.b16 %v401
    %v800 = vunpack.c.l.b16 %v402
    %v801 = vunpack.c.h.b16 %v402
    %v802 = vunpack.c.l.b16 %v403
    %v803 = vunpack.c.h.b16 %v403
    %v804 = vunpack.c.l.b16 %v404
    %v805 = vunpack.c.h.b16 %v404
    %v806 = vunpack.c.l.b16 %v405
    %v807 = vunpack.c.h.b16 %v405
    %v808 = vunpack.c.l.b16 %v406
    %v809 = vunpack.c.h.b16 %v406
    %v810 = vunpack.c.l.b16 %v407
    %v811 = vunpack.c.h.b16 %v407
    %v812 = vunpack.c.l.b16 %v408
    %v813 = vunpack.c.h.b16 %v408
    %v814 = vunpack.c.l.b16 %v409
    %v815 = vunpack.c.h.b16 %v409
    %v816 = vpack.c.b16 %v564, %v560
    %v817 = vpack.c.b16 %v565, %v561
    %v818 = vpack.c.b16 %v566, %v562
    %v819 = vpack.c.b16 %v567, %v563
    %v820 = vpack.c.b16 %v572, %v568
    %v821 = vpack.c.b16 %v573, %v569
    %v822 = vpack.c.b16 %v574, %v570
    %v823 = vpack.c.b16 %v575, %v571
    %v824 = vpack.c.b16 %v580, %v576
    %v825 = vpack.c.b16 %v581, %v577
    %v826 = vpack.c.b16 %v582, %v578
    %v827 = vpack.c.b16 %v583, %v579
    %v828 = vpack.c.b16 %v588, %v584
    %v829 = vpack.c.b16 %v589, %v585
    %v830 = vpack.c.b16 %v590, %v586
    %v831 = vpack.c.b16 %v591, %v587
    %v832 = vpack.c.b16 %v596, %v592
    %v833 = vpack.c.b16 %v597, %v593
    %v834 = vpack.c.b16 %v598, %v594
    %v835 = vpack.c.b16 %v599, %v595
    %v836 = vpack.c.b16 %v604, %v600
    %v837 = vpack.c.b16 %v605, %v601
    %v838 = vpack.c.b16 %v606, %v602
    %v839 = vpack.c.b16 %v607, %v603
    %v840 = vpack.c.b16 %v612, %v608
    %v841 = vpack.c.b16 %v613, %v609
    %v842 = vpack.c.b16 %v614, %v610
    %v843 = vpack.c.b16 %v615, %v611
    %v844 = vpack.c.b16 %v620, %v616
    %v845 = vpack.c.b16 %v621, %v617
    %v846 = vpack.c.b16 %v622, %v618
    %v847 = vpack.c.b16 %v623, %v619
    %v848 = vpack.c.b16 %v628, %v624
    %v849 = vpack.c.b16 %v629, %v625
    %v850 = vpack.c.b16 %v630, %v626
    %v851 = vpack.c.b16 %v631, %v627
    %v852 = vpack.c.b16 %v636, %v632
    %v853 = vpack.c.b16 %v637, %v633
    %v854 = vpack.c.b16 %v638, %v634
    %v855 = vpack.c.b16 %v639, %v635
    %v856 = vpack.c.b16 %v644, %v640
    %v857 = vpack.c.b16 %v645, %v641
    %v858 = vpack.c.b16 %v646, %v642
    %v859 = vpack.c.b16 %v647, %v643
    %v860 = vpack.c.b16 %v652, %v648
    %v861 = vpack.c.b16 %v653, %v649
    %v862 = vpack.c.b16 %v654, %v650
    %v863 = vpack.c.b16 %v655, %v651
    %v864 = vpack.c.b16 %v660, %v656
    %v865 = vpack.c.b16 %v661, %v657
    %v866 = vpack.c.b16 %v662, %v658
    %v867 = vpack.c.b16 %v663, %v659
    %v868 = vpack.c.b16 %v668, %v664
    %v869 = vpack.c.b16 %v669, %v665
    %v870 = vpack.c.b16 %v670, %v666
    %v871 = vpack.c.b16 %v671, %v667
    %v872 = vpack.c.b16 %v676, %v672
    %v873 = vpack.c.b16 %v677, %v673
    %v874 = vpack.c.b16 %v678, %v674
    %v875 = vpack.c.b16 %v679, %v675
    %v876 = vpack.c.b16 %v684, %v680
    %v877 = vpack.c.b16 %v685, %v681
    %v878 = vpack.c.b16 %v686, %v682
    %v879 = vpack.c.b16 %v687, %v683
    %v880 = vpack.c.b16 %v692, %v688
    %v881 = vpack.c.b16 %v693, %v689
    %v882 = vpack.c.b16 %v694, %v690
    %v883 = vpack.c.b16 %v695, %v691
    %v884 = vpack.c.b16 %v700, %v696
    %v885 = vpack.c.b16 %v701, %v697
    %v886 = vpack.c.b16 %v702, %v698
    %v887 = vpack.c.b16 %v703, %v699
    %v888 = vpack.c.b16 %v708, %v704
    %v889 = vpack.c.b16 %v709, %v705
    %v890 = vpack.c.b16 %v710, %v706
    %v891 = vpack.c.b16 %v711, %v707
    %v892 = vpack.c.b16 %v716, %v712
    %v893 = vpack.c.b16 %v717, %v713
    %v894 = vpack.c.b16 %v718, %v714
    %v895 = vpack.c.b16 %v719, %v715
    %v896 = vpack.c.b16 %v724, %v720
    %v897 = vpack.c.b16 %v725, %v721
    %v898 = vpack.c.b16 %v726, %v722
    %v899 = vpack.c.b16 %v727, %v723
    %v900 = vpack.c.b16 %v732, %v728
    %v901 = vpack.c.b16 %v733, %v729
    %v902 = vpack.c.b16 %v734, %v730
    %v903 = vpack.c.b16 %v735, %v731
    %v904 = vpack.c.b16 %v740, %v736
    %v905 = vpack.c.b16 %v741, %v737
    %v906 = vpack.c.b16 %v742, %v738
    %v907 = vpack.c.b16 %v743, %v739
    %v908 = vpack.c.b16 %v748, %v744
    %v909 = vpack.c.b16 %v749, %v745
    %v910 = vpack.c.b16 %v750, %v746
    %v911 = vpack.c.b16 %v751, %v747
    %v912 = vpack.c.b16 %v756, %v752
    %v913 = vpack.c.b16 %v757, %v753
    %v914 = vpack.c.b16 %v758, %v754
    %v915 = vpack.c.b16 %v759, %v755
    %v916 = vpack.c.b16 %v764, %v760
    %v917 = vpack.c.b16 %v765, %v761
    %v918 = vpack.c.b16 %v766, %v762
    %v919 = vpack.c.b16 %v767, %v763
    %v920 = vpack.c.b16 %v772, %v768
    %v921 = vpack.c.b16 %v773, %v769
    %v922 = vpack.c.b16 %v774, %v770
    %v923 = vpack.c.b16 %v775, %v771
    %v924 = vpack.c.b16 %v780, %v776
    %v925 = vpack.c.b16 %v781, %v777
    %v926 = vpack.c.b16 %v782, %v778
    %v927 = vpack.c.b16 %v783, %v779
    %v928 = vpack.c.b16 %v788, %v784
    %v929 = vpack.c.b16 %v789, %v785
    %v930 = vpack.c.b16 %v790, %v786
    %v931 = vpack.c.b16 %v791, %v787
    %v932 = vpack.c.b16 %v796, %v792
    %v933 = vpack.c.b16 %v797, %v793
    %v934 = vpack.c.b16 %v798, %v794
    %v935 = vpack.c.b16 %v799, %v795
    %v936 = vpack.c.b16 %v804, %v800
    %v937 = vpack.c.b16 %v805, %v801
    %v938 = vpack.c.b16 %v806, %v802
    %v939 = vpack.c.b16 %v807, %v803
    %v940 = vpack.c.b16 %v812, %v808
    %v941 = vpack.c.b16 %v813, %v809
    %v942 = vpack.c.b16 %v814, %v810
    %v943 = vpack.c.b16 %v815, %v811
    %1072 = vmatprep.subr.bf16.mxu0 %v817
    %1073 = vmatpush1.bf16.msra.mxu0 %v816
    %1074 = vmatprep.subr.bf16.mxu0 %v821
    %1075 = vmatpush1.bf16.msra.mxu0 %v820
    %1076 = vmatprep.subr.bf16.mxu0 %v825
    %1077 = vmatpush1.bf16.msra.mxu0 %v824
    %1078 = vmatprep.subr.bf16.mxu0 %v829
    %1079 = vmatpush1.bf16.msra.mxu0 %v828
    %1080 = vmatprep.subr.bf16.mxu0 %v833
    %1081 = vmatpush1.bf16.msra.mxu0 %v832
    %1082 = vmatprep.subr.bf16.mxu0 %v837
    %1083 = vmatpush1.bf16.msra.mxu0 %v836
    %1084 = vmatprep.subr.bf16.mxu0 %v841
    %1085 = vmatpush1.bf16.msra.mxu0 %v840
    %1086 = vmatprep.subr.bf16.mxu0 %v845
    %1087 = vmatpush1.bf16.msra.mxu0 %v844
    %1088 = vmatprep.subr.bf16.mxu0 %v849
    %1089 = vmatpush1.bf16.msra.mxu0 %v848
    %1090 = vmatprep.subr.bf16.mxu0 %v853
    %1091 = vmatpush1.bf16.msra.mxu0 %v852
    %1092 = vmatprep.subr.bf16.mxu0 %v857
    %1093 = vmatpush1.bf16.msra.mxu0 %v856
    %1094 = vmatprep.subr.bf16.mxu0 %v861
    %1095 = vmatpush1.bf16.msra.mxu0 %v860
    %1096 = vmatprep.subr.bf16.mxu0 %v865
    %1097 = vmatpush1.bf16.msra.mxu0 %v864
    %1098 = vmatprep.subr.bf16.mxu0 %v869
    %1099 = vmatpush1.bf16.msra.mxu0 %v868
    %1100 = vmatprep.subr.bf16.mxu0 %v873
    %1101 = vmatpush1.bf16.msra.mxu0 %v872
    %1102 = vmatprep.subr.bf16.mxu0 %v877
    %1103 = vmatpush1.bf16.msra.mxu0 %v876
    %1104 = vmatprep.mubr.bf16.mxu0 %v279
    %1105 = vmatmul.mubr.bf16.gmra.mrb[0].mxu0 %v278
    %v1106 = vpop.f32.mrb[0].mxu0
    %v1107 = vadd.f32 %v415, %v1106
    %v1108 = vpop.f32.mrb[0].mxu0
    %v1109 = vadd.f32 %v419, %v1108
    %v1110 = vpop.f32.mrb[0].mxu0
    %v1111 = vadd.f32 %v415, %v1110
    %v1112 = vpop.f32.mrb[0].mxu0
    %v1113 = vadd.f32 %v419, %v1112
    %1114 = vdwg.mxu0
    %1115 = vmatprep.subr.bf16.mxu0 %v881
    %1116 = vmatpush1.bf16.msra.mxu0 %v880
    %1117 = vmatprep.subr.bf16.mxu0 %v885
    %1118 = vmatpush1.bf16.msra.mxu0 %v884
    %1119 = vmatprep.subr.bf16.mxu0 %v889
    %1120 = vmatpush1.bf16.msra.mxu0 %v888
    %1121 = vmatprep.subr.bf16.mxu0 %v893
    %1122 = vmatpush1.bf16.msra.mxu0 %v892
    %1123 = vmatprep.subr.bf16.mxu0 %v897
    %1124 = vmatpush1.bf16.msra.mxu0 %v896
    %1125 = vmatprep.subr.bf16.mxu0 %v901
    %1126 = vmatpush1.bf16.msra.mxu0 %v900
    %1127 = vmatprep.subr.bf16.mxu0 %v905
    %1128 = vmatpush1.bf16.msra.mxu0 %v904
    %1129 = vmatprep.subr.bf16.mxu0 %v909
    %1130 = vmatpush1.bf16.msra.mxu0 %v908
    %1131 = vmatprep.subr.bf16.mxu0 %v913
    %1132 = vmatpush1.bf16.msra.mxu0 %v912
    %1133 = vmatprep.subr.bf16.mxu0 %v917
    %1134 = vmatpush1.bf16.msra.mxu0 %v916
    %1135 = vmatprep.subr.bf16.mxu0 %v921
    %1136 = vmatpush1.bf16.msra.mxu0 %v920
    %1137 = vmatprep.subr.bf16.mxu0 %v925
    %1138 = vmatpush1.bf16.msra.mxu0 %v924
    %1139 = vmatprep.subr.bf16.mxu0 %v929
    %1140 = vmatpush1.bf16.msra.mxu0 %v928
    %1141 = vmatprep.subr.bf16.mxu0 %v933
    %1142 = vmatpush1.bf16.msra.mxu0 %v932
    %1143 = vmatprep.subr.bf16.mxu0 %v937
    %1144 = vmatpush1.bf16.msra.mxu0 %v936
    %1145 = vmatprep.subr.bf16.mxu0 %v941
    %1146 = vmatpush1.bf16.msra.mxu0 %v940
    %1147 = vmatprep.mubr.bf16.mxu0 %v281
    %1148 = vmatmul.mubr.bf16.gmra.mrb[0].mxu0 %v280
    %v1149 = vpop.f32.mrb[0].mxu0
    %v1150 = vadd.f32 %v1107, %v1149
    %v1151 = vpop.f32.mrb[0].mxu0
    %v1152 = vadd.f32 %v1109, %v1151
    %v1153 = vpop.f32.mrb[0].mxu0
    %v1154 = vadd.f32 %v1111, %v1153
    %v1155 = vpop.f32.mrb[0].mxu0
    %v1156 = vadd.f32 %v1113, %v1155
    %1157 = vdwg.mxu0
    %1158 = vmatprep.subr.bf16.mxu0 %v819
    %1159 = vmatpush1.bf16.msra.mxu0 %v818
    %1160 = vmatprep.subr.bf16.mxu0 %v823
    %1161 = vmatpush1.bf16.msra.mxu0 %v822
    %1162 = vmatprep.subr.bf16.mxu0 %v827
    %1163 = vmatpush1.bf16.msra.mxu0 %v826
    %1164 = vmatprep.subr.bf16.mxu0 %v831
    %1165 = vmatpush1.bf16.msra.mxu0 %v830
    %1166 = vmatprep.subr.bf16.mxu0 %v835
    %1167 = vmatpush1.bf16.msra.mxu0 %v834
    %1168 = vmatprep.subr.bf16.mxu0 %v839
    %1169 = vmatpush1.bf16.msra.mxu0 %v838
    %1170 = vmatprep.subr.bf16.mxu0 %v843
    %1171 = vmatpush1.bf16.msra.mxu0 %v842
    %1172 = vmatprep.subr.bf16.mxu0 %v847
    %1173 = vmatpush1.bf16.msra.mxu0 %v846
    %1174 = vmatprep.subr.bf16.mxu0 %v851
    %1175 = vmatpush1.bf16.msra.mxu0 %v850
    %1176 = vmatprep.subr.bf16.mxu0 %v855
    %1177 = vmatpush1.bf16.msra.mxu0 %v854
    %1178 = vmatprep.subr.bf16.mxu0 %v859
    %1179 = vmatpush1.bf16.msra.mxu0 %v858
    %1180 = vmatprep.subr.bf16.mxu0 %v863
    %1181 = vmatpush1.bf16.msra.mxu0 %v862
    %1182 = vmatprep.subr.bf16.mxu0 %v867
    %1183 = vmatpush1.bf16.msra.mxu0 %v866
    %1184 = vmatprep.subr.bf16.mxu0 %v871
    %1185 = vmatpush1.bf16.msra.mxu0 %v870
    %1186 = vmatprep.subr.bf16.mxu0 %v875
    %1187 = vmatpush1.bf16.msra.mxu0 %v874
    %1188 = vmatprep.subr.bf16.mxu0 %v879
    %1189 = vmatpush1.bf16.msra.mxu0 %v878
    %1190 = vmatprep.mubr.bf16.mxu0 %v279
    %1191 = vmatmul.mubr.bf16.gmra.mrb[0].mxu0 %v278
    %v1192 = vpop.f32.mrb[0].mxu0
    %v1193 = vadd.f32 %v423, %v1192
    %v1194 = vpop.f32.mrb[0].mxu0
    %v1195 = vadd.f32 %v427, %v1194
    %v1196 = vpop.f32.mrb[0].mxu0
    %v1197 = vadd.f32 %v423, %v1196
    %v1198 = vpop.f32.mrb[0].mxu0
    %v1199 = vadd.f32 %v427, %v1198
    %1200 = vdwg.mxu0
    %1201 = vmatprep.subr.bf16.mxu0 %v883
    %1202 = vmatpush1.bf16.msra.mxu0 %v882
    %1203 = vmatprep.subr.bf16.mxu0 %v887
    %1204 = vmatpush1.bf16.msra.mxu0 %v886
    %1205 = vmatprep.subr.bf16.mxu0 %v891
    %1206 = vmatpush1.bf16.msra.mxu0 %v890
    %1207 = vmatprep.subr.bf16.mxu0 %v895
    %1208 = vmatpush1.bf16.msra.mxu0 %v894
    %1209 = vmatprep.subr.bf16.mxu0 %v899
    %1210 = vmatpush1.bf16.msra.mxu0 %v898
    %1211 = vmatprep.subr.bf16.mxu0 %v903
    %1212 = vmatpush1.bf16.msra.mxu0 %v902
    %1213 = vmatprep.subr.bf16.mxu0 %v907
    %1214 = vmatpush1.bf16.msra.mxu0 %v906
    %1215 = vmatprep.subr.bf16.mxu0 %v911
    %1216 = vmatpush1.bf16.msra.mxu0 %v910
    %1217 = vmatprep.subr.bf16.mxu0 %v915
    %1218 = vmatpush1.bf16.msra.mxu0 %v914
    %1219 = vmatprep.subr.bf16.mxu0 %v919
    %1220 = vmatpush1.bf16.msra.mxu0 %v918
    %1221 = vmatprep.subr.bf16.mxu0 %v923
    %1222 = vmatpush1.bf16.msra.mxu0 %v922
    %1223 = vmatprep.subr.bf16.mxu0 %v927
    %1224 = vmatpush1.bf16.msra.mxu0 %v926
    %1225 = vmatprep.subr.bf16.mxu0 %v931
    %1226 = vmatpush1.bf16.msra.mxu0 %v930
    %1227 = vmatprep.subr.bf16.mxu0 %v935
    %1228 = vmatpush1.bf16.msra.mxu0 %v934
    %1229 = vmatprep.subr.bf16.mxu0 %v939
    %1230 = vmatpush1.bf16.msra.mxu0 %v938
    %1231 = vmatprep.subr.bf16.mxu0 %v943
    %1232 = vmatpush1.bf16.msra.mxu0 %v942
    %1233 = vmatprep.mubr.bf16.mxu0 %v281
    %1234 = vmatmul.mubr.bf16.gmra.mrb[0].mxu0 %v280
    %v1235 = vpop.f32.mrb[0].mxu0
    %v1236 = vadd.f32 %v1193, %v1235
    %v1237 = vpop.f32.mrb[0].mxu0
    %v1238 = vadd.f32 %v1195, %v1237
    %v1239 = vpop.f32.mrb[0].mxu0
    %v1240 = vadd.f32 %v1197, %v1239
    %v1241 = vpop.f32.mrb[0].mxu0
    %v1242 = vadd.f32 %v1199, %v1241
    %1243 = vdwg.mxu0
    %v1244 = vmax.f32 %v1150, 0.0
    %v1245 = vmax.f32 %v1152, 0.0
    %v1246 = vmax.f32 %v1236, 0.0
    %v1247 = vmax.f32 %v1238, 0.0
    %v1248 = vmax.f32 %v1154, 0.0
    %v1249 = vmax.f32 %v1156, 0.0
    %v1250 = vmax.f32 %v1240, 0.0
    %v1251 = vmax.f32 %v1242, 0.0
    %v1252 = vpack.c.bf16 %v1248, %v1244
    %v1253 = vpack.c.bf16 %v1249, %v1245
    %v1254 = vpack.c.bf16 %v1250, %v1246
    %v1255 = vpack.c.bf16 %v1251, %v1247
    %v1256 = vld [vmem:[#allocation6] sm:$0xff]
    %v1257 = vld [vmem:[#allocation6 + $0x8] sm:$0xff]
    %v1258 = vld [vmem:[#allocation6 + $0x10] sm:$0xff]
    %v1259 = vld [vmem:[#allocation6 + $0x18] sm:$0xff]
    %v1260 = vld [vmem:[#allocation6 + $0x20] sm:$0xff]
    %v1261 = vld [vmem:[#allocation6 + $0x28] sm:$0xff]
    %v1262 = vld [vmem:[#allocation6 + $0x30] sm:$0xff]
    %v1263 = vld [vmem:[#allocation6 + $0x38] sm:$0xff]
    %v1264 = vld [vmem:[#allocation6 + $0x40] sm:$0xff]
    %v1265 = vld [vmem:[#allocation6 + $0x48] sm:$0xff]
    %v1266 = vld [vmem:[#allocation6 + $0x50] sm:$0xff]
    %v1267 = vld [vmem:[#allocation6 + $0x58] sm:$0xff]
    %v1268 = vld [vmem:[#allocation6 + $0x60] sm:$0xff]
    %v1269 = vld [vmem:[#allocation6 + $0x68] sm:$0xff]
    %v1270 = vld [vmem:[#allocation6 + $0x70] sm:$0xff]
    %v1271 = vld [vmem:[#allocation6 + $0x78] sm:$0xff]
    %v1272 = vld [vmem:[#allocation6 + $0x80] sm:$0xff]
    %v1273 = vld [vmem:[#allocation6 + $0x88] sm:$0xff]
    %v1274 = vld [vmem:[#allocation6 + $0x90] sm:$0xff]
    %v1275 = vld [vmem:[#allocation6 + $0x98] sm:$0xff]
    %v1276 = vld [vmem:[#allocation6 + $0xa0] sm:$0xff]
    %v1277 = vld [vmem:[#allocation6 + $0xa8] sm:$0xff]
    %v1278 = vld [vmem:[#allocation6 + $0xb0] sm:$0xff]
    %v1279 = vld [vmem:[#allocation6 + $0xb8] sm:$0xff]
    %v1280 = vld [vmem:[#allocation6 + $0xc0] sm:$0xff]
    %v1281 = vld [vmem:[#allocation6 + $0xc8] sm:$0xff]
    %v1282 = vld [vmem:[#allocation6 + $0xd0] sm:$0xff]
    %v1283 = vld [vmem:[#allocation6 + $0xd8] sm:$0xff]
    %v1284 = vld [vmem:[#allocation6 + $0xe0] sm:$0xff]
    %v1285 = vld [vmem:[#allocation6 + $0xe8] sm:$0xff]
    %v1286 = vld [vmem:[#allocation6 + $0xf0] sm:$0xff]
    %v1287 = vld [vmem:[#allocation6 + $0xf8] sm:$0xff]
    %v1288 = vld [vmem:[#allocation6 + $0x100] sm:$0xff]
    %v1289 = vld [vmem:[#allocation6 + $0x108] sm:$0xff]
    %v1290 = vld [vmem:[#allocation6 + $0x110] sm:$0xff]
    %v1291 = vld [vmem:[#allocation6 + $0x118] sm:$0xff]
    %v1292 = vld [vmem:[#allocation6 + $0x120] sm:$0xff]
    %v1293 = vld [vmem:[#allocation6 + $0x128] sm:$0xff]
    %v1294 = vld [vmem:[#allocation6 + $0x130] sm:$0xff]
    %v1295 = vld [vmem:[#allocation6 + $0x138] sm:$0xff]
    %v1296 = vld [vmem:[#allocation6 + $0x140] sm:$0xff]
    %v1297 = vld [vmem:[#allocation6 + $0x148] sm:$0xff]
    %v1298 = vld [vmem:[#allocation6 + $0x150] sm:$0xff]
    %v1299 = vld [vmem:[#allocation6 + $0x158] sm:$0xff]
    %v1300 = vld [vmem:[#allocation6 + $0x160] sm:$0xff]
    %v1301 = vld [vmem:[#allocation6 + $0x168] sm:$0xff]
    %v1302 = vld [vmem:[#allocation6 + $0x170] sm:$0xff]
    %v1303 = vld [vmem:[#allocation6 + $0x178] sm:$0xff]
    %v1304 = vld [vmem:[#allocation6 + $0x180] sm:$0xff]
    %v1305 = vld [vmem:[#allocation6 + $0x188] sm:$0xff]
    %v1306 = vld [vmem:[#allocation6 + $0x190] sm:$0xff]
    %v1307 = vld [vmem:[#allocation6 + $0x198] sm:$0xff]
    %v1308 = vld [vmem:[#allocation6 + $0x1a0] sm:$0xff]
    %v1309 = vld [vmem:[#allocation6 + $0x1a8] sm:$0xff]
    %v1310 = vld [vmem:[#allocation6 + $0x1b0] sm:$0xff]
    %v1311 = vld [vmem:[#allocation6 + $0x1b8] sm:$0xff]
    %v1312 = vld [vmem:[#allocation6 + $0x1c0] sm:$0xff]
    %v1313 = vld [vmem:[#allocation6 + $0x1c8] sm:$0xff]
    %v1314 = vld [vmem:[#allocation6 + $0x1d0] sm:$0xff]
    %v1315 = vld [vmem:[#allocation6 + $0x1d8] sm:$0xff]
    %v1316 = vld [vmem:[#allocation6 + $0x1e0] sm:$0xff]
    %v1317 = vld [vmem:[#allocation6 + $0x1e8] sm:$0xff]
    %v1318 = vld [vmem:[#allocation6 + $0x1f0] sm:$0xff]
    %v1319 = vld [vmem:[#allocation6 + $0x1f8] sm:$0xff]
    %v1320 = vld [vmem:[#allocation6 + $0x200] sm:$0xff]
    %v1321 = vld [vmem:[#allocation6 + $0x208] sm:$0xff]
    %v1322 = vld [vmem:[#allocation6 + $0x210] sm:$0xff]
    %v1323 = vld [vmem:[#allocation6 + $0x218] sm:$0xff]
    %v1324 = vld [vmem:[#allocation6 + $0x220] sm:$0xff]
    %v1325 = vld [vmem:[#allocation6 + $0x228] sm:$0xff]
    %v1326 = vld [vmem:[#allocation6 + $0x230] sm:$0xff]
    %v1327 = vld [vmem:[#allocation6 + $0x238] sm:$0xff]
    %v1328 = vld [vmem:[#allocation6 + $0x240] sm:$0xff]
    %v1329 = vld [vmem:[#allocation6 + $0x248] sm:$0xff]
    %v1330 = vld [vmem:[#allocation6 + $0x250] sm:$0xff]
    %v1331 = vld [vmem:[#allocation6 + $0x258] sm:$0xff]
    %v1332 = vld [vmem:[#allocation6 + $0x260] sm:$0xff]
    %v1333 = vld [vmem:[#allocation6 + $0x268] sm:$0xff]
    %v1334 = vld [vmem:[#allocation6 + $0x270] sm:$0xff]
    %v1335 = vld [vmem:[#allocation6 + $0x278] sm:$0xff]
    %v1336 = vld [vmem:[#allocation6 + $0x280] sm:$0xff]
    %v1337 = vld [vmem:[#allocation6 + $0x288] sm:$0xff]
    %v1338 = vld [vmem:[#allocation6 + $0x290] sm:$0xff]
    %v1339 = vld [vmem:[#allocation6 + $0x298] sm:$0xff]
    %v1340 = vld [vmem:[#allocation6 + $0x2a0] sm:$0xff]
    %v1341 = vld [vmem:[#allocation6 + $0x2a8] sm:$0xff]
    %v1342 = vld [vmem:[#allocation6 + $0x2b0] sm:$0xff]
    %v1343 = vld [vmem:[#allocation6 + $0x2b8] sm:$0xff]
    %v1344 = vld [vmem:[#allocation6 + $0x2c0] sm:$0xff]
    %v1345 = vld [vmem:[#allocation6 + $0x2c8] sm:$0xff]
    %v1346 = vld [vmem:[#allocation6 + $0x2d0] sm:$0xff]
    %v1347 = vld [vmem:[#allocation6 + $0x2d8] sm:$0xff]
    %v1348 = vld [vmem:[#allocation6 + $0x2e0] sm:$0xff]
    %v1349 = vld [vmem:[#allocation6 + $0x2e8] sm:$0xff]
    %v1350 = vld [vmem:[#allocation6 + $0x2f0] sm:$0xff]
    %v1351 = vld [vmem:[#allocation6 + $0x2f8] sm:$0xff]
    %v1352 = vld [vmem:[#allocation6 + $0x300] sm:$0xff]
    %v1353 = vld [vmem:[#allocation6 + $0x308] sm:$0xff]
    %v1354 = vld [vmem:[#allocation6 + $0x310] sm:$0xff]
    %v1355 = vld [vmem:[#allocation6 + $0x318] sm:$0xff]
    %v1356 = vld [vmem:[#allocation6 + $0x320] sm:$0xff]
    %v1357 = vld [vmem:[#allocation6 + $0x328] sm:$0xff]
    %v1358 = vld [vmem:[#allocation6 + $0x330] sm:$0xff]
    %v1359 = vld [vmem:[#allocation6 + $0x338] sm:$0xff]
    %v1360 = vld [vmem:[#allocation6 + $0x340] sm:$0xff]
    %v1361 = vld [vmem:[#allocation6 + $0x348] sm:$0xff]
    %v1362 = vld [vmem:[#allocation6 + $0x350] sm:$0xff]
    %v1363 = vld [vmem:[#allocation6 + $0x358] sm:$0xff]
    %v1364 = vld [vmem:[#allocation6 + $0x360] sm:$0xff]
    %v1365 = vld [vmem:[#allocation6 + $0x368] sm:$0xff]
    %v1366 = vld [vmem:[#allocation6 + $0x370] sm:$0xff]
    %v1367 = vld [vmem:[#allocation6 + $0x378] sm:$0xff]
    %v1368 = vld [vmem:[#allocation6 + $0x380] sm:$0xff]
    %v1369 = vld [vmem:[#allocation6 + $0x388] sm:$0xff]
    %v1370 = vld [vmem:[#allocation6 + $0x390] sm:$0xff]
    %v1371 = vld [vmem:[#allocation6 + $0x398] sm:$0xff]
    %v1372 = vld [vmem:[#allocation6 + $0x3a0] sm:$0xff]
    %v1373 = vld [vmem:[#allocation6 + $0x3a8] sm:$0xff]
    %v1374 = vld [vmem:[#allocation6 + $0x3b0] sm:$0xff]
    %v1375 = vld [vmem:[#allocation6 + $0x3b8] sm:$0xff]
    %v1376 = vld [vmem:[#allocation6 + $0x3c0] sm:$0xff]
    %v1377 = vld [vmem:[#allocation6 + $0x3c8] sm:$0xff]
    %v1378 = vld [vmem:[#allocation6 + $0x3d0] sm:$0xff]
    %v1379 = vld [vmem:[#allocation6 + $0x3d8] sm:$0xff]
    %v1380 = vld [vmem:[#allocation6 + $0x3e0] sm:$0xff]
    %v1381 = vld [vmem:[#allocation6 + $0x3e8] sm:$0xff]
    %v1382 = vld [vmem:[#allocation6 + $0x3f0] sm:$0xff]
    %v1383 = vld [vmem:[#allocation6 + $0x3f8] sm:$0xff]
    %v1384 = vld [vmem:[%s6] sm:$0xf]
    %v1386 = vlaneseq
    %v1387 = vshrl.u32 %v1386, 7
    %v1388 = vsub.s32 0, %v1387
    %v1389 = vrot.slane %v1384, %v1388
    %v1390 = vlaneseq
    %v1391 = vshrl.u32 %v1390, 7
    %v1392 = vsub.s32 1, %v1391
    %v1393 = vrot.slane %v1384, %v1392
    %v1394 = vlaneseq
    %v1395 = vshrl.u32 %v1394, 7
    %v1396 = vsub.s32 2, %v1395
    %v1397 = vrot.slane %v1384, %v1396
    %v1398 = vlaneseq
    %v1399 = vshrl.u32 %v1398, 7
    %v1400 = vsub.s32 3, %v1399
    %v1401 = vrot.slane %v1384, %v1400
    %v1534 = vunpack.c.l.b16 %v1256
    %v1535 = vunpack.c.h.b16 %v1256
    %v1536 = vunpack.c.l.b16 %v1257
    %v1537 = vunpack.c.h.b16 %v1257
    %v1538 = vunpack.c.l.b16 %v1258
    %v1539 = vunpack.c.h.b16 %v1258
    %v1540 = vunpack.c.l.b16 %v1259
    %v1541 = vunpack.c.h.b16 %v1259
    %v1542 = vunpack.c.l.b16 %v1260
    %v1543 = vunpack.c.h.b16 %v1260
    %v1544 = vunpack.c.l.b16 %v1261
    %v1545 = vunpack.c.h.b16 %v1261
    %v1546 = vunpack.c.l.b16 %v1262
    %v1547 = vunpack.c.h.b16 %v1262
    %v1548 = vunpack.c.l.b16 %v1263
    %v1549 = vunpack.c.h.b16 %v1263
    %v1550 = vunpack.c.l.b16 %v1264
    %v1551 = vunpack.c.h.b16 %v1264
    %v1552 = vunpack.c.l.b16 %v1265
    %v1553 = vunpack.c.h.b16 %v1265
    %v1554 = vunpack.c.l.b16 %v1266
    %v1555 = vunpack.c.h.b16 %v1266
    %v1556 = vunpack.c.l.b16 %v1267
    %v1557 = vunpack.c.h.b16 %v1267
    %v1558 = vunpack.c.l.b16 %v1268
    %v1559 = vunpack.c.h.b16 %v1268
    %v1560 = vunpack.c.l.b16 %v1269
    %v1561 = vunpack.c.h.b16 %v1269
    %v1562 = vunpack.c.l.b16 %v1270
    %v1563 = vunpack.c.h.b16 %v1270
    %v1564 = vunpack.c.l.b16 %v1271
    %v1565 = vunpack.c.h.b16 %v1271
    %v1566 = vunpack.c.l.b16 %v1272
    %v1567 = vunpack.c.h.b16 %v1272
    %v1568 = vunpack.c.l.b16 %v1273
    %v1569 = vunpack.c.h.b16 %v1273
    %v1570 = vunpack.c.l.b16 %v1274
    %v1571 = vunpack.c.h.b16 %v1274
    %v1572 = vunpack.c.l.b16 %v1275
    %v1573 = vunpack.c.h.b16 %v1275
    %v1574 = vunpack.c.l.b16 %v1276
    %v1575 = vunpack.c.h.b16 %v1276
    %v1576 = vunpack.c.l.b16 %v1277
    %v1577 = vunpack.c.h.b16 %v1277
    %v1578 = vunpack.c.l.b16 %v1278
    %v1579 = vunpack.c.h.b16 %v1278
    %v1580 = vunpack.c.l.b16 %v1279
    %v1581 = vunpack.c.h.b16 %v1279
    %v1582 = vunpack.c.l.b16 %v1280
    %v1583 = vunpack.c.h.b16 %v1280
    %v1584 = vunpack.c.l.b16 %v1281
    %v1585 = vunpack.c.h.b16 %v1281
    %v1586 = vunpack.c.l.b16 %v1282
    %v1587 = vunpack.c.h.b16 %v1282
    %v1588 = vunpack.c.l.b16 %v1283
    %v1589 = vunpack.c.h.b16 %v1283
    %v1590 = vunpack.c.l.b16 %v1284
    %v1591 = vunpack.c.h.b16 %v1284
    %v1592 = vunpack.c.l.b16 %v1285
    %v1593 = vunpack.c.h.b16 %v1285
    %v1594 = vunpack.c.l.b16 %v1286
    %v1595 = vunpack.c.h.b16 %v1286
    %v1596 = vunpack.c.l.b16 %v1287
    %v1597 = vunpack.c.h.b16 %v1287
    %v1598 = vunpack.c.l.b16 %v1288
    %v1599 = vunpack.c.h.b16 %v1288
    %v1600 = vunpack.c.l.b16 %v1289
    %v1601 = vunpack.c.h.b16 %v1289
    %v1602 = vunpack.c.l.b16 %v1290
    %v1603 = vunpack.c.h.b16 %v1290
    %v1604 = vunpack.c.l.b16 %v1291
    %v1605 = vunpack.c.h.b16 %v1291
    %v1606 = vunpack.c.l.b16 %v1292
    %v1607 = vunpack.c.h.b16 %v1292
    %v1608 = vunpack.c.l.b16 %v1293
    %v1609 = vunpack.c.h.b16 %v1293
    %v1610 = vunpack.c.l.b16 %v1294
    %v1611 = vunpack.c.h.b16 %v1294
    %v1612 = vunpack.c.l.b16 %v1295
    %v1613 = vunpack.c.h.b16 %v1295
    %v1614 = vunpack.c.l.b16 %v1296
    %v1615 = vunpack.c.h.b16 %v1296
    %v1616 = vunpack.c.l.b16 %v1297
    %v1617 = vunpack.c.h.b16 %v1297
    %v1618 = vunpack.c.l.b16 %v1298
    %v1619 = vunpack.c.h.b16 %v1298
    %v1620 = vunpack.c.l.b16 %v1299
    %v1621 = vunpack.c.h.b16 %v1299
    %v1622 = vunpack.c.l.b16 %v1300
    %v1623 = vunpack.c.h.b16 %v1300
    %v1624 = vunpack.c.l.b16 %v1301
    %v1625 = vunpack.c.h.b16 %v1301
    %v1626 = vunpack.c.l.b16 %v1302
    %v1627 = vunpack.c.h.b16 %v1302
    %v1628 = vunpack.c.l.b16 %v1303
    %v1629 = vunpack.c.h.b16 %v1303
    %v1630 = vunpack.c.l.b16 %v1304
    %v1631 = vunpack.c.h.b16 %v1304
    %v1632 = vunpack.c.l.b16 %v1305
    %v1633 = vunpack.c.h.b16 %v1305
    %v1634 = vunpack.c.l.b16 %v1306
    %v1635 = vunpack.c.h.b16 %v1306
    %v1636 = vunpack.c.l.b16 %v1307
    %v1637 = vunpack.c.h.b16 %v1307
    %v1638 = vunpack.c.l.b16 %v1308
    %v1639 = vunpack.c.h.b16 %v1308
    %v1640 = vunpack.c.l.b16 %v1309
    %v1641 = vunpack.c.h.b16 %v1309
    %v1642 = vunpack.c.l.b16 %v1310
    %v1643 = vunpack.c.h.b16 %v1310
    %v1644 = vunpack.c.l.b16 %v1311
    %v1645 = vunpack.c.h.b16 %v1311
    %v1646 = vunpack.c.l.b16 %v1312
    %v1647 = vunpack.c.h.b16 %v1312
    %v1648 = vunpack.c.l.b16 %v1313
    %v1649 = vunpack.c.h.b16 %v1313
    %v1650 = vunpack.c.l.b16 %v1314
    %v1651 = vunpack.c.h.b16 %v1314
    %v1652 = vunpack.c.l.b16 %v1315
    %v1653 = vunpack.c.h.b16 %v1315
    %v1654 = vunpack.c.l.b16 %v1316
    %v1655 = vunpack.c.h.b16 %v1316
    %v1656 = vunpack.c.l.b16 %v1317
    %v1657 = vunpack.c.h.b16 %v1317
    %v1658 = vunpack.c.l.b16 %v1318
    %v1659 = vunpack.c.h.b16 %v1318
    %v1660 = vunpack.c.l.b16 %v1319
    %v1661 = vunpack.c.h.b16 %v1319
    %v1662 = vunpack.c.l.b16 %v1320
    %v1663 = vunpack.c.h.b16 %v1320
    %v1664 = vunpack.c.l.b16 %v1321
    %v1665 = vunpack.c.h.b16 %v1321
    %v1666 = vunpack.c.l.b16 %v1322
    %v1667 = vunpack.c.h.b16 %v1322
    %v1668 = vunpack.c.l.b16 %v1323
    %v1669 = vunpack.c.h.b16 %v1323
    %v1670 = vunpack.c.l.b16 %v1324
    %v1671 = vunpack.c.h.b16 %v1324
    %v1672 = vunpack.c.l.b16 %v1325
    %v1673 = vunpack.c.h.b16 %v1325
    %v1674 = vunpack.c.l.b16 %v1326
    %v1675 = vunpack.c.h.b16 %v1326
    %v1676 = vunpack.c.l.b16 %v1327
    %v1677 = vunpack.c.h.b16 %v1327
    %v1678 = vunpack.c.l.b16 %v1328
    %v1679 = vunpack.c.h.b16 %v1328
    %v1680 = vunpack.c.l.b16 %v1329
    %v1681 = vunpack.c.h.b16 %v1329
    %v1682 = vunpack.c.l.b16 %v1330
    %v1683 = vunpack.c.h.b16 %v1330
    %v1684 = vunpack.c.l.b16 %v1331
    %v1685 = vunpack.c.h.b16 %v1331
    %v1686 = vunpack.c.l.b16 %v1332
    %v1687 = vunpack.c.h.b16 %v1332
    %v1688 = vunpack.c.l.b16 %v1333
    %v1689 = vunpack.c.h.b16 %v1333
    %v1690 = vunpack.c.l.b16 %v1334
    %v1691 = vunpack.c.h.b16 %v1334
    %v1692 = vunpack.c.l.b16 %v1335
    %v1693 = vunpack.c.h.b16 %v1335
    %v1694 = vunpack.c.l.b16 %v1336
    %v1695 = vunpack.c.h.b16 %v1336
    %v1696 = vunpack.c.l.b16 %v1337
    %v1697 = vunpack.c.h.b16 %v1337
    %v1698 = vunpack.c.l.b16 %v1338
    %v1699 = vunpack.c.h.b16 %v1338
    %v1700 = vunpack.c.l.b16 %v1339
    %v1701 = vunpack.c.h.b16 %v1339
    %v1702 = vunpack.c.l.b16 %v1340
    %v1703 = vunpack.c.h.b16 %v1340
    %v1704 = vunpack.c.l.b16 %v1341
    %v1705 = vunpack.c.h.b16 %v1341
    %v1706 = vunpack.c.l.b16 %v1342
    %v1707 = vunpack.c.h.b16 %v1342
    %v1708 = vunpack.c.l.b16 %v1343
    %v1709 = vunpack.c.h.b16 %v1343
    %v1710 = vunpack.c.l.b16 %v1344
    %v1711 = vunpack.c.h.b16 %v1344
    %v1712 = vunpack.c.l.b16 %v1345
    %v1713 = vunpack.c.h.b16 %v1345
    %v1714 = vunpack.c.l.b16 %v1346
    %v1715 = vunpack.c.h.b16 %v1346
    %v1716 = vunpack.c.l.b16 %v1347
    %v1717 = vunpack.c.h.b16 %v1347
    %v1718 = vunpack.c.l.b16 %v1348
    %v1719 = vunpack.c.h.b16 %v1348
    %v1720 = vunpack.c.l.b16 %v1349
    %v1721 = vunpack.c.h.b16 %v1349
    %v1722 = vunpack.c.l.b16 %v1350
    %v1723 = vunpack.c.h.b16 %v1350
    %v1724 = vunpack.c.l.b16 %v1351
    %v1725 = vunpack.c.h.b16 %v1351
    %v1726 = vunpack.c.l.b16 %v1352
    %v1727 = vunpack.c.h.b16 %v1352
    %v1728 = vunpack.c.l.b16 %v1353
    %v1729 = vunpack.c.h.b16 %v1353
    %v1730 = vunpack.c.l.b16 %v1354
    %v1731 = vunpack.c.h.b16 %v1354
    %v1732 = vunpack.c.l.b16 %v1355
    %v1733 = vunpack.c.h.b16 %v1355
    %v1734 = vunpack.c.l.b16 %v1356
    %v1735 = vunpack.c.h.b16 %v1356
    %v1736 = vunpack.c.l.b16 %v1357
    %v1737 = vunpack.c.h.b16 %v1357
    %v1738 = vunpack.c.l.b16 %v1358
    %v1739 = vunpack.c.h.b16 %v1358
    %v1740 = vunpack.c.l.b16 %v1359
    %v1741 = vunpack.c.h.b16 %v1359
    %v1742 = vunpack.c.l.b16 %v1360
    %v1743 = vunpack.c.h.b16 %v1360
    %v1744 = vunpack.c.l.b16 %v1361
    %v1745 = vunpack.c.h.b16 %v1361
    %v1746 = vunpack.c.l.b16 %v1362
    %v1747 = vunpack.c.h.b16 %v1362
    %v1748 = vunpack.c.l.b16 %v1363
    %v1749 = vunpack.c.h.b16 %v1363
    %v1750 = vunpack.c.l.b16 %v1364
    %v1751 = vunpack.c.h.b16 %v1364
    %v1752 = vunpack.c.l.b16 %v1365
    %v1753 = vunpack.c.h.b16 %v1365
    %v1754 = vunpack.c.l.b16 %v1366
    %v1755 = vunpack.c.h.b16 %v1366
    %v1756 = vunpack.c.l.b16 %v1367
    %v1757 = vunpack.c.h.b16 %v1367
    %v1758 = vunpack.c.l.b16 %v1368
    %v1759 = vunpack.c.h.b16 %v1368
    %v1760 = vunpack.c.l.b16 %v1369
    %v1761 = vunpack.c.h.b16 %v1369
    %v1762 = vunpack.c.l.b16 %v1370
    %v1763 = vunpack.c.h.b16 %v1370
    %v1764 = vunpack.c.l.b16 %v1371
    %v1765 = vunpack.c.h.b16 %v1371
    %v1766 = vunpack.c.l.b16 %v1372
    %v1767 = vunpack.c.h.b16 %v1372
    %v1768 = vunpack.c.l.b16 %v1373
    %v1769 = vunpack.c.h.b16 %v1373
    %v1770 = vunpack.c.l.b16 %v1374
    %v1771 = vunpack.c.h.b16 %v1374
    %v1772 = vunpack.c.l.b16 %v1375
    %v1773 = vunpack.c.h.b16 %v1375
    %v1774 = vunpack.c.l.b16 %v1376
    %v1775 = vunpack.c.h.b16 %v1376
    %v1776 = vunpack.c.l.b16 %v1377
    %v1777 = vunpack.c.h.b16 %v1377
    %v1778 = vunpack.c.l.b16 %v1378
    %v1779 = vunpack.c.h.b16 %v1378
    %v1780 = vunpack.c.l.b16 %v1379
    %v1781 = vunpack.c.h.b16 %v1379
    %v1782 = vunpack.c.l.b16 %v1380
    %v1783 = vunpack.c.h.b16 %v1380
    %v1784 = vunpack.c.l.b16 %v1381
    %v1785 = vunpack.c.h.b16 %v1381
    %v1786 = vunpack.c.l.b16 %v1382
    %v1787 = vunpack.c.h.b16 %v1382
    %v1788 = vunpack.c.l.b16 %v1383
    %v1789 = vunpack.c.h.b16 %v1383
    %v1790 = vpack.c.b16 %v1538, %v1534
    %v1791 = vpack.c.b16 %v1539, %v1535
    %v1792 = vpack.c.b16 %v1540, %v1536
    %v1793 = vpack.c.b16 %v1541, %v1537
    %v1794 = vpack.c.b16 %v1546, %v1542
    %v1795 = vpack.c.b16 %v1547, %v1543
    %v1796 = vpack.c.b16 %v1548, %v1544
    %v1797 = vpack.c.b16 %v1549, %v1545
    %v1798 = vpack.c.b16 %v1554, %v1550
    %v1799 = vpack.c.b16 %v1555, %v1551
    %v1800 = vpack.c.b16 %v1556, %v1552
    %v1801 = vpack.c.b16 %v1557, %v1553
    %v1802 = vpack.c.b16 %v1562, %v1558
    %v1803 = vpack.c.b16 %v1563, %v1559
    %v1804 = vpack.c.b16 %v1564, %v1560
    %v1805 = vpack.c.b16 %v1565, %v1561
    %v1806 = vpack.c.b16 %v1570, %v1566
    %v1807 = vpack.c.b16 %v1571, %v1567
    %v1808 = vpack.c.b16 %v1572, %v1568
    %v1809 = vpack.c.b16 %v1573, %v1569
    %v1810 = vpack.c.b16 %v1578, %v1574
    %v1811 = vpack.c.b16 %v1579, %v1575
    %v1812 = vpack.c.b16 %v1580, %v1576
    %v1813 = vpack.c.b16 %v1581, %v1577
    %v1814 = vpack.c.b16 %v1586, %v1582
    %v1815 = vpack.c.b16 %v1587, %v1583
    %v1816 = vpack.c.b16 %v1588, %v1584
    %v1817 = vpack.c.b16 %v1589, %v1585
    %v1818 = vpack.c.b16 %v1594, %v1590
    %v1819 = vpack.c.b16 %v1595, %v1591
    %v1820 = vpack.c.b16 %v1596, %v1592
    %v1821 = vpack.c.b16 %v1597, %v1593
    %v1822 = vpack.c.b16 %v1602, %v1598
    %v1823 = vpack.c.b16 %v1603, %v1599
    %v1824 = vpack.c.b16 %v1604, %v1600
    %v1825 = vpack.c.b16 %v1605, %v1601
    %v1826 = vpack.c.b16 %v1610, %v1606
    %v1827 = vpack.c.b16 %v1611, %v1607
    %v1828 = vpack.c.b16 %v1612, %v1608
    %v1829 = vpack.c.b16 %v1613, %v1609
    %v1830 = vpack.c.b16 %v1618, %v1614
    %v1831 = vpack.c.b16 %v1619, %v1615
    %v1832 = vpack.c.b16 %v1620, %v1616
    %v1833 = vpack.c.b16 %v1621, %v1617
    %v1834 = vpack.c.b16 %v1626, %v1622
    %v1835 = vpack.c.b16 %v1627, %v1623
    %v1836 = vpack.c.b16 %v1628, %v1624
    %v1837 = vpack.c.b16 %v1629, %v1625
    %v1838 = vpack.c.b16 %v1634, %v1630
    %v1839 = vpack.c.b16 %v1635, %v1631
    %v1840 = vpack.c.b16 %v1636, %v1632
    %v1841 = vpack.c.b16 %v1637, %v1633
    %v1842 = vpack.c.b16 %v1642, %v1638
    %v1843 = vpack.c.b16 %v1643, %v1639
    %v1844 = vpack.c.b16 %v1644, %v1640
    %v1845 = vpack.c.b16 %v1645, %v1641
    %v1846 = vpack.c.b16 %v1650, %v1646
    %v1847 = vpack.c.b16 %v1651, %v1647
    %v1848 = vpack.c.b16 %v1652, %v1648
    %v1849 = vpack.c.b16 %v1653, %v1649
    %v1850 = vpack.c.b16 %v1658, %v1654
    %v1851 = vpack.c.b16 %v1659, %v1655
    %v1852 = vpack.c.b16 %v1660, %v1656
    %v1853 = vpack.c.b16 %v1661, %v1657
    %v1854 = vpack.c.b16 %v1666, %v1662
    %v1855 = vpack.c.b16 %v1667, %v1663
    %v1856 = vpack.c.b16 %v1668, %v1664
    %v1857 = vpack.c.b16 %v1669, %v1665
    %v1858 = vpack.c.b16 %v1674, %v1670
    %v1859 = vpack.c.b16 %v1675, %v1671
    %v1860 = vpack.c.b16 %v1676, %v1672
    %v1861 = vpack.c.b16 %v1677, %v1673
    %v1862 = vpack.c.b16 %v1682, %v1678
    %v1863 = vpack.c.b16 %v1683, %v1679
    %v1864 = vpack.c.b16 %v1684, %v1680
    %v1865 = vpack.c.b16 %v1685, %v1681
    %v1866 = vpack.c.b16 %v1690, %v1686
    %v1867 = vpack.c.b16 %v1691, %v1687
    %v1868 = vpack.c.b16 %v1692, %v1688
    %v1869 = vpack.c.b16 %v1693, %v1689
    %v1870 = vpack.c.b16 %v1698, %v1694
    %v1871 = vpack.c.b16 %v1699, %v1695
    %v1872 = vpack.c.b16 %v1700, %v1696
    %v1873 = vpack.c.b16 %v1701, %v1697
    %v1874 = vpack.c.b16 %v1706, %v1702
    %v1875 = vpack.c.b16 %v1707, %v1703
    %v1876 = vpack.c.b16 %v1708, %v1704
    %v1877 = vpack.c.b16 %v1709, %v1705
    %v1878 = vpack.c.b16 %v1714, %v1710
    %v1879 = vpack.c.b16 %v1715, %v1711
    %v1880 = vpack.c.b16 %v1716, %v1712
    %v1881 = vpack.c.b16 %v1717, %v1713
    %v1882 = vpack.c.b16 %v1722, %v1718
    %v1883 = vpack.c.b16 %v1723, %v1719
    %v1884 = vpack.c.b16 %v1724, %v1720
    %v1885 = vpack.c.b16 %v1725, %v1721
    %v1886 = vpack.c.b16 %v1730, %v1726
    %v1887 = vpack.c.b16 %v1731, %v1727
    %v1888 = vpack.c.b16 %v1732, %v1728
    %v1889 = vpack.c.b16 %v1733, %v1729
    %v1890 = vpack.c.b16 %v1738, %v1734
    %v1891 = vpack.c.b16 %v1739, %v1735
    %v1892 = vpack.c.b16 %v1740, %v1736
    %v1893 = vpack.c.b16 %v1741, %v1737
    %v1894 = vpack.c.b16 %v1746, %v1742
    %v1895 = vpack.c.b16 %v1747, %v1743
    %v1896 = vpack.c.b16 %v1748, %v1744
    %v1897 = vpack.c.b16 %v1749, %v1745
    %v1898 = vpack.c.b16 %v1754, %v1750
    %v1899 = vpack.c.b16 %v1755, %v1751
    %v1900 = vpack.c.b16 %v1756, %v1752
    %v1901 = vpack.c.b16 %v1757, %v1753
    %v1902 = vpack.c.b16 %v1762, %v1758
    %v1903 = vpack.c.b16 %v1763, %v1759
    %v1904 = vpack.c.b16 %v1764, %v1760
    %v1905 = vpack.c.b16 %v1765, %v1761
    %v1906 = vpack.c.b16 %v1770, %v1766
    %v1907 = vpack.c.b16 %v1771, %v1767
    %v1908 = vpack.c.b16 %v1772, %v1768
    %v1909 = vpack.c.b16 %v1773, %v1769
    %v1910 = vpack.c.b16 %v1778, %v1774
    %v1911 = vpack.c.b16 %v1779, %v1775
    %v1912 = vpack.c.b16 %v1780, %v1776
    %v1913 = vpack.c.b16 %v1781, %v1777
    %v1914 = vpack.c.b16 %v1786, %v1782
    %v1915 = vpack.c.b16 %v1787, %v1783
    %v1916 = vpack.c.b16 %v1788, %v1784
    %v1917 = vpack.c.b16 %v1789, %v1785
    %2046 = vmatprep.subr.bf16.mxu0 %v1791
    %2047 = vmatpush1.bf16.msra.mxu0 %v1790
    %2048 = vmatprep.subr.bf16.mxu0 %v1795
    %2049 = vmatpush1.bf16.msra.mxu0 %v1794
    %2050 = vmatprep.subr.bf16.mxu0 %v1799
    %2051 = vmatpush1.bf16.msra.mxu0 %v1798
    %2052 = vmatprep.subr.bf16.mxu0 %v1803
    %2053 = vmatpush1.bf16.msra.mxu0 %v1802
    %2054 = vmatprep.subr.bf16.mxu0 %v1807
    %2055 = vmatpush1.bf16.msra.mxu0 %v1806
    %2056 = vmatprep.subr.bf16.mxu0 %v1811
    %2057 = vmatpush1.bf16.msra.mxu0 %v1810
    %2058 = vmatprep.subr.bf16.mxu0 %v1815
    %2059 = vmatpush1.bf16.msra.mxu0 %v1814
    %2060 = vmatprep.subr.bf16.mxu0 %v1819
    %2061 = vmatpush1.bf16.msra.mxu0 %v1818
    %2062 = vmatprep.subr.bf16.mxu0 %v1823
    %2063 = vmatpush1.bf16.msra.mxu0 %v1822
    %2064 = vmatprep.subr.bf16.mxu0 %v1827
    %2065 = vmatpush1.bf16.msra.mxu0 %v1826
    %2066 = vmatprep.subr.bf16.mxu0 %v1831
    %2067 = vmatpush1.bf16.msra.mxu0 %v1830
    %2068 = vmatprep.subr.bf16.mxu0 %v1835
    %2069 = vmatpush1.bf16.msra.mxu0 %v1834
    %2070 = vmatprep.subr.bf16.mxu0 %v1839
    %2071 = vmatpush1.bf16.msra.mxu0 %v1838
    %2072 = vmatprep.subr.bf16.mxu0 %v1843
    %2073 = vmatpush1.bf16.msra.mxu0 %v1842
    %2074 = vmatprep.subr.bf16.mxu0 %v1847
    %2075 = vmatpush1.bf16.msra.mxu0 %v1846
    %2076 = vmatprep.subr.bf16.mxu0 %v1851
    %2077 = vmatpush1.bf16.msra.mxu0 %v1850
    %2078 = vmatprep.mubr.bf16.mxu0 %v1253
    %2079 = vmatmul.mubr.bf16.gmra.mrb[0].mxu0 %v1252
    %v2080 = vpop.f32.mrb[0].mxu0
    %v2081 = vadd.f32 %v1389, %v2080
    %v2082 = vpop.f32.mrb[0].mxu0
    %v2083 = vadd.f32 %v1393, %v2082
    %v2084 = vpop.f32.mrb[0].mxu0
    %v2085 = vadd.f32 %v1389, %v2084
    %v2086 = vpop.f32.mrb[0].mxu0
    %v2087 = vadd.f32 %v1393, %v2086
    %2088 = vdwg.mxu0
    %2089 = vmatprep.subr.bf16.mxu0 %v1855
    %2090 = vmatpush1.bf16.msra.mxu0 %v1854
    %2091 = vmatprep.subr.bf16.mxu0 %v1859
    %2092 = vmatpush1.bf16.msra.mxu0 %v1858
    %2093 = vmatprep.subr.bf16.mxu0 %v1863
    %2094 = vmatpush1.bf16.msra.mxu0 %v1862
    %2095 = vmatprep.subr.bf16.mxu0 %v1867
    %2096 = vmatpush1.bf16.msra.mxu0 %v1866
    %2097 = vmatprep.subr.bf16.mxu0 %v1871
    %2098 = vmatpush1.bf16.msra.mxu0 %v1870
    %2099 = vmatprep.subr.bf16.mxu0 %v1875
    %2100 = vmatpush1.bf16.msra.mxu0 %v1874
    %2101 = vmatprep.subr.bf16.mxu0 %v1879
    %2102 = vmatpush1.bf16.msra.mxu0 %v1878
    %2103 = vmatprep.subr.bf16.mxu0 %v1883
    %2104 = vmatpush1.bf16.msra.mxu0 %v1882
    %2105 = vmatprep.subr.bf16.mxu0 %v1887
    %2106 = vmatpush1.bf16.msra.mxu0 %v1886
    %2107 = vmatprep.subr.bf16.mxu0 %v1891
    %2108 = vmatpush1.bf16.msra.mxu0 %v1890
    %2109 = vmatprep.subr.bf16.mxu0 %v1895
    %2110 = vmatpush1.bf16.msra.mxu0 %v1894
    %2111 = vmatprep.subr.bf16.mxu0 %v1899
    %2112 = vmatpush1.bf16.msra.mxu0 %v1898
    %2113 = vmatprep.subr.bf16.mxu0 %v1903
    %2114 = vmatpush1.bf16.msra.mxu0 %v1902
    %2115 = vmatprep.subr.bf16.mxu0 %v1907
    %2116 = vmatpush1.bf16.msra.mxu0 %v1906
    %2117 = vmatprep.subr.bf16.mxu0 %v1911
    %2118 = vmatpush1.bf16.msra.mxu0 %v1910
    %2119 = vmatprep.subr.bf16.mxu0 %v1915
    %2120 = vmatpush1.bf16.msra.mxu0 %v1914
    %2121 = vmatprep.mubr.bf16.mxu0 %v1255
    %2122 = vmatmul.mubr.bf16.gmra.mrb[0].mxu0 %v1254
    %v2123 = vpop.f32.mrb[0].mxu0
    %v2124 = vadd.f32 %v2081, %v2123
    %v2125 = vpop.f32.mrb[0].mxu0
    %v2126 = vadd.f32 %v2083, %v2125
    %v2127 = vpop.f32.mrb[0].mxu0
    %v2128 = vadd.f32 %v2085, %v2127
    %v2129 = vpop.f32.mrb[0].mxu0
    %v2130 = vadd.f32 %v2087, %v2129
    %2131 = vdwg.mxu0
    %2132 = vmatprep.subr.bf16.mxu0 %v1793
    %2133 = vmatpush1.bf16.msra.mxu0 %v1792
    %2134 = vmatprep.subr.bf16.mxu0 %v1797
    %2135 = vmatpush1.bf16.msra.mxu0 %v1796
    %2136 = vmatprep.subr.bf16.mxu0 %v1801
    %2137 = vmatpush1.bf16.msra.mxu0 %v1800
    %2138 = vmatprep.subr.bf16.mxu0 %v1805
    %2139 = vmatpush1.bf16.msra.mxu0 %v1804
    %2140 = vmatprep.subr.bf16.mxu0 %v1809
    %2141 = vmatpush1.bf16.msra.mxu0 %v1808
    %2142 = vmatprep.subr.bf16.mxu0 %v1813
    %2143 = vmatpush1.bf16.msra.mxu0 %v1812
    %2144 = vmatprep.subr.bf16.mxu0 %v1817
    %2145 = vmatpush1.bf16.msra.mxu0 %v1816
    %2146 = vmatprep.subr.bf16.mxu0 %v1821
    %2147 = vmatpush1.bf16.msra.mxu0 %v1820
    %2148 = vmatprep.subr.bf16.mxu0 %v1825
    %2149 = vmatpush1.bf16.msra.mxu0 %v1824
    %2150 = vmatprep.subr.bf16.mxu0 %v1829
    %2151 = vmatpush1.bf16.msra.mxu0 %v1828
    %2152 = vmatprep.subr.bf16.mxu0 %v1833
    %2153 = vmatpush1.bf16.msra.mxu0 %v1832
    %2154 = vmatprep.subr.bf16.mxu0 %v1837
    %2155 = vmatpush1.bf16.msra.mxu0 %v1836
    %2156 = vmatprep.subr.bf16.mxu0 %v1841
    %2157 = vmatpush1.bf16.msra.mxu0 %v1840
    %2158 = vmatprep.subr.bf16.mxu0 %v1845
    %2159 = vmatpush1.bf16.msra.mxu0 %v1844
    %2160 = vmatprep.subr.bf16.mxu0 %v1849
    %2161 = vmatpush1.bf16.msra.mxu0 %v1848
    %2162 = vmatprep.subr.bf16.mxu0 %v1853
    %2163 = vmatpush1.bf16.msra.mxu0 %v1852
    %2164 = vmatprep.mubr.bf16.mxu0 %v1253
    %2165 = vmatmul.mubr.bf16.gmra.mrb[0].mxu0 %v1252
    %v2166 = vpop.f32.mrb[0].mxu0
    %v2167 = vadd.f32 %v1397, %v2166
    %v2168 = vpop.f32.mrb[0].mxu0
    %v2169 = vadd.f32 %v1401, %v2168
    %v2170 = vpop.f32.mrb[0].mxu0
    %v2171 = vadd.f32 %v1397, %v2170
    %v2172 = vpop.f32.mrb[0].mxu0
    %v2173 = vadd.f32 %v1401, %v2172
    %2174 = vdwg.mxu0
    %2175 = vmatprep.subr.bf16.mxu0 %v1857
    %2176 = vmatpush1.bf16.msra.mxu0 %v1856
    %2177 = vmatprep.subr.bf16.mxu0 %v1861
    %2178 = vmatpush1.bf16.msra.mxu0 %v1860
    %2179 = vmatprep.subr.bf16.mxu0 %v1865
    %2180 = vmatpush1.bf16.msra.mxu0 %v1864
    %2181 = vmatprep.subr.bf16.mxu0 %v1869
    %2182 = vmatpush1.bf16.msra.mxu0 %v1868
    %2183 = vmatprep.subr.bf16.mxu0 %v1873
    %2184 = vmatpush1.bf16.msra.mxu0 %v1872
    %2185 = vmatprep.subr.bf16.mxu0 %v1877
    %2186 = vmatpush1.bf16.msra.mxu0 %v1876
    %2187 = vmatprep.subr.bf16.mxu0 %v1881
    %2188 = vmatpush1.bf16.msra.mxu0 %v1880
    %2189 = vmatprep.subr.bf16.mxu0 %v1885
    %2190 = vmatpush1.bf16.msra.mxu0 %v1884
    %2191 = vmatprep.subr.bf16.mxu0 %v1889
    %2192 = vmatpush1.bf16.msra.mxu0 %v1888
    %2193 = vmatprep.subr.bf16.mxu0 %v1893
    %2194 = vmatpush1.bf16.msra.mxu0 %v1892
    %2195 = vmatprep.subr.bf16.mxu0 %v1897
    %2196 = vmatpush1.bf16.msra.mxu0 %v1896
    %2197 = vmatprep.subr.bf16.mxu0 %v1901
    %2198 = vmatpush1.bf16.msra.mxu0 %v1900
    %2199 = vmatprep.subr.bf16.mxu0 %v1905
    %2200 = vmatpush1.bf16.msra.mxu0 %v1904
    %2201 = vmatprep.subr.bf16.mxu0 %v1909
    %2202 = vmatpush1.bf16.msra.mxu0 %v1908
    %2203 = vmatprep.subr.bf16.mxu0 %v1913
    %2204 = vmatpush1.bf16.msra.mxu0 %v1912
    %2205 = vmatprep.subr.bf16.mxu0 %v1917
    %2206 = vmatpush1.bf16.msra.mxu0 %v1916
    %2207 = vmatprep.mubr.bf16.mxu0 %v1255
    %2208 = vmatmul.mubr.bf16.gmra.mrb[0].mxu0 %v1254
    %v2209 = vpop.f32.mrb[0].mxu0
    %v2210 = vadd.f32 %v2167, %v2209
    %v2211 = vpop.f32.mrb[0].mxu0
    %v2212 = vadd.f32 %v2169, %v2211
    %v2213 = vpop.f32.mrb[0].mxu0
    %v2214 = vadd.f32 %v2171, %v2213
    %v2215 = vpop.f32.mrb[0].mxu0
    %v2216 = vadd.f32 %v2173, %v2215
    %2217 = vdwg.mxu0
    %v2218 = vunpack.c.l.bf16 %v278
    %v2219 = vunpack.c.l.bf16 %v279
    %v2220 = vunpack.c.l.bf16 %v280
    %v2221 = vunpack.c.l.bf16 %v281
    %v2222 = vunpack.c.h.bf16 %v278
    %v2223 = vunpack.c.h.bf16 %v279
    %v2224 = vunpack.c.h.bf16 %v280
    %v2225 = vunpack.c.h.bf16 %v281
    %v2226 = vadd.f32 %v2124, %v2218
    %v2227 = vadd.f32 %v2126, %v2219
    %v2228 = vadd.f32 %v2210, %v2220
    %v2229 = vadd.f32 %v2212, %v2221
    %v2230 = vadd.f32 %v2128, %v2222
    %v2231 = vadd.f32 %v2130, %v2223
    %v2232 = vadd.f32 %v2214, %v2224
    %v2233 = vadd.f32 %v2216, %v2225
    %v2234 = vmax.f32 %v2226, 0.0
    %v2235 = vmax.f32 %v2227, 0.0
    %v2236 = vmax.f32 %v2228, 0.0
    %v2237 = vmax.f32 %v2229, 0.0
    %v2238 = vmax.f32 %v2230, 0.0
    %v2239 = vmax.f32 %v2231, 0.0
    %v2240 = vmax.f32 %v2232, 0.0
    %v2241 = vmax.f32 %v2233, 0.0
    %v2242 = vpack.c.bf16 %v2238, %v2234
    %v2243 = vpack.c.bf16 %v2239, %v2235
    %v2244 = vpack.c.bf16 %v2240, %v2236
    %v2245 = vpack.c.bf16 %v2241, %v2237
    %v2246 = vld [vmem:[#allocation7] sm:$0xff]
    %v2247 = vld [vmem:[#allocation7 + $0x8] sm:$0xff]
    %v2248 = vld [vmem:[#allocation7 + $0x10] sm:$0xff]
    %v2249 = vld [vmem:[#allocation7 + $0x18] sm:$0xff]
    %v2250 = vld [vmem:[#allocation7 + $0x20] sm:$0xff]
    %v2251 = vld [vmem:[#allocation7 + $0x28] sm:$0xff]
    %v2252 = vld [vmem:[#allocation7 + $0x30] sm:$0xff]
    %v2253 = vld [vmem:[#allocation7 + $0x38] sm:$0xff]
    %v2254 = vld [vmem:[#allocation7 + $0x40] sm:$0xff]
    %v2255 = vld [vmem:[#allocation7 + $0x48] sm:$0xff]
    %v2256 = vld [vmem:[#allocation7 + $0x50] sm:$0xff]
    %v2257 = vld [vmem:[#allocation7 + $0x58] sm:$0xff]
    %v2258 = vld [vmem:[#allocation7 + $0x60] sm:$0xff]
    %v2259 = vld [vmem:[#allocation7 + $0x68] sm:$0xff]
    %v2260 = vld [vmem:[#allocation7 + $0x70] sm:$0xff]
    %v2261 = vld [vmem:[#allocation7 + $0x78] sm:$0xff]
    %v2262 = vld [vmem:[#allocation7 + $0x80] sm:$0xff]
    %v2263 = vld [vmem:[#allocation7 + $0x88] sm:$0xff]
    %v2264 = vld [vmem:[#allocation7 + $0x90] sm:$0xff]
    %v2265 = vld [vmem:[#allocation7 + $0x98] sm:$0xff]
    %v2266 = vld [vmem:[#allocation7 + $0xa0] sm:$0xff]
    %v2267 = vld [vmem:[#allocation7 + $0xa8] sm:$0xff]
    %v2268 = vld [vmem:[#allocation7 + $0xb0] sm:$0xff]
    %v2269 = vld [vmem:[#allocation7 + $0xb8] sm:$0xff]
    %v2270 = vld [vmem:[#allocation7 + $0xc0] sm:$0xff]
    %v2271 = vld [vmem:[#allocation7 + $0xc8] sm:$0xff]
    %v2272 = vld [vmem:[#allocation7 + $0xd0] sm:$0xff]
    %v2273 = vld [vmem:[#allocation7 + $0xd8] sm:$0xff]
    %v2274 = vld [vmem:[#allocation7 + $0xe0] sm:$0xff]
    %v2275 = vld [vmem:[#allocation7 + $0xe8] sm:$0xff]
    %v2276 = vld [vmem:[#allocation7 + $0xf0] sm:$0xff]
    %v2277 = vld [vmem:[#allocation7 + $0xf8] sm:$0xff]
    %v2278 = vld [vmem:[#allocation7 + $0x100] sm:$0xff]
    %v2279 = vld [vmem:[#allocation7 + $0x108] sm:$0xff]
    %v2280 = vld [vmem:[#allocation7 + $0x110] sm:$0xff]
    %v2281 = vld [vmem:[#allocation7 + $0x118] sm:$0xff]
    %v2282 = vld [vmem:[#allocation7 + $0x120] sm:$0xff]
    %v2283 = vld [vmem:[#allocation7 + $0x128] sm:$0xff]
    %v2284 = vld [vmem:[#allocation7 + $0x130] sm:$0xff]
    %v2285 = vld [vmem:[#allocation7 + $0x138] sm:$0xff]
    %v2286 = vld [vmem:[#allocation7 + $0x140] sm:$0xff]
    %v2287 = vld [vmem:[#allocation7 + $0x148] sm:$0xff]
    %v2288 = vld [vmem:[#allocation7 + $0x150] sm:$0xff]
    %v2289 = vld [vmem:[#allocation7 + $0x158] sm:$0xff]
    %v2290 = vld [vmem:[#allocation7 + $0x160] sm:$0xff]
    %v2291 = vld [vmem:[#allocation7 + $0x168] sm:$0xff]
    %v2292 = vld [vmem:[#allocation7 + $0x170] sm:$0xff]
    %v2293 = vld [vmem:[#allocation7 + $0x178] sm:$0xff]
    %v2294 = vld [vmem:[#allocation7 + $0x180] sm:$0xff]
    %v2295 = vld [vmem:[#allocation7 + $0x188] sm:$0xff]
    %v2296 = vld [vmem:[#allocation7 + $0x190] sm:$0xff]
    %v2297 = vld [vmem:[#allocation7 + $0x198] sm:$0xff]
    %v2298 = vld [vmem:[#allocation7 + $0x1a0] sm:$0xff]
    %v2299 = vld [vmem:[#allocation7 + $0x1a8] sm:$0xff]
    %v2300 = vld [vmem:[#allocation7 + $0x1b0] sm:$0xff]
    %v2301 = vld [vmem:[#allocation7 + $0x1b8] sm:$0xff]
    %v2302 = vld [vmem:[#allocation7 + $0x1c0] sm:$0xff]
    %v2303 = vld [vmem:[#allocation7 + $0x1c8] sm:$0xff]
    %v2304 = vld [vmem:[#allocation7 + $0x1d0] sm:$0xff]
    %v2305 = vld [vmem:[#allocation7 + $0x1d8] sm:$0xff]
    %v2306 = vld [vmem:[#allocation7 + $0x1e0] sm:$0xff]
    %v2307 = vld [vmem:[#allocation7 + $0x1e8] sm:$0xff]
    %v2308 = vld [vmem:[#allocation7 + $0x1f0] sm:$0xff]
    %v2309 = vld [vmem:[#allocation7 + $0x1f8] sm:$0xff]
    %v2310 = vld [vmem:[#allocation7 + $0x200] sm:$0xff]
    %v2311 = vld [vmem:[#allocation7 + $0x208] sm:$0xff]
    %v2312 = vld [vmem:[#allocation7 + $0x210] sm:$0xff]
    %v2313 = vld [vmem:[#allocation7 + $0x218] sm:$0xff]
    %v2314 = vld [vmem:[#allocation7 + $0x220] sm:$0xff]
    %v2315 = vld [vmem:[#allocation7 + $0x228] sm:$0xff]
    %v2316 = vld [vmem:[#allocation7 + $0x230] sm:$0xff]
    %v2317 = vld [vmem:[#allocation7 + $0x238] sm:$0xff]
    %v2318 = vld [vmem:[#allocation7 + $0x240] sm:$0xff]
    %v2319 = vld [vmem:[#allocation7 + $0x248] sm:$0xff]
    %v2320 = vld [vmem:[#allocation7 + $0x250] sm:$0xff]
    %v2321 = vld [vmem:[#allocation7 + $0x258] sm:$0xff]
    %v2322 = vld [vmem:[#allocation7 + $0x260] sm:$0xff]
    %v2323 = vld [vmem:[#allocation7 + $0x268] sm:$0xff]
    %v2324 = vld [vmem:[#allocation7 + $0x270] sm:$0xff]
    %v2325 = vld [vmem:[#allocation7 + $0x278] sm:$0xff]
    %v2326 = vld [vmem:[#allocation7 + $0x280] sm:$0xff]
    %v2327 = vld [vmem:[#allocation7 + $0x288] sm:$0xff]
    %v2328 = vld [vmem:[#allocation7 + $0x290] sm:$0xff]
    %v2329 = vld [vmem:[#allocation7 + $0x298] sm:$0xff]
    %v2330 = vld [vmem:[#allocation7 + $0x2a0] sm:$0xff]
    %v2331 = vld [vmem:[#allocation7 + $0x2a8] sm:$0xff]
    %v2332 = vld [vmem:[#allocation7 + $0x2b0] sm:$0xff]
    %v2333 = vld [vmem:[#allocation7 + $0x2b8] sm:$0xff]
    %v2334 = vld [vmem:[#allocation7 + $0x2c0] sm:$0xff]
    %v2335 = vld [vmem:[#allocation7 + $0x2c8] sm:$0xff]
    %v2336 = vld [vmem:[#allocation7 + $0x2d0] sm:$0xff]
    %v2337 = vld [vmem:[#allocation7 + $0x2d8] sm:$0xff]
    %v2338 = vld [vmem:[#allocation7 + $0x2e0] sm:$0xff]
    %v2339 = vld [vmem:[#allocation7 + $0x2e8] sm:$0xff]
    %v2340 = vld [vmem:[#allocation7 + $0x2f0] sm:$0xff]
    %v2341 = vld [vmem:[#allocation7 + $0x2f8] sm:$0xff]
    %v2342 = vld [vmem:[#allocation7 + $0x300] sm:$0xff]
    %v2343 = vld [vmem:[#allocation7 + $0x308] sm:$0xff]
    %v2344 = vld [vmem:[#allocation7 + $0x310] sm:$0xff]
    %v2345 = vld [vmem:[#allocation7 + $0x318] sm:$0xff]
    %v2346 = vld [vmem:[#allocation7 + $0x320] sm:$0xff]
    %v2347 = vld [vmem:[#allocation7 + $0x328] sm:$0xff]
    %v2348 = vld [vmem:[#allocation7 + $0x330] sm:$0xff]
    %v2349 = vld [vmem:[#allocation7 + $0x338] sm:$0xff]
    %v2350 = vld [vmem:[#allocation7 + $0x340] sm:$0xff]
    %v2351 = vld [vmem:[#allocation7 + $0x348] sm:$0xff]
    %v2352 = vld [vmem:[#allocation7 + $0x350] sm:$0xff]
    %v2353 = vld [vmem:[#allocation7 + $0x358] sm:$0xff]
    %v2354 = vld [vmem:[#allocation7 + $0x360] sm:$0xff]
    %v2355 = vld [vmem:[#allocation7 + $0x368] sm:$0xff]
    %v2356 = vld [vmem:[#allocation7 + $0x370] sm:$0xff]
    %v2357 = vld [vmem:[#allocation7 + $0x378] sm:$0xff]
    %v2358 = vld [vmem:[#allocation7 + $0x380] sm:$0xff]
    %v2359 = vld [vmem:[#allocation7 + $0x388] sm:$0xff]
    %v2360 = vld [vmem:[#allocation7 + $0x390] sm:$0xff]
    %v2361 = vld [vmem:[#allocation7 + $0x398] sm:$0xff]
    %v2362 = vld [vmem:[#allocation7 + $0x3a0] sm:$0xff]
    %v2363 = vld [vmem:[#allocation7 + $0x3a8] sm:$0xff]
    %v2364 = vld [vmem:[#allocation7 + $0x3b0] sm:$0xff]
    %v2365 = vld [vmem:[#allocation7 + $0x3b8] sm:$0xff]
    %v2366 = vld [vmem:[#allocation7 + $0x3c0] sm:$0xff]
    %v2367 = vld [vmem:[#allocation7 + $0x3c8] sm:$0xff]
    %v2368 = vld [vmem:[#allocation7 + $0x3d0] sm:$0xff]
    %v2369 = vld [vmem:[#allocation7 + $0x3d8] sm:$0xff]
    %v2370 = vld [vmem:[#allocation7 + $0x3e0] sm:$0xff]
    %v2371 = vld [vmem:[#allocation7 + $0x3e8] sm:$0xff]
    %v2372 = vld [vmem:[#allocation7 + $0x3f0] sm:$0xff]
    %v2373 = vld [vmem:[#allocation7 + $0x3f8] sm:$0xff]
    %v2374 = vld [vmem:[%s8] sm:$0xf]
    %v2376 = vlaneseq
    %v2377 = vshrl.u32 %v2376, 7
    %v2378 = vsub.s32 0, %v2377
    %v2379 = vrot.slane %v2374, %v2378
    %v2380 = vlaneseq
    %v2381 = vshrl.u32 %v2380, 7
    %v2382 = vsub.s32 1, %v2381
    %v2383 = vrot.slane %v2374, %v2382
    %v2384 = vlaneseq
    %v2385 = vshrl.u32 %v2384, 7
    %v2386 = vsub.s32 2, %v2385
    %v2387 = vrot.slane %v2374, %v2386
    %v2388 = vlaneseq
    %v2389 = vshrl.u32 %v2388, 7
    %v2390 = vsub.s32 3, %v2389
    %v2391 = vrot.slane %v2374, %v2390
    %v2524 = vunpack.c.l.b16 %v2246
    %v2525 = vunpack.c.h.b16 %v2246
    %v2526 = vunpack.c.l.b16 %v2247
    %v2527 = vunpack.c.h.b16 %v2247
    %v2528 = vunpack.c.l.b16 %v2248
    %v2529 = vunpack.c.h.b16 %v2248
    %v2530 = vunpack.c.l.b16 %v2249
    %v2531 = vunpack.c.h.b16 %v2249
    %v2532 = vunpack.c.l.b16 %v2250
    %v2533 = vunpack.c.h.b16 %v2250
    %v2534 = vunpack.c.l.b16 %v2251
    %v2535 = vunpack.c.h.b16 %v2251
    %v2536 = vunpack.c.l.b16 %v2252
    %v2537 = vunpack.c.h.b16 %v2252
    %v2538 = vunpack.c.l.b16 %v2253
    %v2539 = vunpack.c.h.b16 %v2253
    %v2540 = vunpack.c.l.b16 %v2254
    %v2541 = vunpack.c.h.b16 %v2254
    %v2542 = vunpack.c.l.b16 %v2255
    %v2543 = vunpack.c.h.b16 %v2255
    %v2544 = vunpack.c.l.b16 %v2256
    %v2545 = vunpack.c.h.b16 %v2256
    %v2546 = vunpack.c.l.b16 %v2257
    %v2547 = vunpack.c.h.b16 %v2257
    %v2548 = vunpack.c.l.b16 %v2258
    %v2549 = vunpack.c.h.b16 %v2258
    %v2550 = vunpack.c.l.b16 %v2259
    %v2551 = vunpack.c.h.b16 %v2259
    %v2552 = vunpack.c.l.b16 %v2260
    %v2553 = vunpack.c.h.b16 %v2260
    %v2554 = vunpack.c.l.b16 %v2261
    %v2555 = vunpack.c.h.b16 %v2261
    %v2556 = vunpack.c.l.b16 %v2262
    %v2557 = vunpack.c.h.b16 %v2262
    %v2558 = vunpack.c.l.b16 %v2263
    %v2559 = vunpack.c.h.b16 %v2263
    %v2560 = vunpack.c.l.b16 %v2264
    %v2561 = vunpack.c.h.b16 %v2264
    %v2562 = vunpack.c.l.b16 %v2265
    %v2563 = vunpack.c.h.b16 %v2265
    %v2564 = vunpack.c.l.b16 %v2266
    %v2565 = vunpack.c.h.b16 %v2266
    %v2566 = vunpack.c.l.b16 %v2267
    %v2567 = vunpack.c.h.b16 %v2267
    %v2568 = vunpack.c.l.b16 %v2268
    %v2569 = vunpack.c.h.b16 %v2268
    %v2570 = vunpack.c.l.b16 %v2269
    %v2571 = vunpack.c.h.b16 %v2269
    %v2572 = vunpack.c.l.b16 %v2270
    %v2573 = vunpack.c.h.b16 %v2270
    %v2574 = vunpack.c.l.b16 %v2271
    %v2575 = vunpack.c.h.b16 %v2271
    %v2576 = vunpack.c.l.b16 %v2272
    %v2577 = vunpack.c.h.b16 %v2272
    %v2578 = vunpack.c.l.b16 %v2273
    %v2579 = vunpack.c.h.b16 %v2273
    %v2580 = vunpack.c.l.b16 %v2274
    %v2581 = vunpack.c.h.b16 %v2274
    %v2582 = vunpack.c.l.b16 %v2275
    %v2583 = vunpack.c.h.b16 %v2275
    %v2584 = vunpack.c.l.b16 %v2276
    %v2585 = vunpack.c.h.b16 %v2276
    %v2586 = vunpack.c.l.b16 %v2277
    %v2587 = vunpack.c.h.b16 %v2277
    %v2588 = vunpack.c.l.b16 %v2278
    %v2589 = vunpack.c.h.b16 %v2278
    %v2590 = vunpack.c.l.b16 %v2279
    %v2591 = vunpack.c.h.b16 %v2279
    %v2592 = vunpack.c.l.b16 %v2280
    %v2593 = vunpack.c.h.b16 %v2280
    %v2594 = vunpack.c.l.b16 %v2281
    %v2595 = vunpack.c.h.b16 %v2281
    %v2596 = vunpack.c.l.b16 %v2282
    %v2597 = vunpack.c.h.b16 %v2282
    %v2598 = vunpack.c.l.b16 %v2283
    %v2599 = vunpack.c.h.b16 %v2283
    %v2600 = vunpack.c.l.b16 %v2284
    %v2601 = vunpack.c.h.b16 %v2284
    %v2602 = vunpack.c.l.b16 %v2285
    %v2603 = vunpack.c.h.b16 %v2285
    %v2604 = vunpack.c.l.b16 %v2286
    %v2605 = vunpack.c.h.b16 %v2286
    %v2606 = vunpack.c.l.b16 %v2287
    %v2607 = vunpack.c.h.b16 %v2287
    %v2608 = vunpack.c.l.b16 %v2288
    %v2609 = vunpack.c.h.b16 %v2288
    %v2610 = vunpack.c.l.b16 %v2289
    %v2611 = vunpack.c.h.b16 %v2289
    %v2612 = vunpack.c.l.b16 %v2290
    %v2613 = vunpack.c.h.b16 %v2290
    %v2614 = vunpack.c.l.b16 %v2291
    %v2615 = vunpack.c.h.b16 %v2291
    %v2616 = vunpack.c.l.b16 %v2292
    %v2617 = vunpack.c.h.b16 %v2292
    %v2618 = vunpack.c.l.b16 %v2293
    %v2619 = vunpack.c.h.b16 %v2293
    %v2620 = vunpack.c.l.b16 %v2294
    %v2621 = vunpack.c.h.b16 %v2294
    %v2622 = vunpack.c.l.b16 %v2295
    %v2623 = vunpack.c.h.b16 %v2295
    %v2624 = vunpack.c.l.b16 %v2296
    %v2625 = vunpack.c.h.b16 %v2296
    %v2626 = vunpack.c.l.b16 %v2297
    %v2627 = vunpack.c.h.b16 %v2297
    %v2628 = vunpack.c.l.b16 %v2298
    %v2629 = vunpack.c.h.b16 %v2298
    %v2630 = vunpack.c.l.b16 %v2299
    %v2631 = vunpack.c.h.b16 %v2299
    %v2632 = vunpack.c.l.b16 %v2300
    %v2633 = vunpack.c.h.b16 %v2300
    %v2634 = vunpack.c.l.b16 %v2301
    %v2635 = vunpack.c.h.b16 %v2301
    %v2636 = vunpack.c.l.b16 %v2302
    %v2637 = vunpack.c.h.b16 %v2302
    %v2638 = vunpack.c.l.b16 %v2303
    %v2639 = vunpack.c.h.b16 %v2303
    %v2640 = vunpack.c.l.b16 %v2304
    %v2641 = vunpack.c.h.b16 %v2304
    %v2642 = vunpack.c.l.b16 %v2305
    %v2643 = vunpack.c.h.b16 %v2305
    %v2644 = vunpack.c.l.b16 %v2306
    %v2645 = vunpack.c.h.b16 %v2306
    %v2646 = vunpack.c.l.b16 %v2307
    %v2647 = vunpack.c.h.b16 %v2307
    %v2648 = vunpack.c.l.b16 %v2308
    %v2649 = vunpack.c.h.b16 %v2308
    %v2650 = vunpack.c.l.b16 %v2309
    %v2651 = vunpack.c.h.b16 %v2309
    %v2652 = vunpack.c.l.b16 %v2310
    %v2653 = vunpack.c.h.b16 %v2310
    %v2654 = vunpack.c.l.b16 %v2311
    %v2655 = vunpack.c.h.b16 %v2311
    %v2656 = vunpack.c.l.b16 %v2312
    %v2657 = vunpack.c.h.b16 %v2312
    %v2658 = vunpack.c.l.b16 %v2313
    %v2659 = vunpack.c.h.b16 %v2313
    %v2660 = vunpack.c.l.b16 %v2314
    %v2661 = vunpack.c.h.b16 %v2314
    %v2662 = vunpack.c.l.b16 %v2315
    %v2663 = vunpack.c.h.b16 %v2315
    %v2664 = vunpack.c.l.b16 %v2316
    %v2665 = vunpack.c.h.b16 %v2316
    %v2666 = vunpack.c.l.b16 %v2317
    %v2667 = vunpack.c.h.b16 %v2317
    %v2668 = vunpack.c.l.b16 %v2318
    %v2669 = vunpack.c.h.b16 %v2318
    %v2670 = vunpack.c.l.b16 %v2319
    %v2671 = vunpack.c.h.b16 %v2319
    %v2672 = vunpack.c.l.b16 %v2320
    %v2673 = vunpack.c.h.b16 %v2320
    %v2674 = vunpack.c.l.b16 %v2321
    %v2675 = vunpack.c.h.b16 %v2321
    %v2676 = vunpack.c.l.b16 %v2322
    %v2677 = vunpack.c.h.b16 %v2322
    %v2678 = vunpack.c.l.b16 %v2323
    %v2679 = vunpack.c.h.b16 %v2323
    %v2680 = vunpack.c.l.b16 %v2324
    %v2681 = vunpack.c.h.b16 %v2324
    %v2682 = vunpack.c.l.b16 %v2325
    %v2683 = vunpack.c.h.b16 %v2325
    %v2684 = vunpack.c.l.b16 %v2326
    %v2685 = vunpack.c.h.b16 %v2326
    %v2686 = vunpack.c.l.b16 %v2327
    %v2687 = vunpack.c.h.b16 %v2327
    %v2688 = vunpack.c.l.b16 %v2328
    %v2689 = vunpack.c.h.b16 %v2328
    %v2690 = vunpack.c.l.b16 %v2329
    %v2691 = vunpack.c.h.b16 %v2329
    %v2692 = vunpack.c.l.b16 %v2330
    %v2693 = vunpack.c.h.b16 %v2330
    %v2694 = vunpack.c.l.b16 %v2331
    %v2695 = vunpack.c.h.b16 %v2331
    %v2696 = vunpack.c.l.b16 %v2332
    %v2697 = vunpack.c.h.b16 %v2332
    %v2698 = vunpack.c.l.b16 %v2333
    %v2699 = vunpack.c.h.b16 %v2333
    %v2700 = vunpack.c.l.b16 %v2334
    %v2701 = vunpack.c.h.b16 %v2334
    %v2702 = vunpack.c.l.b16 %v2335
    %v2703 = vunpack.c.h.b16 %v2335
    %v2704 = vunpack.c.l.b16 %v2336
    %v2705 = vunpack.c.h.b16 %v2336
    %v2706 = vunpack.c.l.b16 %v2337
    %v2707 = vunpack.c.h.b16 %v2337
    %v2708 = vunpack.c.l.b16 %v2338
    %v2709 = vunpack.c.h.b16 %v2338
    %v2710 = vunpack.c.l.b16 %v2339
    %v2711 = vunpack.c.h.b16 %v2339
    %v2712 = vunpack.c.l.b16 %v2340
    %v2713 = vunpack.c.h.b16 %v2340
    %v2714 = vunpack.c.l.b16 %v2341
    %v2715 = vunpack.c.h.b16 %v2341
    %v2716 = vunpack.c.l.b16 %v2342
    %v2717 = vunpack.c.h.b16 %v2342
    %v2718 = vunpack.c.l.b16 %v2343
    %v2719 = vunpack.c.h.b16 %v2343
    %v2720 = vunpack.c.l.b16 %v2344
    %v2721 = vunpack.c.h.b16 %v2344
    %v2722 = vunpack.c.l.b16 %v2345
    %v2723 = vunpack.c.h.b16 %v2345
    %v2724 = vunpack.c.l.b16 %v2346
    %v2725 = vunpack.c.h.b16 %v2346
    %v2726 = vunpack.c.l.b16 %v2347
    %v2727 = vunpack.c.h.b16 %v2347
    %v2728 = vunpack.c.l.b16 %v2348
    %v2729 = vunpack.c.h.b16 %v2348
    %v2730 = vunpack.c.l.b16 %v2349
    %v2731 = vunpack.c.h.b16 %v2349
    %v2732 = vunpack.c.l.b16 %v2350
    %v2733 = vunpack.c.h.b16 %v2350
    %v2734 = vunpack.c.l.b16 %v2351
    %v2735 = vunpack.c.h.b16 %v2351
    %v2736 = vunpack.c.l.b16 %v2352
    %v2737 = vunpack.c.h.b16 %v2352
    %v2738 = vunpack.c.l.b16 %v2353
    %v2739 = vunpack.c.h.b16 %v2353
    %v2740 = vunpack.c.l.b16 %v2354
    %v2741 = vunpack.c.h.b16 %v2354
    %v2742 = vunpack.c.l.b16 %v2355
    %v2743 = vunpack.c.h.b16 %v2355
    %v2744 = vunpack.c.l.b16 %v2356
    %v2745 = vunpack.c.h.b16 %v2356
    %v2746 = vunpack.c.l.b16 %v2357
    %v2747 = vunpack.c.h.b16 %v2357
    %v2748 = vunpack.c.l.b16 %v2358
    %v2749 = vunpack.c.h.b16 %v2358
    %v2750 = vunpack.c.l.b16 %v2359
    %v2751 = vunpack.c.h.b16 %v2359
    %v2752 = vunpack.c.l.b16 %v2360
    %v2753 = vunpack.c.h.b16 %v2360
    %v2754 = vunpack.c.l.b16 %v2361
    %v2755 = vunpack.c.h.b16 %v2361
    %v2756 = vunpack.c.l.b16 %v2362
    %v2757 = vunpack.c.h.b16 %v2362
    %v2758 = vunpack.c.l.b16 %v2363
    %v2759 = vunpack.c.h.b16 %v2363
    %v2760 = vunpack.c.l.b16 %v2364
    %v2761 = vunpack.c.h.b16 %v2364
    %v2762 = vunpack.c.l.b16 %v2365
    %v2763 = vunpack.c.h.b16 %v2365
    %v2764 = vunpack.c.l.b16 %v2366
    %v2765 = vunpack.c.h.b16 %v2366
    %v2766 = vunpack.c.l.b16 %v2367
    %v2767 = vunpack.c.h.b16 %v2367
    %v2768 = vunpack.c.l.b16 %v2368
    %v2769 = vunpack.c.h.b16 %v2368
    %v2770 = vunpack.c.l.b16 %v2369
    %v2771 = vunpack.c.h.b16 %v2369
    %v2772 = vunpack.c.l.b16 %v2370
    %v2773 = vunpack.c.h.b16 %v2370
    %v2774 = vunpack.c.l.b16 %v2371
    %v2775 = vunpack.c.h.b16 %v2371
    %v2776 = vunpack.c.l.b16 %v2372
    %v2777 = vunpack.c.h.b16 %v2372
    %v2778 = vunpack.c.l.b16 %v2373
    %v2779 = vunpack.c.h.b16 %v2373
    %v2780 = vpack.c.b16 %v2528, %v2524
    %v2781 = vpack.c.b16 %v2529, %v2525
    %v2782 = vpack.c.b16 %v2530, %v2526
    %v2783 = vpack.c.b16 %v2531, %v2527
    %v2784 = vpack.c.b16 %v2536, %v2532
    %v2785 = vpack.c.b16 %v2537, %v2533
    %v2786 = vpack.c.b16 %v2538, %v2534
    %v2787 = vpack.c.b16 %v2539, %v2535
    %v2788 = vpack.c.b16 %v2544, %v2540
    %v2789 = vpack.c.b16 %v2545, %v2541
    %v2790 = vpack.c.b16 %v2546, %v2542
    %v2791 = vpack.c.b16 %v2547, %v2543
    %v2792 = vpack.c.b16 %v2552, %v2548
    %v2793 = vpack.c.b16 %v2553, %v2549
    %v2794 = vpack.c.b16 %v2554, %v2550
    %v2795 = vpack.c.b16 %v2555, %v2551
    %v2796 = vpack.c.b16 %v2560, %v2556
    %v2797 = vpack.c.b16 %v2561, %v2557
    %v2798 = vpack.c.b16 %v2562, %v2558
    %v2799 = vpack.c.b16 %v2563, %v2559
    %v2800 = vpack.c.b16 %v2568, %v2564
    %v2801 = vpack.c.b16 %v2569, %v2565
    %v2802 = vpack.c.b16 %v2570, %v2566
    %v2803 = vpack.c.b16 %v2571, %v2567
    %v2804 = vpack.c.b16 %v2576, %v2572
    %v2805 = vpack.c.b16 %v2577, %v2573
    %v2806 = vpack.c.b16 %v2578, %v2574
    %v2807 = vpack.c.b16 %v2579, %v2575
    %v2808 = vpack.c.b16 %v2584, %v2580
    %v2809 = vpack.c.b16 %v2585, %v2581
    %v2810 = vpack.c.b16 %v2586, %v2582
    %v2811 = vpack.c.b16 %v2587, %v2583
    %v2812 = vpack.c.b16 %v2592, %v2588
    %v2813 = vpack.c.b16 %v2593, %v2589
    %v2814 = vpack.c.b16 %v2594, %v2590
    %v2815 = vpack.c.b16 %v2595, %v2591
    %v2816 = vpack.c.b16 %v2600, %v2596
    %v2817 = vpack.c.b16 %v2601, %v2597
    %v2818 = vpack.c.b16 %v2602, %v2598
    %v2819 = vpack.c.b16 %v2603, %v2599
    %v2820 = vpack.c.b16 %v2608, %v2604
    %v2821 = vpack.c.b16 %v2609, %v2605
    %v2822 = vpack.c.b16 %v2610, %v2606
    %v2823 = vpack.c.b16 %v2611, %v2607
    %v2824 = vpack.c.b16 %v2616, %v2612
    %v2825 = vpack.c.b16 %v2617, %v2613
    %v2826 = vpack.c.b16 %v2618, %v2614
    %v2827 = vpack.c.b16 %v2619, %v2615
    %v2828 = vpack.c.b16 %v2624, %v2620
    %v2829 = vpack.c.b16 %v2625, %v2621
    %v2830 = vpack.c.b16 %v2626, %v2622
    %v2831 = vpack.c.b16 %v2627, %v2623
    %v2832 = vpack.c.b16 %v2632, %v2628
    %v2833 = vpack.c.b16 %v2633, %v2629
    %v2834 = vpack.c.b16 %v2634, %v2630
    %v2835 = vpack.c.b16 %v2635, %v2631
    %v2836 = vpack.c.b16 %v2640, %v2636
    %v2837 = vpack.c.b16 %v2641, %v2637
    %v2838 = vpack.c.b16 %v2642, %v2638
    %v2839 = vpack.c.b16 %v2643, %v2639
    %v2840 = vpack.c.b16 %v2648, %v2644
    %v2841 = vpack.c.b16 %v2649, %v2645
    %v2842 = vpack.c.b16 %v2650, %v2646
    %v2843 = vpack.c.b16 %v2651, %v2647
    %v2844 = vpack.c.b16 %v2656, %v2652
    %v2845 = vpack.c.b16 %v2657, %v2653
    %v2846 = vpack.c.b16 %v2658, %v2654
    %v2847 = vpack.c.b16 %v2659, %v2655
    %v2848 = vpack.c.b16 %v2664, %v2660
    %v2849 = vpack.c.b16 %v2665, %v2661
    %v2850 = vpack.c.b16 %v2666, %v2662
    %v2851 = vpack.c.b16 %v2667, %v2663
    %v2852 = vpack.c.b16 %v2672, %v2668
    %v2853 = vpack.c.b16 %v2673, %v2669
    %v2854 = vpack.c.b16 %v2674, %v2670
    %v2855 = vpack.c.b16 %v2675, %v2671
    %v2856 = vpack.c.b16 %v2680, %v2676
    %v2857 = vpack.c.b16 %v2681, %v2677
    %v2858 = vpack.c.b16 %v2682, %v2678
    %v2859 = vpack.c.b16 %v2683, %v2679
    %v2860 = vpack.c.b16 %v2688, %v2684
    %v2861 = vpack.c.b16 %v2689, %v2685
    %v2862 = vpack.c.b16 %v2690, %v2686
    %v2863 = vpack.c.b16 %v2691, %v2687
    %v2864 = vpack.c.b16 %v2696, %v2692
    %v2865 = vpack.c.b16 %v2697, %v2693
    %v2866 = vpack.c.b16 %v2698, %v2694
    %v2867 = vpack.c.b16 %v2699, %v2695
    %v2868 = vpack.c.b16 %v2704, %v2700
    %v2869 = vpack.c.b16 %v2705, %v2701
    %v2870 = vpack.c.b16 %v2706, %v2702
    %v2871 = vpack.c.b16 %v2707, %v2703
    %v2872 = vpack.c.b16 %v2712, %v2708
    %v2873 = vpack.c.b16 %v2713, %v2709
    %v2874 = vpack.c.b16 %v2714, %v2710
    %v2875 = vpack.c.b16 %v2715, %v2711
    %v2876 = vpack.c.b16 %v2720, %v2716
    %v2877 = vpack.c.b16 %v2721, %v2717
    %v2878 = vpack.c.b16 %v2722, %v2718
    %v2879 = vpack.c.b16 %v2723, %v2719
    %v2880 = vpack.c.b16 %v2728, %v2724
    %v2881 = vpack.c.b16 %v2729, %v2725
    %v2882 = vpack.c.b16 %v2730, %v2726
    %v2883 = vpack.c.b16 %v2731, %v2727
    %v2884 = vpack.c.b16 %v2736, %v2732
    %v2885 = vpack.c.b16 %v2737, %v2733
    %v2886 = vpack.c.b16 %v2738, %v2734
    %v2887 = vpack.c.b16 %v2739, %v2735
    %v2888 = vpack.c.b16 %v2744, %v2740
    %v2889 = vpack.c.b16 %v2745, %v2741
    %v2890 = vpack.c.b16 %v2746, %v2742
    %v2891 = vpack.c.b16 %v2747, %v2743
    %v2892 = vpack.c.b16 %v2752, %v2748
    %v2893 = vpack.c.b16 %v2753, %v2749
    %v2894 = vpack.c.b16 %v2754, %v2750
    %v2895 = vpack.c.b16 %v2755, %v2751
    %v2896 = vpack.c.b16 %v2760, %v2756
    %v2897 = vpack.c.b16 %v2761, %v2757
    %v2898 = vpack.c.b16 %v2762, %v2758
    %v2899 = vpack.c.b16 %v2763, %v2759
    %v2900 = vpack.c.b16 %v2768, %v2764
    %v2901 = vpack.c.b16 %v2769, %v2765
    %v2902 = vpack.c.b16 %v2770, %v2766
    %v2903 = vpack.c.b16 %v2771, %v2767
    %v2904 = vpack.c.b16 %v2776, %v2772
    %v2905 = vpack.c.b16 %v2777, %v2773
    %v2906 = vpack.c.b16 %v2778, %v2774
    %v2907 = vpack.c.b16 %v2779, %v2775
    %3036 = vmatprep.subr.bf16.mxu0 %v2781
    %3037 = vmatpush1.bf16.msra.mxu0 %v2780
    %3038 = vmatprep.subr.bf16.mxu0 %v2785
    %3039 = vmatpush1.bf16.msra.mxu0 %v2784
    %3040 = vmatprep.subr.bf16.mxu0 %v2789
    %3041 = vmatpush1.bf16.msra.mxu0 %v2788
    %3042 = vmatprep.subr.bf16.mxu0 %v2793
    %3043 = vmatpush1.bf16.msra.mxu0 %v2792
    %3044 = vmatprep.subr.bf16.mxu0 %v2797
    %3045 = vmatpush1.bf16.msra.mxu0 %v2796
    %3046 = vmatprep.subr.bf16.mxu0 %v2801
    %3047 = vmatpush1.bf16.msra.mxu0 %v2800
    %3048 = vmatprep.subr.bf16.mxu0 %v2805
    %3049 = vmatpush1.bf16.msra.mxu0 %v2804
    %3050 = vmatprep.subr.bf16.mxu0 %v2809
    %3051 = vmatpush1.bf16.msra.mxu0 %v2808
    %3052 = vmatprep.subr.bf16.mxu0 %v2813
    %3053 = vmatpush1.bf16.msra.mxu0 %v2812
    %3054 = vmatprep.subr.bf16.mxu0 %v2817
    %3055 = vmatpush1.bf16.msra.mxu0 %v2816
    %3056 = vmatprep.subr.bf16.mxu0 %v2821
    %3057 = vmatpush1.bf16.msra.mxu0 %v2820
    %3058 = vmatprep.subr.bf16.mxu0 %v2825
    %3059 = vmatpush1.bf16.msra.mxu0 %v2824
    %3060 = vmatprep.subr.bf16.mxu0 %v2829
    %3061 = vmatpush1.bf16.msra.mxu0 %v2828
    %3062 = vmatprep.subr.bf16.mxu0 %v2833
    %3063 = vmatpush1.bf16.msra.mxu0 %v2832
    %3064 = vmatprep.subr.bf16.mxu0 %v2837
    %3065 = vmatpush1.bf16.msra.mxu0 %v2836
    %3066 = vmatprep.subr.bf16.mxu0 %v2841
    %3067 = vmatpush1.bf16.msra.mxu0 %v2840
    %3068 = vmatprep.mubr.bf16.mxu0 %v2243
    %3069 = vmatmul.mubr.bf16.gmra.mrb[0].mxu0 %v2242
    %v3070 = vpop.f32.mrb[0].mxu0
    %v3071 = vadd.f32 %v2379, %v3070
    %v3072 = vpop.f32.mrb[0].mxu0
    %v3073 = vadd.f32 %v2383, %v3072
    %v3074 = vpop.f32.mrb[0].mxu0
    %v3075 = vadd.f32 %v2379, %v3074
    %v3076 = vpop.f32.mrb[0].mxu0
    %v3077 = vadd.f32 %v2383, %v3076
    %3078 = vdwg.mxu0
    %3079 = vmatprep.subr.bf16.mxu0 %v2845
    %3080 = vmatpush1.bf16.msra.mxu0 %v2844
    %3081 = vmatprep.subr.bf16.mxu0 %v2849
    %3082 = vmatpush1.bf16.msra.mxu0 %v2848
    %3083 = vmatprep.subr.bf16.mxu0 %v2853
    %3084 = vmatpush1.bf16.msra.mxu0 %v2852
    %3085 = vmatprep.subr.bf16.mxu0 %v2857
    %3086 = vmatpush1.bf16.msra.mxu0 %v2856
    %3087 = vmatprep.subr.bf16.mxu0 %v2861
    %3088 = vmatpush1.bf16.msra.mxu0 %v2860
    %3089 = vmatprep.subr.bf16.mxu0 %v2865
    %3090 = vmatpush1.bf16.msra.mxu0 %v2864
    %3091 = vmatprep.subr.bf16.mxu0 %v2869
    %3092 = vmatpush1.bf16.msra.mxu0 %v2868
    %3093 = vmatprep.subr.bf16.mxu0 %v2873
    %3094 = vmatpush1.bf16.msra.mxu0 %v2872
    %3095 = vmatprep.subr.bf16.mxu0 %v2877
    %3096 = vmatpush1.bf16.msra.mxu0 %v2876
    %3097 = vmatprep.subr.bf16.mxu0 %v2881
    %3098 = vmatpush1.bf16.msra.mxu0 %v2880
    %3099 = vmatprep.subr.bf16.mxu0 %v2885
    %3100 = vmatpush1.bf16.msra.mxu0 %v2884
    %3101 = vmatprep.subr.bf16.mxu0 %v2889
    %3102 = vmatpush1.bf16.msra.mxu0 %v2888
    %3103 = vmatprep.subr.bf16.mxu0 %v2893
    %3104 = vmatpush1.bf16.msra.mxu0 %v2892
    %3105 = vmatprep.subr.bf16.mxu0 %v2897
    %3106 = vmatpush1.bf16.msra.mxu0 %v2896
    %3107 = vmatprep.subr.bf16.mxu0 %v2901
    %3108 = vmatpush1.bf16.msra.mxu0 %v2900
    %3109 = vmatprep.subr.bf16.mxu0 %v2905
    %3110 = vmatpush1.bf16.msra.mxu0 %v2904
    %3111 = vmatprep.mubr.bf16.mxu0 %v2245
    %3112 = vmatmul.mubr.bf16.gmra.mrb[0].mxu0 %v2244
    %v3113 = vpop.f32.mrb[0].mxu0
    %v3114 = vadd.f32 %v3071, %v3113
    %v3115 = vpop.f32.mrb[0].mxu0
    %v3116 = vadd.f32 %v3073, %v3115
    %v3117 = vpop.f32.mrb[0].mxu0
    %v3118 = vadd.f32 %v3075, %v3117
    %v3119 = vpop.f32.mrb[0].mxu0
    %v3120 = vadd.f32 %v3077, %v3119
    %3121 = vdwg.mxu0
    %3122 = vmatprep.subr.bf16.mxu0 %v2783
    %3123 = vmatpush1.bf16.msra.mxu0 %v2782
    %3124 = vmatprep.subr.bf16.mxu0 %v2787
    %3125 = vmatpush1.bf16.msra.mxu0 %v2786
    %3126 = vmatprep.subr.bf16.mxu0 %v2791
    %3127 = vmatpush1.bf16.msra.mxu0 %v2790
    %3128 = vmatprep.subr.bf16.mxu0 %v2795
    %3129 = vmatpush1.bf16.msra.mxu0 %v2794
    %3130 = vmatprep.subr.bf16.mxu0 %v2799
    %3131 = vmatpush1.bf16.msra.mxu0 %v2798
    %3132 = vmatprep.subr.bf16.mxu0 %v2803
    %3133 = vmatpush1.bf16.msra.mxu0 %v2802
    %3134 = vmatprep.subr.bf16.mxu0 %v2807
    %3135 = vmatpush1.bf16.msra.mxu0 %v2806
    %3136 = vmatprep.subr.bf16.mxu0 %v2811
    %3137 = vmatpush1.bf16.msra.mxu0 %v2810
    %3138 = vmatprep.subr.bf16.mxu0 %v2815
    %3139 = vmatpush1.bf16.msra.mxu0 %v2814
    %3140 = vmatprep.subr.bf16.mxu0 %v2819
    %3141 = vmatpush1.bf16.msra.mxu0 %v2818
    %3142 = vmatprep.subr.bf16.mxu0 %v2823
    %3143 = vmatpush1.bf16.msra.mxu0 %v2822
    %3144 = vmatprep.subr.bf16.mxu0 %v2827
    %3145 = vmatpush1.bf16.msra.mxu0 %v2826
    %3146 = vmatprep.subr.bf16.mxu0 %v2831
    %3147 = vmatpush1.bf16.msra.mxu0 %v2830
    %3148 = vmatprep.subr.bf16.mxu0 %v2835
    %3149 = vmatpush1.bf16.msra.mxu0 %v2834
    %3150 = vmatprep.subr.bf16.mxu0 %v2839
    %3151 = vmatpush1.bf16.msra.mxu0 %v2838
    %3152 = vmatprep.subr.bf16.mxu0 %v2843
    %3153 = vmatpush1.bf16.msra.mxu0 %v2842
    %3154 = vmatprep.mubr.bf16.mxu0 %v2243
    %3155 = vmatmul.mubr.bf16.gmra.mrb[0].mxu0 %v2242
    %v3156 = vpop.f32.mrb[0].mxu0
    %v3157 = vadd.f32 %v2387, %v3156
    %v3158 = vpop.f32.mrb[0].mxu0
    %v3159 = vadd.f32 %v2391, %v3158
    %v3160 = vpop.f32.mrb[0].mxu0
    %v3161 = vadd.f32 %v2387, %v3160
    %v3162 = vpop.f32.mrb[0].mxu0
    %v3163 = vadd.f32 %v2391, %v3162
    %3164 = vdwg.mxu0
    %3165 = vmatprep.subr.bf16.mxu0 %v2847
    %3166 = vmatpush1.bf16.msra.mxu0 %v2846
    %3167 = vmatprep.subr.bf16.mxu0 %v2851
    %3168 = vmatpush1.bf16.msra.mxu0 %v2850
    %3169 = vmatprep.subr.bf16.mxu0 %v2855
    %3170 = vmatpush1.bf16.msra.mxu0 %v2854
    %3171 = vmatprep.subr.bf16.mxu0 %v2859
    %3172 = vmatpush1.bf16.msra.mxu0 %v2858
    %3173 = vmatprep.subr.bf16.mxu0 %v2863
    %3174 = vmatpush1.bf16.msra.mxu0 %v2862
    %3175 = vmatprep.subr.bf16.mxu0 %v2867
    %3176 = vmatpush1.bf16.msra.mxu0 %v2866
    %3177 = vmatprep.subr.bf16.mxu0 %v2871
    %3178 = vmatpush1.bf16.msra.mxu0 %v2870
    %3179 = vmatprep.subr.bf16.mxu0 %v2875
    %3180 = vmatpush1.bf16.msra.mxu0 %v2874
    %3181 = vmatprep.subr.bf16.mxu0 %v2879
    %3182 = vmatpush1.bf16.msra.mxu0 %v2878
    %3183 = vmatprep.subr.bf16.mxu0 %v2883
    %3184 = vmatpush1.bf16.msra.mxu0 %v2882
    %3185 = vmatprep.subr.bf16.mxu0 %v2887
    %3186 = vmatpush1.bf16.msra.mxu0 %v2886
    %3187 = vmatprep.subr.bf16.mxu0 %v2891
    %3188 = vmatpush1.bf16.msra.mxu0 %v2890
    %3189 = vmatprep.subr.bf16.mxu0 %v2895
    %3190 = vmatpush1.bf16.msra.mxu0 %v2894
    %3191 = vmatprep.subr.bf16.mxu0 %v2899
    %3192 = vmatpush1.bf16.msra.mxu0 %v2898
    %3193 = vmatprep.subr.bf16.mxu0 %v2903
    %3194 = vmatpush1.bf16.msra.mxu0 %v2902
    %3195 = vmatprep.subr.bf16.mxu0 %v2907
    %3196 = vmatpush1.bf16.msra.mxu0 %v2906
    %3197 = vmatprep.mubr.bf16.mxu0 %v2245
    %3198 = vmatmul.mubr.bf16.gmra.mrb[0].mxu0 %v2244
    %v3199 = vpop.f32.mrb[0].mxu0
    %v3200 = vadd.f32 %v3157, %v3199
    %v3201 = vpop.f32.mrb[0].mxu0
    %v3202 = vadd.f32 %v3159, %v3201
    %v3203 = vpop.f32.mrb[0].mxu0
    %v3204 = vadd.f32 %v3161, %v3203
    %v3205 = vpop.f32.mrb[0].mxu0
    %v3206 = vadd.f32 %v3163, %v3205
    %3207 = vdwg.mxu0
    %v3208 = vmax.f32 %v3114, 0.0
    %v3209 = vmax.f32 %v3116, 0.0
    %v3210 = vmax.f32 %v3200, 0.0
    %v3211 = vmax.f32 %v3202, 0.0
    %v3212 = vmax.f32 %v3118, 0.0
    %v3213 = vmax.f32 %v3120, 0.0
    %v3214 = vmax.f32 %v3204, 0.0
    %v3215 = vmax.f32 %v3206, 0.0
    %v3216 = vpack.c.bf16 %v3212, %v3208
    %v3217 = vpack.c.bf16 %v3213, %v3209
    %v3218 = vpack.c.bf16 %v3214, %v3210
    %v3219 = vpack.c.bf16 %v3215, %v3211
    %v3220 = vld [vmem:[#allocation9] sm:$0xff]
    %v3221 = vld [vmem:[#allocation9 + $0x8] sm:$0xff]
    %v3222 = vld [vmem:[#allocation9 + $0x10] sm:$0xff]
    %v3223 = vld [vmem:[#allocation9 + $0x18] sm:$0xff]
    %v3224 = vld [vmem:[#allocation9 + $0x20] sm:$0xff]
    %v3225 = vld [vmem:[#allocation9 + $0x28] sm:$0xff]
    %v3226 = vld [vmem:[#allocation9 + $0x30] sm:$0xff]
    %v3227 = vld [vmem:[#allocation9 + $0x38] sm:$0xff]
    %v3228 = vld [vmem:[#allocation9 + $0x40] sm:$0xff]
    %v3229 = vld [vmem:[#allocation9 + $0x48] sm:$0xff]
    %v3230 = vld [vmem:[#allocation9 + $0x50] sm:$0xff]
    %v3231 = vld [vmem:[#allocation9 + $0x58] sm:$0xff]
    %v3232 = vld [vmem:[#allocation9 + $0x60] sm:$0xff]
    %v3233 = vld [vmem:[#allocation9 + $0x68] sm:$0xff]
    %v3234 = vld [vmem:[#allocation9 + $0x70] sm:$0xff]
    %v3235 = vld [vmem:[#allocation9 + $0x78] sm:$0xff]
    %v3236 = vld [vmem:[#allocation9 + $0x80] sm:$0xff]
    %v3237 = vld [vmem:[#allocation9 + $0x88] sm:$0xff]
    %v3238 = vld [vmem:[#allocation9 + $0x90] sm:$0xff]
    %v3239 = vld [vmem:[#allocation9 + $0x98] sm:$0xff]
    %v3240 = vld [vmem:[#allocation9 + $0xa0] sm:$0xff]
    %v3241 = vld [vmem:[#allocation9 + $0xa8] sm:$0xff]
    %v3242 = vld [vmem:[#allocation9 + $0xb0] sm:$0xff]
    %v3243 = vld [vmem:[#allocation9 + $0xb8] sm:$0xff]
    %v3244 = vld [vmem:[#allocation9 + $0xc0] sm:$0xff]
    %v3245 = vld [vmem:[#allocation9 + $0xc8] sm:$0xff]
    %v3246 = vld [vmem:[#allocation9 + $0xd0] sm:$0xff]
    %v3247 = vld [vmem:[#allocation9 + $0xd8] sm:$0xff]
    %v3248 = vld [vmem:[#allocation9 + $0xe0] sm:$0xff]
    %v3249 = vld [vmem:[#allocation9 + $0xe8] sm:$0xff]
    %v3250 = vld [vmem:[#allocation9 + $0xf0] sm:$0xff]
    %v3251 = vld [vmem:[#allocation9 + $0xf8] sm:$0xff]
    %v3252 = vld [vmem:[#allocation9 + $0x100] sm:$0xff]
    %v3253 = vld [vmem:[#allocation9 + $0x108] sm:$0xff]
    %v3254 = vld [vmem:[#allocation9 + $0x110] sm:$0xff]
    %v3255 = vld [vmem:[#allocation9 + $0x118] sm:$0xff]
    %v3256 = vld [vmem:[#allocation9 + $0x120] sm:$0xff]
    %v3257 = vld [vmem:[#allocation9 + $0x128] sm:$0xff]
    %v3258 = vld [vmem:[#allocation9 + $0x130] sm:$0xff]
    %v3259 = vld [vmem:[#allocation9 + $0x138] sm:$0xff]
    %v3260 = vld [vmem:[#allocation9 + $0x140] sm:$0xff]
    %v3261 = vld [vmem:[#allocation9 + $0x148] sm:$0xff]
    %v3262 = vld [vmem:[#allocation9 + $0x150] sm:$0xff]
    %v3263 = vld [vmem:[#allocation9 + $0x158] sm:$0xff]
    %v3264 = vld [vmem:[#allocation9 + $0x160] sm:$0xff]
    %v3265 = vld [vmem:[#allocation9 + $0x168] sm:$0xff]
    %v3266 = vld [vmem:[#allocation9 + $0x170] sm:$0xff]
    %v3267 = vld [vmem:[#allocation9 + $0x178] sm:$0xff]
    %v3268 = vld [vmem:[#allocation9 + $0x180] sm:$0xff]
    %v3269 = vld [vmem:[#allocation9 + $0x188] sm:$0xff]
    %v3270 = vld [vmem:[#allocation9 + $0x190] sm:$0xff]
    %v3271 = vld [vmem:[#allocation9 + $0x198] sm:$0xff]
    %v3272 = vld [vmem:[#allocation9 + $0x1a0] sm:$0xff]
    %v3273 = vld [vmem:[#allocation9 + $0x1a8] sm:$0xff]
    %v3274 = vld [vmem:[#allocation9 + $0x1b0] sm:$0xff]
    %v3275 = vld [vmem:[#allocation9 + $0x1b8] sm:$0xff]
    %v3276 = vld [vmem:[#allocation9 + $0x1c0] sm:$0xff]
    %v3277 = vld [vmem:[#allocation9 + $0x1c8] sm:$0xff]
    %v3278 = vld [vmem:[#allocation9 + $0x1d0] sm:$0xff]
    %v3279 = vld [vmem:[#allocation9 + $0x1d8] sm:$0xff]
    %v3280 = vld [vmem:[#allocation9 + $0x1e0] sm:$0xff]
    %v3281 = vld [vmem:[#allocation9 + $0x1e8] sm:$0xff]
    %v3282 = vld [vmem:[#allocation9 + $0x1f0] sm:$0xff]
    %v3283 = vld [vmem:[#allocation9 + $0x1f8] sm:$0xff]
    %v3284 = vld [vmem:[#allocation9 + $0x200] sm:$0xff]
    %v3285 = vld [vmem:[#allocation9 + $0x208] sm:$0xff]
    %v3286 = vld [vmem:[#allocation9 + $0x210] sm:$0xff]
    %v3287 = vld [vmem:[#allocation9 + $0x218] sm:$0xff]
    %v3288 = vld [vmem:[#allocation9 + $0x220] sm:$0xff]
    %v3289 = vld [vmem:[#allocation9 + $0x228] sm:$0xff]
    %v3290 = vld [vmem:[#allocation9 + $0x230] sm:$0xff]
    %v3291 = vld [vmem:[#allocation9 + $0x238] sm:$0xff]
    %v3292 = vld [vmem:[#allocation9 + $0x240] sm:$0xff]
    %v3293 = vld [vmem:[#allocation9 + $0x248] sm:$0xff]
    %v3294 = vld [vmem:[#allocation9 + $0x250] sm:$0xff]
    %v3295 = vld [vmem:[#allocation9 + $0x258] sm:$0xff]
    %v3296 = vld [vmem:[#allocation9 + $0x260] sm:$0xff]
    %v3297 = vld [vmem:[#allocation9 + $0x268] sm:$0xff]
    %v3298 = vld [vmem:[#allocation9 + $0x270] sm:$0xff]
    %v3299 = vld [vmem:[#allocation9 + $0x278] sm:$0xff]
    %v3300 = vld [vmem:[#allocation9 + $0x280] sm:$0xff]
    %v3301 = vld [vmem:[#allocation9 + $0x288] sm:$0xff]
    %v3302 = vld [vmem:[#allocation9 + $0x290] sm:$0xff]
    %v3303 = vld [vmem:[#allocation9 + $0x298] sm:$0xff]
    %v3304 = vld [vmem:[#allocation9 + $0x2a0] sm:$0xff]
    %v3305 = vld [vmem:[#allocation9 + $0x2a8] sm:$0xff]
    %v3306 = vld [vmem:[#allocation9 + $0x2b0] sm:$0xff]
    %v3307 = vld [vmem:[#allocation9 + $0x2b8] sm:$0xff]
    %v3308 = vld [vmem:[#allocation9 + $0x2c0] sm:$0xff]
    %v3309 = vld [vmem:[#allocation9 + $0x2c8] sm:$0xff]
    %v3310 = vld [vmem:[#allocation9 + $0x2d0] sm:$0xff]
    %v3311 = vld [vmem:[#allocation9 + $0x2d8] sm:$0xff]
    %v3312 = vld [vmem:[#allocation9 + $0x2e0] sm:$0xff]
    %v3313 = vld [vmem:[#allocation9 + $0x2e8] sm:$0xff]
    %v3314 = vld [vmem:[#allocation9 + $0x2f0] sm:$0xff]
    %v3315 = vld [vmem:[#allocation9 + $0x2f8] sm:$0xff]
    %v3316 = vld [vmem:[#allocation9 + $0x300] sm:$0xff]
    %v3317 = vld [vmem:[#allocation9 + $0x308] sm:$0xff]
    %v3318 = vld [vmem:[#allocation9 + $0x310] sm:$0xff]
    %v3319 = vld [vmem:[#allocation9 + $0x318] sm:$0xff]
    %v3320 = vld [vmem:[#allocation9 + $0x320] sm:$0xff]
    %v3321 = vld [vmem:[#allocation9 + $0x328] sm:$0xff]
    %v3322 = vld [vmem:[#allocation9 + $0x330] sm:$0xff]
    %v3323 = vld [vmem:[#allocation9 + $0x338] sm:$0xff]
    %v3324 = vld [vmem:[#allocation9 + $0x340] sm:$0xff]
    %v3325 = vld [vmem:[#allocation9 + $0x348] sm:$0xff]
    %v3326 = vld [vmem:[#allocation9 + $0x350] sm:$0xff]
    %v3327 = vld [vmem:[#allocation9 + $0x358] sm:$0xff]
    %v3328 = vld [vmem:[#allocation9 + $0x360] sm:$0xff]
    %v3329 = vld [vmem:[#allocation9 + $0x368] sm:$0xff]
    %v3330 = vld [vmem:[#allocation9 + $0x370] sm:$0xff]
    %v3331 = vld [vmem:[#allocation9 + $0x378] sm:$0xff]
    %v3332 = vld [vmem:[#allocation9 + $0x380] sm:$0xff]
    %v3333 = vld [vmem:[#allocation9 + $0x388] sm:$0xff]
    %v3334 = vld [vmem:[#allocation9 + $0x390] sm:$0xff]
    %v3335 = vld [vmem:[#allocation9 + $0x398] sm:$0xff]
    %v3336 = vld [vmem:[#allocation9 + $0x3a0] sm:$0xff]
    %v3337 = vld [vmem:[#allocation9 + $0x3a8] sm:$0xff]
    %v3338 = vld [vmem:[#allocation9 + $0x3b0] sm:$0xff]
    %v3339 = vld [vmem:[#allocation9 + $0x3b8] sm:$0xff]
    %v3340 = vld [vmem:[#allocation9 + $0x3c0] sm:$0xff]
    %v3341 = vld [vmem:[#allocation9 + $0x3c8] sm:$0xff]
    %v3342 = vld [vmem:[#allocation9 + $0x3d0] sm:$0xff]
    %v3343 = vld [vmem:[#allocation9 + $0x3d8] sm:$0xff]
    %v3344 = vld [vmem:[#allocation9 + $0x3e0] sm:$0xff]
    %v3345 = vld [vmem:[#allocation9 + $0x3e8] sm:$0xff]
    %v3346 = vld [vmem:[#allocation9 + $0x3f0] sm:$0xff]
    %v3347 = vld [vmem:[#allocation9 + $0x3f8] sm:$0xff]
    %v3348 = vld [vmem:[%s10] sm:$0xf]
    %v3350 = vlaneseq
    %v3351 = vshrl.u32 %v3350, 7
    %v3352 = vsub.s32 0, %v3351
    %v3353 = vrot.slane %v3348, %v3352
    %v3354 = vlaneseq
    %v3355 = vshrl.u32 %v3354, 7
    %v3356 = vsub.s32 1, %v3355
    %v3357 = vrot.slane %v3348, %v3356
    %v3358 = vlaneseq
    %v3359 = vshrl.u32 %v3358, 7
    %v3360 = vsub.s32 2, %v3359
    %v3361 = vrot.slane %v3348, %v3360
    %v3362 = vlaneseq
    %v3363 = vshrl.u32 %v3362, 7
    %v3364 = vsub.s32 3, %v3363
    %v3365 = vrot.slane %v3348, %v3364
    %v3498 = vunpack.c.l.b16 %v3220
    %v3499 = vunpack.c.h.b16 %v3220
    %v3500 = vunpack.c.l.b16 %v3221
    %v3501 = vunpack.c.h.b16 %v3221
    %v3502 = vunpack.c.l.b16 %v3222
    %v3503 = vunpack.c.h.b16 %v3222
    %v3504 = vunpack.c.l.b16 %v3223
    %v3505 = vunpack.c.h.b16 %v3223
    %v3506 = vunpack.c.l.b16 %v3224
    %v3507 = vunpack.c.h.b16 %v3224
    %v3508 = vunpack.c.l.b16 %v3225
    %v3509 = vunpack.c.h.b16 %v3225
    %v3510 = vunpack.c.l.b16 %v3226
    %v3511 = vunpack.c.h.b16 %v3226
    %v3512 = vunpack.c.l.b16 %v3227
    %v3513 = vunpack.c.h.b16 %v3227
    %v3514 = vunpack.c.l.b16 %v3228
    %v3515 = vunpack.c.h.b16 %v3228
    %v3516 = vunpack.c.l.b16 %v3229
    %v3517 = vunpack.c.h.b16 %v3229
    %v3518 = vunpack.c.l.b16 %v3230
    %v3519 = vunpack.c.h.b16 %v3230
    %v3520 = vunpack.c.l.b16 %v3231
    %v3521 = vunpack.c.h.b16 %v3231
    %v3522 = vunpack.c.l.b16 %v3232
    %v3523 = vunpack.c.h.b16 %v3232
    %v3524 = vunpack.c.l.b16 %v3233
    %v3525 = vunpack.c.h.b16 %v3233
    %v3526 = vunpack.c.l.b16 %v3234
    %v3527 = vunpack.c.h.b16 %v3234
    %v3528 = vunpack.c.l.b16 %v3235
    %v3529 = vunpack.c.h.b16 %v3235
    %v3530 = vunpack.c.l.b16 %v3236
    %v3531 = vunpack.c.h.b16 %v3236
    %v3532 = vunpack.c.l.b16 %v3237
    %v3533 = vunpack.c.h.b16 %v3237
    %v3534 = vunpack.c.l.b16 %v3238
    %v3535 = vunpack.c.h.b16 %v3238
    %v3536 = vunpack.c.l.b16 %v3239
    %v3537 = vunpack.c.h.b16 %v3239
    %v3538 = vunpack.c.l.b16 %v3240
    %v3539 = vunpack.c.h.b16 %v3240
    %v3540 = vunpack.c.l.b16 %v3241
    %v3541 = vunpack.c.h.b16 %v3241
    %v3542 = vunpack.c.l.b16 %v3242
    %v3543 = vunpack.c.h.b16 %v3242
    %v3544 = vunpack.c.l.b16 %v3243
    %v3545 = vunpack.c.h.b16 %v3243
    %v3546 = vunpack.c.l.b16 %v3244
    %v3547 = vunpack.c.h.b16 %v3244
    %v3548 = vunpack.c.l.b16 %v3245
    %v3549 = vunpack.c.h.b16 %v3245
    %v3550 = vunpack.c.l.b16 %v3246
    %v3551 = vunpack.c.h.b16 %v3246
    %v3552 = vunpack.c.l.b16 %v3247
    %v3553 = vunpack.c.h.b16 %v3247
    %v3554 = vunpack.c.l.b16 %v3248
    %v3555 = vunpack.c.h.b16 %v3248
    %v3556 = vunpack.c.l.b16 %v3249
    %v3557 = vunpack.c.h.b16 %v3249
    %v3558 = vunpack.c.l.b16 %v3250
    %v3559 = vunpack.c.h.b16 %v3250
    %v3560 = vunpack.c.l.b16 %v3251
    %v3561 = vunpack.c.h.b16 %v3251
    %v3562 = vunpack.c.l.b16 %v3252
    %v3563 = vunpack.c.h.b16 %v3252
    %v3564 = vunpack.c.l.b16 %v3253
    %v3565 = vunpack.c.h.b16 %v3253
    %v3566 = vunpack.c.l.b16 %v3254
    %v3567 = vunpack.c.h.b16 %v3254
    %v3568 = vunpack.c.l.b16 %v3255
    %v3569 = vunpack.c.h.b16 %v3255
    %v3570 = vunpack.c.l.b16 %v3256
    %v3571 = vunpack.c.h.b16 %v3256
    %v3572 = vunpack.c.l.b16 %v3257
    %v3573 = vunpack.c.h.b16 %v3257
    %v3574 = vunpack.c.l.b16 %v3258
    %v3575 = vunpack.c.h.b16 %v3258
    %v3576 = vunpack.c.l.b16 %v3259
    %v3577 = vunpack.c.h.b16 %v3259
    %v3578 = vunpack.c.l.b16 %v3260
    %v3579 = vunpack.c.h.b16 %v3260
    %v3580 = vunpack.c.l.b16 %v3261
    %v3581 = vunpack.c.h.b16 %v3261
    %v3582 = vunpack.c.l.b16 %v3262
    %v3583 = vunpack.c.h.b16 %v3262
    %v3584 = vunpack.c.l.b16 %v3263
    %v3585 = vunpack.c.h.b16 %v3263
    %v3586 = vunpack.c.l.b16 %v3264
    %v3587 = vunpack.c.h.b16 %v3264
    %v3588 = vunpack.c.l.b16 %v3265
    %v3589 = vunpack.c.h.b16 %v3265
    %v3590 = vunpack.c.l.b16 %v3266
    %v3591 = vunpack.c.h.b16 %v3266
    %v3592 = vunpack.c.l.b16 %v3267
    %v3593 = vunpack.c.h.b16 %v3267
    %v3594 = vunpack.c.l.b16 %v3268
    %v3595 = vunpack.c.h.b16 %v3268
    %v3596 = vunpack.c.l.b16 %v3269
    %v3597 = vunpack.c.h.b16 %v3269
    %v3598 = vunpack.c.l.b16 %v3270
    %v3599 = vunpack.c.h.b16 %v3270
    %v3600 = vunpack.c.l.b16 %v3271
    %v3601 = vunpack.c.h.b16 %v3271
    %v3602 = vunpack.c.l.b16 %v3272
    %v3603 = vunpack.c.h.b16 %v3272
    %v3604 = vunpack.c.l.b16 %v3273
    %v3605 = vunpack.c.h.b16 %v3273
    %v3606 = vunpack.c.l.b16 %v3274
    %v3607 = vunpack.c.h.b16 %v3274
    %v3608 = vunpack.c.l.b16 %v3275
    %v3609 = vunpack.c.h.b16 %v3275
    %v3610 = vunpack.c.l.b16 %v3276
    %v3611 = vunpack.c.h.b16 %v3276
    %v3612 = vunpack.c.l.b16 %v3277
    %v3613 = vunpack.c.h.b16 %v3277
    %v3614 = vunpack.c.l.b16 %v3278
    %v3615 = vunpack.c.h.b16 %v3278
    %v3616 = vunpack.c.l.b16 %v3279
    %v3617 = vunpack.c.h.b16 %v3279
    %v3618 = vunpack.c.l.b16 %v3280
    %v3619 = vunpack.c.h.b16 %v3280
    %v3620 = vunpack.c.l.b16 %v3281
    %v3621 = vunpack.c.h.b16 %v3281
    %v3622 = vunpack.c.l.b16 %v3282
    %v3623 = vunpack.c.h.b16 %v3282
    %v3624 = vunpack.c.l.b16 %v3283
    %v3625 = vunpack.c.h.b16 %v3283
    %v3626 = vunpack.c.l.b16 %v3284
    %v3627 = vunpack.c.h.b16 %v3284
    %v3628 = vunpack.c.l.b16 %v3285
    %v3629 = vunpack.c.h.b16 %v3285
    %v3630 = vunpack.c.l.b16 %v3286
    %v3631 = vunpack.c.h.b16 %v3286
    %v3632 = vunpack.c.l.b16 %v3287
    %v3633 = vunpack.c.h.b16 %v3287
    %v3634 = vunpack.c.l.b16 %v3288
    %v3635 = vunpack.c.h.b16 %v3288
    %v3636 = vunpack.c.l.b16 %v3289
    %v3637 = vunpack.c.h.b16 %v3289
    %v3638 = vunpack.c.l.b16 %v3290
    %v3639 = vunpack.c.h.b16 %v3290
    %v3640 = vunpack.c.l.b16 %v3291
    %v3641 = vunpack.c.h.b16 %v3291
    %v3642 = vunpack.c.l.b16 %v3292
    %v3643 = vunpack.c.h.b16 %v3292
    %v3644 = vunpack.c.l.b16 %v3293
    %v3645 = vunpack.c.h.b16 %v3293
    %v3646 = vunpack.c.l.b16 %v3294
    %v3647 = vunpack.c.h.b16 %v3294
    %v3648 = vunpack.c.l.b16 %v3295
    %v3649 = vunpack.c.h.b16 %v3295
    %v3650 = vunpack.c.l.b16 %v3296
    %v3651 = vunpack.c.h.b16 %v3296
    %v3652 = vunpack.c.l.b16 %v3297
    %v3653 = vunpack.c.h.b16 %v3297
    %v3654 = vunpack.c.l.b16 %v3298
    %v3655 = vunpack.c.h.b16 %v3298
    %v3656 = vunpack.c.l.b16 %v3299
    %v3657 = vunpack.c.h.b16 %v3299
    %v3658 = vunpack.c.l.b16 %v3300
    %v3659 = vunpack.c.h.b16 %v3300
    %v3660 = vunpack.c.l.b16 %v3301
    %v3661 = vunpack.c.h.b16 %v3301
    %v3662 = vunpack.c.l.b16 %v3302
    %v3663 = vunpack.c.h.b16 %v3302
    %v3664 = vunpack.c.l.b16 %v3303
    %v3665 = vunpack.c.h.b16 %v3303
    %v3666 = vunpack.c.l.b16 %v3304
    %v3667 = vunpack.c.h.b16 %v3304
    %v3668 = vunpack.c.l.b16 %v3305
    %v3669 = vunpack.c.h.b16 %v3305
    %v3670 = vunpack.c.l.b16 %v3306
    %v3671 = vunpack.c.h.b16 %v3306
    %v3672 = vunpack.c.l.b16 %v3307
    %v3673 = vunpack.c.h.b16 %v3307
    %v3674 = vunpack.c.l.b16 %v3308
    %v3675 = vunpack.c.h.b16 %v3308
    %v3676 = vunpack.c.l.b16 %v3309
    %v3677 = vunpack.c.h.b16 %v3309
    %v3678 = vunpack.c.l.b16 %v3310
    %v3679 = vunpack.c.h.b16 %v3310
    %v3680 = vunpack.c.l.b16 %v3311
    %v3681 = vunpack.c.h.b16 %v3311
    %v3682 = vunpack.c.l.b16 %v3312
    %v3683 = vunpack.c.h.b16 %v3312
    %v3684 = vunpack.c.l.b16 %v3313
    %v3685 = vunpack.c.h.b16 %v3313
    %v3686 = vunpack.c.l.b16 %v3314
    %v3687 = vunpack.c.h.b16 %v3314
    %v3688 = vunpack.c.l.b16 %v3315
    %v3689 = vunpack.c.h.b16 %v3315
    %v3690 = vunpack.c.l.b16 %v3316
    %v3691 = vunpack.c.h.b16 %v3316
    %v3692 = vunpack.c.l.b16 %v3317
    %v3693 = vunpack.c.h.b16 %v3317
    %v3694 = vunpack.c.l.b16 %v3318
    %v3695 = vunpack.c.h.b16 %v3318
    %v3696 = vunpack.c.l.b16 %v3319
    %v3697 = vunpack.c.h.b16 %v3319
    %v3698 = vunpack.c.l.b16 %v3320
    %v3699 = vunpack.c.h.b16 %v3320
    %v3700 = vunpack.c.l.b16 %v3321
    %v3701 = vunpack.c.h.b16 %v3321
    %v3702 = vunpack.c.l.b16 %v3322
    %v3703 = vunpack.c.h.b16 %v3322
    %v3704 = vunpack.c.l.b16 %v3323
    %v3705 = vunpack.c.h.b16 %v3323
    %v3706 = vunpack.c.l.b16 %v3324
    %v3707 = vunpack.c.h.b16 %v3324
    %v3708 = vunpack.c.l.b16 %v3325
    %v3709 = vunpack.c.h.b16 %v3325
    %v3710 = vunpack.c.l.b16 %v3326
    %v3711 = vunpack.c.h.b16 %v3326
    %v3712 = vunpack.c.l.b16 %v3327
    %v3713 = vunpack.c.h.b16 %v3327
    %v3714 = vunpack.c.l.b16 %v3328
    %v3715 = vunpack.c.h.b16 %v3328
    %v3716 = vunpack.c.l.b16 %v3329
    %v3717 = vunpack.c.h.b16 %v3329
    %v3718 = vunpack.c.l.b16 %v3330
    %v3719 = vunpack.c.h.b16 %v3330
    %v3720 = vunpack.c.l.b16 %v3331
    %v3721 = vunpack.c.h.b16 %v3331
    %v3722 = vunpack.c.l.b16 %v3332
    %v3723 = vunpack.c.h.b16 %v3332
    %v3724 = vunpack.c.l.b16 %v3333
    %v3725 = vunpack.c.h.b16 %v3333
    %v3726 = vunpack.c.l.b16 %v3334
    %v3727 = vunpack.c.h.b16 %v3334
    %v3728 = vunpack.c.l.b16 %v3335
    %v3729 = vunpack.c.h.b16 %v3335
    %v3730 = vunpack.c.l.b16 %v3336
    %v3731 = vunpack.c.h.b16 %v3336
    %v3732 = vunpack.c.l.b16 %v3337
    %v3733 = vunpack.c.h.b16 %v3337
    %v3734 = vunpack.c.l.b16 %v3338
    %v3735 = vunpack.c.h.b16 %v3338
    %v3736 = vunpack.c.l.b16 %v3339
    %v3737 = vunpack.c.h.b16 %v3339
    %v3738 = vunpack.c.l.b16 %v3340
    %v3739 = vunpack.c.h.b16 %v3340
    %v3740 = vunpack.c.l.b16 %v3341
    %v3741 = vunpack.c.h.b16 %v3341
    %v3742 = vunpack.c.l.b16 %v3342
    %v3743 = vunpack.c.h.b16 %v3342
    %v3744 = vunpack.c.l.b16 %v3343
    %v3745 = vunpack.c.h.b16 %v3343
    %v3746 = vunpack.c.l.b16 %v3344
    %v3747 = vunpack.c.h.b16 %v3344
    %v3748 = vunpack.c.l.b16 %v3345
    %v3749 = vunpack.c.h.b16 %v3345
    %v3750 = vunpack.c.l.b16 %v3346
    %v3751 = vunpack.c.h.b16 %v3346
    %v3752 = vunpack.c.l.b16 %v3347
    %v3753 = vunpack.c.h.b16 %v3347
    %v3754 = vpack.c.b16 %v3502, %v3498
    %v3755 = vpack.c.b16 %v3503, %v3499
    %v3756 = vpack.c.b16 %v3504, %v3500
    %v3757 = vpack.c.b16 %v3505, %v3501
    %v3758 = vpack.c.b16 %v3510, %v3506
    %v3759 = vpack.c.b16 %v3511, %v3507
    %v3760 = vpack.c.b16 %v3512, %v3508
    %v3761 = vpack.c.b16 %v3513, %v3509
    %v3762 = vpack.c.b16 %v3518, %v3514
    %v3763 = vpack.c.b16 %v3519, %v3515
    %v3764 = vpack.c.b16 %v3520, %v3516
    %v3765 = vpack.c.b16 %v3521, %v3517
    %v3766 = vpack.c.b16 %v3526, %v3522
    %v3767 = vpack.c.b16 %v3527, %v3523
    %v3768 = vpack.c.b16 %v3528, %v3524
    %v3769 = vpack.c.b16 %v3529, %v3525
    %v3770 = vpack.c.b16 %v3534, %v3530
    %v3771 = vpack.c.b16 %v3535, %v3531
    %v3772 = vpack.c.b16 %v3536, %v3532
    %v3773 = vpack.c.b16 %v3537, %v3533
    %v3774 = vpack.c.b16 %v3542, %v3538
    %v3775 = vpack.c.b16 %v3543, %v3539
    %v3776 = vpack.c.b16 %v3544, %v3540
    %v3777 = vpack.c.b16 %v3545, %v3541
    %v3778 = vpack.c.b16 %v3550, %v3546
    %v3779 = vpack.c.b16 %v3551, %v3547
    %v3780 = vpack.c.b16 %v3552, %v3548
    %v3781 = vpack.c.b16 %v3553, %v3549
    %v3782 = vpack.c.b16 %v3558, %v3554
    %v3783 = vpack.c.b16 %v3559, %v3555
    %v3784 = vpack.c.b16 %v3560, %v3556
    %v3785 = vpack.c.b16 %v3561, %v3557
    %v3786 = vpack.c.b16 %v3566, %v3562
    %v3787 = vpack.c.b16 %v3567, %v3563
    %v3788 = vpack.c.b16 %v3568, %v3564
    %v3789 = vpack.c.b16 %v3569, %v3565
    %v3790 = vpack.c.b16 %v3574, %v3570
    %v3791 = vpack.c.b16 %v3575, %v3571
    %v3792 = vpack.c.b16 %v3576, %v3572
    %v3793 = vpack.c.b16 %v3577, %v3573
    %v3794 = vpack.c.b16 %v3582, %v3578
    %v3795 = vpack.c.b16 %v3583, %v3579
    %v3796 = vpack.c.b16 %v3584, %v3580
    %v3797 = vpack.c.b16 %v3585, %v3581
    %v3798 = vpack.c.b16 %v3590, %v3586
    %v3799 = vpack.c.b16 %v3591, %v3587
    %v3800 = vpack.c.b16 %v3592, %v3588
    %v3801 = vpack.c.b16 %v3593, %v3589
    %v3802 = vpack.c.b16 %v3598, %v3594
    %v3803 = vpack.c.b16 %v3599, %v3595
    %v3804 = vpack.c.b16 %v3600, %v3596
    %v3805 = vpack.c.b16 %v3601, %v3597
    %v3806 = vpack.c.b16 %v3606, %v3602
    %v3807 = vpack.c.b16 %v3607, %v3603
    %v3808 = vpack.c.b16 %v3608, %v3604
    %v3809 = vpack.c.b16 %v3609, %v3605
    %v3810 = vpack.c.b16 %v3614, %v3610
    %v3811 = vpack.c.b16 %v3615, %v3611
    %v3812 = vpack.c.b16 %v3616, %v3612
    %v3813 = vpack.c.b16 %v3617, %v3613
    %v3814 = vpack.c.b16 %v3622, %v3618
    %v3815 = vpack.c.b16 %v3623, %v3619
    %v3816 = vpack.c.b16 %v3624, %v3620
    %v3817 = vpack.c.b16 %v3625, %v3621
    %v3818 = vpack.c.b16 %v3630, %v3626
    %v3819 = vpack.c.b16 %v3631, %v3627
    %v3820 = vpack.c.b16 %v3632, %v3628
    %v3821 = vpack.c.b16 %v3633, %v3629
    %v3822 = vpack.c.b16 %v3638, %v3634
    %v3823 = vpack.c.b16 %v3639, %v3635
    %v3824 = vpack.c.b16 %v3640, %v3636
    %v3825 = vpack.c.b16 %v3641, %v3637
    %v3826 = vpack.c.b16 %v3646, %v3642
    %v3827 = vpack.c.b16 %v3647, %v3643
    %v3828 = vpack.c.b16 %v3648, %v3644
    %v3829 = vpack.c.b16 %v3649, %v3645
    %v3830 = vpack.c.b16 %v3654, %v3650
    %v3831 = vpack.c.b16 %v3655, %v3651
    %v3832 = vpack.c.b16 %v3656, %v3652
    %v3833 = vpack.c.b16 %v3657, %v3653
    %v3834 = vpack.c.b16 %v3662, %v3658
    %v3835 = vpack.c.b16 %v3663, %v3659
    %v3836 = vpack.c.b16 %v3664, %v3660
    %v3837 = vpack.c.b16 %v3665, %v3661
    %v3838 = vpack.c.b16 %v3670, %v3666
    %v3839 = vpack.c.b16 %v3671, %v3667
    %v3840 = vpack.c.b16 %v3672, %v3668
    %v3841 = vpack.c.b16 %v3673, %v3669
    %v3842 = vpack.c.b16 %v3678, %v3674
    %v3843 = vpack.c.b16 %v3679, %v3675
    %v3844 = vpack.c.b16 %v3680, %v3676
    %v3845 = vpack.c.b16 %v3681, %v3677
    %v3846 = vpack.c.b16 %v3686, %v3682
    %v3847 = vpack.c.b16 %v3687, %v3683
    %v3848 = vpack.c.b16 %v3688, %v3684
    %v3849 = vpack.c.b16 %v3689, %v3685
    %v3850 = vpack.c.b16 %v3694, %v3690
    %v3851 = vpack.c.b16 %v3695, %v3691
    %v3852 = vpack.c.b16 %v3696, %v3692
    %v3853 = vpack.c.b16 %v3697, %v3693
    %v3854 = vpack.c.b16 %v3702, %v3698
    %v3855 = vpack.c.b16 %v3703, %v3699
    %v3856 = vpack.c.b16 %v3704, %v3700
    %v3857 = vpack.c.b16 %v3705, %v3701
    %v3858 = vpack.c.b16 %v3710, %v3706
    %v3859 = vpack.c.b16 %v3711, %v3707
    %v3860 = vpack.c.b16 %v3712, %v3708
    %v3861 = vpack.c.b16 %v3713, %v3709
    %v3862 = vpack.c.b16 %v3718, %v3714
    %v3863 = vpack.c.b16 %v3719, %v3715
    %v3864 = vpack.c.b16 %v3720, %v3716
    %v3865 = vpack.c.b16 %v3721, %v3717
    %v3866 = vpack.c.b16 %v3726, %v3722
    %v3867 = vpack.c.b16 %v3727, %v3723
    %v3868 = vpack.c.b16 %v3728, %v3724
    %v3869 = vpack.c.b16 %v3729, %v3725
    %v3870 = vpack.c.b16 %v3734, %v3730
    %v3871 = vpack.c.b16 %v3735, %v3731
    %v3872 = vpack.c.b16 %v3736, %v3732
    %v3873 = vpack.c.b16 %v3737, %v3733
    %v3874 = vpack.c.b16 %v3742, %v3738
    %v3875 = vpack.c.b16 %v3743, %v3739
    %v3876 = vpack.c.b16 %v3744, %v3740
    %v3877 = vpack.c.b16 %v3745, %v3741
    %v3878 = vpack.c.b16 %v3750, %v3746
    %v3879 = vpack.c.b16 %v3751, %v3747
    %v3880 = vpack.c.b16 %v3752, %v3748
    %v3881 = vpack.c.b16 %v3753, %v3749
    %4010 = vmatprep.subr.bf16.mxu0 %v3755
    %4011 = vmatpush1.bf16.msra.mxu0 %v3754
    %4012 = vmatprep.subr.bf16.mxu0 %v3759
    %4013 = vmatpush1.bf16.msra.mxu0 %v3758
    %4014 = vmatprep.subr.bf16.mxu0 %v3763
    %4015 = vmatpush1.bf16.msra.mxu0 %v3762
    %4016 = vmatprep.subr.bf16.mxu0 %v3767
    %4017 = vmatpush1.bf16.msra.mxu0 %v3766
    %4018 = vmatprep.subr.bf16.mxu0 %v3771
    %4019 = vmatpush1.bf16.msra.mxu0 %v3770
    %4020 = vmatprep.subr.bf16.mxu0 %v3775
    %4021 = vmatpush1.bf16.msra.mxu0 %v3774
    %4022 = vmatprep.subr.bf16.mxu0 %v3779
    %4023 = vmatpush1.bf16.msra.mxu0 %v3778
    %4024 = vmatprep.subr.bf16.mxu0 %v3783
    %4025 = vmatpush1.bf16.msra.mxu0 %v3782
    %4026 = vmatprep.subr.bf16.mxu0 %v3787
    %4027 = vmatpush1.bf16.msra.mxu0 %v3786
    %4028 = vmatprep.subr.bf16.mxu0 %v3791
    %4029 = vmatpush1.bf16.msra.mxu0 %v3790
    %4030 = vmatprep.subr.bf16.mxu0 %v3795
    %4031 = vmatpush1.bf16.msra.mxu0 %v3794
    %4032 = vmatprep.subr.bf16.mxu0 %v3799
    %4033 = vmatpush1.bf16.msra.mxu0 %v3798
    %4034 = vmatprep.subr.bf16.mxu0 %v3803
    %4035 = vmatpush1.bf16.msra.mxu0 %v3802
    %4036 = vmatprep.subr.bf16.mxu0 %v3807
    %4037 = vmatpush1.bf16.msra.mxu0 %v3806
    %4038 = vmatprep.subr.bf16.mxu0 %v3811
    %4039 = vmatpush1.bf16.msra.mxu0 %v3810
    %4040 = vmatprep.subr.bf16.mxu0 %v3815
    %4041 = vmatpush1.bf16.msra.mxu0 %v3814
    %4042 = vmatprep.mubr.bf16.mxu0 %v3217
    %4043 = vmatmul.mubr.bf16.gmra.mrb[0].mxu0 %v3216
    %v4044 = vpop.f32.mrb[0].mxu0
    %v4045 = vadd.f32 %v3353, %v4044
    %v4046 = vpop.f32.mrb[0].mxu0
    %v4047 = vadd.f32 %v3357, %v4046
    %v4048 = vpop.f32.mrb[0].mxu0
    %v4049 = vadd.f32 %v3353, %v4048
    %v4050 = vpop.f32.mrb[0].mxu0
    %v4051 = vadd.f32 %v3357, %v4050
    %4052 = vdwg.mxu0
    %4053 = vmatprep.subr.bf16.mxu0 %v3819
    %4054 = vmatpush1.bf16.msra.mxu0 %v3818
    %4055 = vmatprep.subr.bf16.mxu0 %v3823
    %4056 = vmatpush1.bf16.msra.mxu0 %v3822
    %4057 = vmatprep.subr.bf16.mxu0 %v3827
    %4058 = vmatpush1.bf16.msra.mxu0 %v3826
    %4059 = vmatprep.subr.bf16.mxu0 %v3831
    %4060 = vmatpush1.bf16.msra.mxu0 %v3830
    %4061 = vmatprep.subr.bf16.mxu0 %v3835
    %4062 = vmatpush1.bf16.msra.mxu0 %v3834
    %4063 = vmatprep.subr.bf16.mxu0 %v3839
    %4064 = vmatpush1.bf16.msra.mxu0 %v3838
    %4065 = vmatprep.subr.bf16.mxu0 %v3843
    %4066 = vmatpush1.bf16.msra.mxu0 %v3842
    %4067 = vmatprep.subr.bf16.mxu0 %v3847
    %4068 = vmatpush1.bf16.msra.mxu0 %v3846
    %4069 = vmatprep.subr.bf16.mxu0 %v3851
    %4070 = vmatpush1.bf16.msra.mxu0 %v3850
    %4071 = vmatprep.subr.bf16.mxu0 %v3855
    %4072 = vmatpush1.bf16.msra.mxu0 %v3854
    %4073 = vmatprep.subr.bf16.mxu0 %v3859
    %4074 = vmatpush1.bf16.msra.mxu0 %v3858
    %4075 = vmatprep.subr.bf16.mxu0 %v3863
    %4076 = vmatpush1.bf16.msra.mxu0 %v3862
    %4077 = vmatprep.subr.bf16.mxu0 %v3867
    %4078 = vmatpush1.bf16.msra.mxu0 %v3866
    %4079 = vmatprep.subr.bf16.mxu0 %v3871
    %4080 = vmatpush1.bf16.msra.mxu0 %v3870
    %4081 = vmatprep.subr.bf16.mxu0 %v3875
    %4082 = vmatpush1.bf16.msra.mxu0 %v3874
    %4083 = vmatprep.subr.bf16.mxu0 %v3879
    %4084 = vmatpush1.bf16.msra.mxu0 %v3878
    %4085 = vmatprep.mubr.bf16.mxu0 %v3219
    %4086 = vmatmul.mubr.bf16.gmra.mrb[0].mxu0 %v3218
    %v4087 = vpop.f32.mrb[0].mxu0
    %v4088 = vadd.f32 %v4045, %v4087
    %v4089 = vpop.f32.mrb[0].mxu0
    %v4090 = vadd.f32 %v4047, %v4089
    %v4091 = vpop.f32.mrb[0].mxu0
    %v4092 = vadd.f32 %v4049, %v4091
    %v4093 = vpop.f32.mrb[0].mxu0
    %v4094 = vadd.f32 %v4051, %v4093
    %4095 = vdwg.mxu0
    %4096 = vmatprep.subr.bf16.mxu0 %v3757
    %4097 = vmatpush1.bf16.msra.mxu0 %v3756
    %4098 = vmatprep.subr.bf16.mxu0 %v3761
    %4099 = vmatpush1.bf16.msra.mxu0 %v3760
    %4100 = vmatprep.subr.bf16.mxu0 %v3765
    %4101 = vmatpush1.bf16.msra.mxu0 %v3764
    %4102 = vmatprep.subr.bf16.mxu0 %v3769
    %4103 = vmatpush1.bf16.msra.mxu0 %v3768
    %4104 = vmatprep.subr.bf16.mxu0 %v3773
    %4105 = vmatpush1.bf16.msra.mxu0 %v3772
    %4106 = vmatprep.subr.bf16.mxu0 %v3777
    %4107 = vmatpush1.bf16.msra.mxu0 %v3776
    %4108 = vmatprep.subr.bf16.mxu0 %v3781
    %4109 = vmatpush1.bf16.msra.mxu0 %v3780
    %4110 = vmatprep.subr.bf16.mxu0 %v3785
    %4111 = vmatpush1.bf16.msra.mxu0 %v3784
    %4112 = vmatprep.subr.bf16.mxu0 %v3789
    %4113 = vmatpush1.bf16.msra.mxu0 %v3788
    %4114 = vmatprep.subr.bf16.mxu0 %v3793
    %4115 = vmatpush1.bf16.msra.mxu0 %v3792
    %4116 = vmatprep.subr.bf16.mxu0 %v3797
    %4117 = vmatpush1.bf16.msra.mxu0 %v3796
    %4118 = vmatprep.subr.bf16.mxu0 %v3801
    %4119 = vmatpush1.bf16.msra.mxu0 %v3800
    %4120 = vmatprep.subr.bf16.mxu0 %v3805
    %4121 = vmatpush1.bf16.msra.mxu0 %v3804
    %4122 = vmatprep.subr.bf16.mxu0 %v3809
    %4123 = vmatpush1.bf16.msra.mxu0 %v3808
    %4124 = vmatprep.subr.bf16.mxu0 %v3813
    %4125 = vmatpush1.bf16.msra.mxu0 %v3812
    %4126 = vmatprep.subr.bf16.mxu0 %v3817
    %4127 = vmatpush1.bf16.msra.mxu0 %v3816
    %4128 = vmatprep.mubr.bf16.mxu0 %v3217
    %4129 = vmatmul.mubr.bf16.gmra.mrb[0].mxu0 %v3216
    %v4130 = vpop.f32.mrb[0].mxu0
    %v4131 = vadd.f32 %v3361, %v4130
    %v4132 = vpop.f32.mrb[0].mxu0
    %v4133 = vadd.f32 %v3365, %v4132
    %v4134 = vpop.f32.mrb[0].mxu0
    %v4135 = vadd.f32 %v3361, %v4134
    %v4136 = vpop.f32.mrb[0].mxu0
    %v4137 = vadd.f32 %v3365, %v4136
    %4138 = vdwg.mxu0
    %4139 = vmatprep.subr.bf16.mxu0 %v3821
    %4140 = vmatpush1.bf16.msra.mxu0 %v3820
    %4141 = vmatprep.subr.bf16.mxu0 %v3825
    %4142 = vmatpush1.bf16.msra.mxu0 %v3824
    %4143 = vmatprep.subr.bf16.mxu0 %v3829
    %4144 = vmatpush1.bf16.msra.mxu0 %v3828
    %4145 = vmatprep.subr.bf16.mxu0 %v3833
    %4146 = vmatpush1.bf16.msra.mxu0 %v3832
    %4147 = vmatprep.subr.bf16.mxu0 %v3837
    %4148 = vmatpush1.bf16.msra.mxu0 %v3836
    %4149 = vmatprep.subr.bf16.mxu0 %v3841
    %4150 = vmatpush1.bf16.msra.mxu0 %v3840
    %4151 = vmatprep.subr.bf16.mxu0 %v3845
    %4152 = vmatpush1.bf16.msra.mxu0 %v3844
    %4153 = vmatprep.subr.bf16.mxu0 %v3849
    %4154 = vmatpush1.bf16.msra.mxu0 %v3848
    %4155 = vmatprep.subr.bf16.mxu0 %v3853
    %4156 = vmatpush1.bf16.msra.mxu0 %v3852
    %4157 = vmatprep.subr.bf16.mxu0 %v3857
    %4158 = vmatpush1.bf16.msra.mxu0 %v3856
    %4159 = vmatprep.subr.bf16.mxu0 %v3861
    %4160 = vmatpush1.bf16.msra.mxu0 %v3860
    %4161 = vmatprep.subr.bf16.mxu0 %v3865
    %4162 = vmatpush1.bf16.msra.mxu0 %v3864
    %4163 = vmatprep.subr.bf16.mxu0 %v3869
    %4164 = vmatpush1.bf16.msra.mxu0 %v3868
    %4165 = vmatprep.subr.bf16.mxu0 %v3873
    %4166 = vmatpush1.bf16.msra.mxu0 %v3872
    %4167 = vmatprep.subr.bf16.mxu0 %v3877
    %4168 = vmatpush1.bf16.msra.mxu0 %v3876
    %4169 = vmatprep.subr.bf16.mxu0 %v3881
    %4170 = vmatpush1.bf16.msra.mxu0 %v3880
    %4171 = vmatprep.mubr.bf16.mxu0 %v3219
    %4172 = vmatmul.mubr.bf16.gmra.mrb[0].mxu0 %v3218
    %v4173 = vpop.f32.mrb[0].mxu0
    %v4174 = vadd.f32 %v4131, %v4173
    %v4175 = vpop.f32.mrb[0].mxu0
    %v4176 = vadd.f32 %v4133, %v4175
    %v4177 = vpop.f32.mrb[0].mxu0
    %v4178 = vadd.f32 %v4135, %v4177
    %v4179 = vpop.f32.mrb[0].mxu0
    %v4180 = vadd.f32 %v4137, %v4179
    %4181 = vdwg.mxu0
    %v4182 = vunpack.c.l.bf16 %v2242
    %v4183 = vunpack.c.l.bf16 %v2243
    %v4184 = vunpack.c.l.bf16 %v2244
    %v4185 = vunpack.c.l.bf16 %v2245
    %v4186 = vunpack.c.h.bf16 %v2242
    %v4187 = vunpack.c.h.bf16 %v2243
    %v4188 = vunpack.c.h.bf16 %v2244
    %v4189 = vunpack.c.h.bf16 %v2245
    %v4190 = vadd.f32 %v4088, %v4182
    %v4191 = vadd.f32 %v4090, %v4183
    %v4192 = vadd.f32 %v4174, %v4184
    %v4193 = vadd.f32 %v4176, %v4185
    %v4194 = vadd.f32 %v4092, %v4186
    %v4195 = vadd.f32 %v4094, %v4187
    %v4196 = vadd.f32 %v4178, %v4188
    %v4197 = vadd.f32 %v4180, %v4189
    %v4198 = vmax.f32 %v4190, 0.0
    %v4199 = vmax.f32 %v4191, 0.0
    %v4200 = vmax.f32 %v4192, 0.0
    %v4201 = vmax.f32 %v4193, 0.0
    %v4202 = vmax.f32 %v4194, 0.0
    %v4203 = vmax.f32 %v4195, 0.0
    %v4204 = vmax.f32 %v4196, 0.0
    %v4205 = vmax.f32 %v4197, 0.0
    %v4206 = vpack.c.bf16 %v4202, %v4198
    %v4207 = vpack.c.bf16 %v4203, %v4199
    %v4208 = vpack.c.bf16 %v4204, %v4200
    %v4209 = vpack.c.bf16 %v4205, %v4201
    %v4210 = vld [vmem:[#allocation10] sm:$0xf]
    %v4211 = vld [vmem:[#allocation10 + $0x4] sm:$0xf]
    %v4212 = vld [vmem:[#allocation10 + $0x8] sm:$0xf]
    %v4213 = vld [vmem:[#allocation10 + $0xc] sm:$0xf]
    %v4214 = vld [vmem:[#allocation10 + $0x10] sm:$0xf]
    %v4215 = vld [vmem:[#allocation10 + $0x14] sm:$0xf]
    %v4216 = vld [vmem:[#allocation10 + $0x18] sm:$0xf]
    %v4217 = vld [vmem:[#allocation10 + $0x1c] sm:$0xf]
    %v4218 = vld [vmem:[#allocation10 + $0x20] sm:$0xf]
    %v4219 = vld [vmem:[#allocation10 + $0x24] sm:$0xf]
    %v4220 = vld [vmem:[#allocation10 + $0x28] sm:$0xf]
    %v4221 = vld [vmem:[#allocation10 + $0x2c] sm:$0xf]
    %v4222 = vld [vmem:[#allocation10 + $0x30] sm:$0xf]
    %v4223 = vld [vmem:[#allocation10 + $0x34] sm:$0xf]
    %v4224 = vld [vmem:[#allocation10 + $0x38] sm:$0xf]
    %v4225 = vld [vmem:[#allocation10 + $0x3c] sm:$0xf]
    %v4226 = vld [vmem:[#allocation10 + $0x40] sm:$0xf]
    %v4227 = vld [vmem:[#allocation10 + $0x44] sm:$0xf]
    %v4228 = vld [vmem:[#allocation10 + $0x48] sm:$0xf]
    %v4229 = vld [vmem:[#allocation10 + $0x4c] sm:$0xf]
    %v4230 = vld [vmem:[#allocation10 + $0x50] sm:$0xf]
    %v4231 = vld [vmem:[#allocation10 + $0x54] sm:$0xf]
    %v4232 = vld [vmem:[#allocation10 + $0x58] sm:$0xf]
    %v4233 = vld [vmem:[#allocation10 + $0x5c] sm:$0xf]
    %v4234 = vld [vmem:[#allocation10 + $0x60] sm:$0xf]
    %v4235 = vld [vmem:[#allocation10 + $0x64] sm:$0xf]
    %v4236 = vld [vmem:[#allocation10 + $0x68] sm:$0xf]
    %v4237 = vld [vmem:[#allocation10 + $0x6c] sm:$0xf]
    %v4238 = vld [vmem:[#allocation10 + $0x70] sm:$0xf]
    %v4239 = vld [vmem:[#allocation10 + $0x74] sm:$0xf]
    %v4240 = vld [vmem:[#allocation10 + $0x78] sm:$0xf]
    %v4241 = vld [vmem:[#allocation10 + $0x7c] sm:$0xf]
    %v4242 = vld [vmem:[#allocation10 + $0x80] sm:$0xf]
    %v4243 = vld [vmem:[#allocation10 + $0x84] sm:$0xf]
    %v4244 = vld [vmem:[#allocation10 + $0x88] sm:$0xf]
    %v4245 = vld [vmem:[#allocation10 + $0x8c] sm:$0xf]
    %v4246 = vld [vmem:[#allocation10 + $0x90] sm:$0xf]
    %v4247 = vld [vmem:[#allocation10 + $0x94] sm:$0xf]
    %v4248 = vld [vmem:[#allocation10 + $0x98] sm:$0xf]
    %v4249 = vld [vmem:[#allocation10 + $0x9c] sm:$0xf]
    %v4250 = vld [vmem:[#allocation10 + $0xa0] sm:$0xf]
    %v4251 = vld [vmem:[#allocation10 + $0xa4] sm:$0xf]
    %v4252 = vld [vmem:[#allocation10 + $0xa8] sm:$0xf]
    %v4253 = vld [vmem:[#allocation10 + $0xac] sm:$0xf]
    %v4254 = vld [vmem:[#allocation10 + $0xb0] sm:$0xf]
    %v4255 = vld [vmem:[#allocation10 + $0xb4] sm:$0xf]
    %v4256 = vld [vmem:[#allocation10 + $0xb8] sm:$0xf]
    %v4257 = vld [vmem:[#allocation10 + $0xbc] sm:$0xf]
    %v4258 = vld [vmem:[#allocation10 + $0xc0] sm:$0xf]
    %v4259 = vld [vmem:[#allocation10 + $0xc4] sm:$0xf]
    %v4260 = vld [vmem:[#allocation10 + $0xc8] sm:$0xf]
    %v4261 = vld [vmem:[#allocation10 + $0xcc] sm:$0xf]
    %v4262 = vld [vmem:[#allocation10 + $0xd0] sm:$0xf]
    %v4263 = vld [vmem:[#allocation10 + $0xd4] sm:$0xf]
    %v4264 = vld [vmem:[#allocation10 + $0xd8] sm:$0xf]
    %v4265 = vld [vmem:[#allocation10 + $0xdc] sm:$0xf]
    %v4266 = vld [vmem:[#allocation10 + $0xe0] sm:$0xf]
    %v4267 = vld [vmem:[#allocation10 + $0xe4] sm:$0xf]
    %v4268 = vld [vmem:[#allocation10 + $0xe8] sm:$0xf]
    %v4269 = vld [vmem:[#allocation10 + $0xec] sm:$0xf]
    %v4270 = vld [vmem:[#allocation10 + $0xf0] sm:$0xf]
    %v4271 = vld [vmem:[#allocation10 + $0xf4] sm:$0xf]
    %v4272 = vld [vmem:[#allocation10 + $0xf8] sm:$0xf]
    %v4273 = vld [vmem:[#allocation10 + $0xfc] sm:$0xf]
    %v4274 = vld [vmem:[%s12] sm:$0x1]
    %v4276 = vlaneseq
    %v4277 = vshrl.u32 %v4276, 7
    %v4278 = vsub.s32 0, %v4277
    %v4279 = vrot.slane %v4274, %v4278
    %v4345 = vunpack.c.l.b16 %v4210
    %v4346 = vunpack.c.l.b16 %v4211
    %v4347 = vunpack.c.l.b16 %v4212
    %v4348 = vunpack.c.l.b16 %v4213
    %v4349 = vunpack.c.l.b16 %v4214
    %v4350 = vunpack.c.l.b16 %v4215
    %v4351 = vunpack.c.l.b16 %v4216
    %v4352 = vunpack.c.l.b16 %v4217
    %v4353 = vunpack.c.l.b16 %v4218
    %v4354 = vunpack.c.l.b16 %v4219
    %v4355 = vunpack.c.l.b16 %v4220
    %v4356 = vunpack.c.l.b16 %v4221
    %v4357 = vunpack.c.l.b16 %v4222
    %v4358 = vunpack.c.l.b16 %v4223
    %v4359 = vunpack.c.l.b16 %v4224
    %v4360 = vunpack.c.l.b16 %v4225
    %v4361 = vunpack.c.l.b16 %v4226
    %v4362 = vunpack.c.l.b16 %v4227
    %v4363 = vunpack.c.l.b16 %v4228
    %v4364 = vunpack.c.l.b16 %v4229
    %v4365 = vunpack.c.l.b16 %v4230
    %v4366 = vunpack.c.l.b16 %v4231
    %v4367 = vunpack.c.l.b16 %v4232
    %v4368 = vunpack.c.l.b16 %v4233
    %v4369 = vunpack.c.l.b16 %v4234
    %v4370 = vunpack.c.l.b16 %v4235
    %v4371 = vunpack.c.l.b16 %v4236
    %v4372 = vunpack.c.l.b16 %v4237
    %v4373 = vunpack.c.l.b16 %v4238
    %v4374 = vunpack.c.l.b16 %v4239
    %v4375 = vunpack.c.l.b16 %v4240
    %v4376 = vunpack.c.l.b16 %v4241
    %v4377 = vunpack.c.l.b16 %v4242
    %v4378 = vunpack.c.l.b16 %v4243
    %v4379 = vunpack.c.l.b16 %v4244
    %v4380 = vunpack.c.l.b16 %v4245
    %v4381 = vunpack.c.l.b16 %v4246
    %v4382 = vunpack.c.l.b16 %v4247
    %v4383 = vunpack.c.l.b16 %v4248
    %v4384 = vunpack.c.l.b16 %v4249
    %v4385 = vunpack.c.l.b16 %v4250
    %v4386 = vunpack.c.l.b16 %v4251
    %v4387 = vunpack.c.l.b16 %v4252
    %v4388 = vunpack.c.l.b16 %v4253
    %v4389 = vunpack.c.l.b16 %v4254
    %v4390 = vunpack.c.l.b16 %v4255
    %v4391 = vunpack.c.l.b16 %v4256
    %v4392 = vunpack.c.l.b16 %v4257
    %v4393 = vunpack.c.l.b16 %v4258
    %v4394 = vunpack.c.l.b16 %v4259
    %v4395 = vunpack.c.l.b16 %v4260
    %v4396 = vunpack.c.l.b16 %v4261
    %v4397 = vunpack.c.l.b16 %v4262
    %v4398 = vunpack.c.l.b16 %v4263
    %v4399 = vunpack.c.l.b16 %v4264
    %v4400 = vunpack.c.l.b16 %v4265
    %v4401 = vunpack.c.l.b16 %v4266
    %v4402 = vunpack.c.l.b16 %v4267
    %v4403 = vunpack.c.l.b16 %v4268
    %v4404 = vunpack.c.l.b16 %v4269
    %v4405 = vunpack.c.l.b16 %v4270
    %v4406 = vunpack.c.l.b16 %v4271
    %v4407 = vunpack.c.l.b16 %v4272
    %v4408 = vunpack.c.l.b16 %v4273
    %v4409 = vpack.c.b16 %v4346, %v4345
    %v4410 = vpack.c.b16 %v4348, %v4347
    %v4411 = vpack.c.b16 %v4350, %v4349
    %v4412 = vpack.c.b16 %v4352, %v4351
    %v4413 = vpack.c.b16 %v4354, %v4353
    %v4414 = vpack.c.b16 %v4356, %v4355
    %v4415 = vpack.c.b16 %v4358, %v4357
    %v4416 = vpack.c.b16 %v4360, %v4359
    %v4417 = vpack.c.b16 %v4362, %v4361
    %v4418 = vpack.c.b16 %v4364, %v4363
    %v4419 = vpack.c.b16 %v4366, %v4365
    %v4420 = vpack.c.b16 %v4368, %v4367
    %v4421 = vpack.c.b16 %v4370, %v4369
    %v4422 = vpack.c.b16 %v4372, %v4371
    %v4423 = vpack.c.b16 %v4374, %v4373
    %v4424 = vpack.c.b16 %v4376, %v4375
    %v4425 = vpack.c.b16 %v4378, %v4377
    %v4426 = vpack.c.b16 %v4380, %v4379
    %v4427 = vpack.c.b16 %v4382, %v4381
    %v4428 = vpack.c.b16 %v4384, %v4383
    %v4429 = vpack.c.b16 %v4386, %v4385
    %v4430 = vpack.c.b16 %v4388, %v4387
    %v4431 = vpack.c.b16 %v4390, %v4389
    %v4432 = vpack.c.b16 %v4392, %v4391
    %v4433 = vpack.c.b16 %v4394, %v4393
    %v4434 = vpack.c.b16 %v4396, %v4395
    %v4435 = vpack.c.b16 %v4398, %v4397
    %v4436 = vpack.c.b16 %v4400, %v4399
    %v4437 = vpack.c.b16 %v4402, %v4401
    %v4438 = vpack.c.b16 %v4404, %v4403
    %v4439 = vpack.c.b16 %v4406, %v4405
    %v4440 = vpack.c.b16 %v4408, %v4407
    %4473 = vmatprep.subr.bf16.mxu0 0
    %4474 = vmatpush1.bf16.msra.mxu0 %v4409
    %4475 = vmatprep.subr.bf16.mxu0 0
    %4476 = vmatpush1.bf16.msra.mxu0 %v4410
    %4477 = vmatprep.subr.bf16.mxu0 0
    %4478 = vmatpush1.bf16.msra.mxu0 %v4411
    %4479 = vmatprep.subr.bf16.mxu0 0
    %4480 = vmatpush1.bf16.msra.mxu0 %v4412
    %4481 = vmatprep.subr.bf16.mxu0 0
    %4482 = vmatpush1.bf16.msra.mxu0 %v4413
    %4483 = vmatprep.subr.bf16.mxu0 0
    %4484 = vmatpush1.bf16.msra.mxu0 %v4414
    %4485 = vmatprep.subr.bf16.mxu0 0
    %4486 = vmatpush1.bf16.msra.mxu0 %v4415
    %4487 = vmatprep.subr.bf16.mxu0 0
    %4488 = vmatpush1.bf16.msra.mxu0 %v4416
    %4489 = vmatprep.subr.bf16.mxu0 0
    %4490 = vmatpush1.bf16.msra.mxu0 %v4417
    %4491 = vmatprep.subr.bf16.mxu0 0
    %4492 = vmatpush1.bf16.msra.mxu0 %v4418
    %4493 = vmatprep.subr.bf16.mxu0 0
    %4494 = vmatpush1.bf16.msra.mxu0 %v4419
    %4495 = vmatprep.subr.bf16.mxu0 0
    %4496 = vmatpush1.bf16.msra.mxu0 %v4420
    %4497 = vmatprep.subr.bf16.mxu0 0
    %4498 = vmatpush1.bf16.msra.mxu0 %v4421
    %4499 = vmatprep.subr.bf16.mxu0 0
    %4500 = vmatpush1.bf16.msra.mxu0 %v4422
    %4501 = vmatprep.subr.bf16.mxu0 0
    %4502 = vmatpush1.bf16.msra.mxu0 %v4423
    %4503 = vmatprep.subr.bf16.mxu0 0
    %4504 = vmatpush1.bf16.msra.mxu0 %v4424
    %4505 = vmatprep.mubr.bf16.mxu0 %v4207
    %4506 = vmatmul.mubr.bf16.gmra.mrb[0].mxu0 %v4206
    %v4507 = vpop.f32.mrb[0].mxu0
    %v4508 = vadd.f32 %v4279, %v4507
    %v4509 = vpop.f32.mrb[0].mxu0
    %v4510 = vpop.f32.mrb[0].mxu0
    %v4511 = vadd.f32 %v4279, %v4510
    %v4512 = vpop.f32.mrb[0].mxu0
    %4513 = vdwg.mxu0
    %4514 = vmatprep.subr.bf16.mxu0 0
    %4515 = vmatpush1.bf16.msra.mxu0 %v4425
    %4516 = vmatprep.subr.bf16.mxu0 0
    %4517 = vmatpush1.bf16.msra.mxu0 %v4426
    %4518 = vmatprep.subr.bf16.mxu0 0
    %4519 = vmatpush1.bf16.msra.mxu0 %v4427
    %4520 = vmatprep.subr.bf16.mxu0 0
    %4521 = vmatpush1.bf16.msra.mxu0 %v4428
    %4522 = vmatprep.subr.bf16.mxu0 0
    %4523 = vmatpush1.bf16.msra.mxu0 %v4429
    %4524 = vmatprep.subr.bf16.mxu0 0
    %4525 = vmatpush1.bf16.msra.mxu0 %v4430
    %4526 = vmatprep.subr.bf16.mxu0 0
    %4527 = vmatpush1.bf16.msra.mxu0 %v4431
    %4528 = vmatprep.subr.bf16.mxu0 0
    %4529 = vmatpush1.bf16.msra.mxu0 %v4432
    %4530 = vmatprep.subr.bf16.mxu0 0
    %4531 = vmatpush1.bf16.msra.mxu0 %v4433
    %4532 = vmatprep.subr.bf16.mxu0 0
    %4533 = vmatpush1.bf16.msra.mxu0 %v4434
    %4534 = vmatprep.subr.bf16.mxu0 0
    %4535 = vmatpush1.bf16.msra.mxu0 %v4435
    %4536 = vmatprep.subr.bf16.mxu0 0
    %4537 = vmatpush1.bf16.msra.mxu0 %v4436
    %4538 = vmatprep.subr.bf16.mxu0 0
    %4539 = vmatpush1.bf16.msra.mxu0 %v4437
    %4540 = vmatprep.subr.bf16.mxu0 0
    %4541 = vmatpush1.bf16.msra.mxu0 %v4438
    %4542 = vmatprep.subr.bf16.mxu0 0
    %4543 = vmatpush1.bf16.msra.mxu0 %v4439
    %4544 = vmatprep.subr.bf16.mxu0 0
    %4545 = vmatpush1.bf16.msra.mxu0 %v4440
    %4546 = vmatprep.mubr.bf16.mxu0 %v4209
    %4547 = vmatmul.mubr.bf16.gmra.mrb[0].mxu0 %v4208
    %v4548 = vpop.f32.mrb[0].mxu0
    %v4549 = vadd.f32 %v4508, %v4548
    %v4550 = vpop.f32.mrb[0].mxu0
    %v4551 = vpop.f32.mrb[0].mxu0
    %v4552 = vadd.f32 %v4511, %v4551
    %v4553 = vpop.f32.mrb[0].mxu0
    %4554 = vdwg.mxu0
    %v4555 = vmax.f32 %v4549, 0.0
    %v4556 = vmax.f32 %v4552, 0.0
    %4557 = vst [vmem:[%s13] sm:$0xff] %v4555
    %4558 = vst [vmem:[%s13 + $0x8] sm:$0xff] %v4556
    // Predicated region
    $region78: #{encoder_forward.1} parent=1 // pred_check
      _
    $region79: #{encoder_forward.1} parent=1 // pred_check_branch
      %4560 = sbr.rel (0) target = $region81
    $region80: #{encoder_forward.1} parent=1 // pred_region
      _
    $region81: #{encoder_forward.1} parent=1 // pred_fallthru
      _
    // Predicated region
    $region82: #{encoder_forward.1} parent=1 // pred_check
      _
    $region83: #{encoder_forward.1} parent=1 // pred_check_branch
      %4562 = sbr.rel (0) target = $region85
    $region84: #{encoder_forward.1} parent=1 // pred_region
      _
    $region85: #{encoder_forward.1} parent=1 // pred_fallthru
      _
    %4563 = vsyncpa [#allocation3], 1
    %4564 = vsyncpa [#allocation5], 1
    %4565 = vsyncpa [#allocation8], 1
    %4566 = vsyncpa [#allocation11], 1

</llo_original>
